<compile_context>
chip_gen: v7x
topology: tpu7x:2x2x1
jax: 0.10.0
libtpu: 0.0.40
codegen_flags: <defaults>
</compile_context>

<pallas_src>
import jax
import jax.numpy as jnp
import numpy as np
from jax.experimental import pallas as pl
from jax.experimental.pallas import tpu as pltpu

LEAKY_SLOPE = 0.2
BN_EPS = 1e-5


def _round_up(v, m):
    return ((v + m - 1) // m) * m


def _sub_conv_kernel(x_ref, w1_ref, w2_ref, s1_ref, b1_ref, s2_ref, b2_ref,
                     o_ref, z2e_ref, z2o_ref):
    """Fused conv3x3(s=1)+BN+LReLU -> conv3x3(s=2)+BN+LReLU for one image.

    x_ref : (H+2, W+2, CPm)   bf16  halo + lane padded input (padding done in wrapper)
    w1_ref: (9, CPm, CPm)     bf16  tap-major stage-1 weight
    w2_ref: (9, CPm, CPo)     bf16  tap-major stage-2 weight
    s*/b* : (1, CP*)          f32   folded eval-mode BatchNorm scale / bias
    o_ref : (Ho, W, CPo)      f32   even-row, full-width, lane-dense output
    z2e_ref/z2o_ref: (Ho+1, W+2, CPm) bf16  stage-1 activation split by padded-row parity
    """
    Hp, Wp, CPm = x_ref.shape
    H, W = Hp - 2, Wp - 2
    Ho = H // 2
    CPo = w2_ref.shape[-1]
    taps = tuple((dy, dx) for dy in range(3) for dx in range(3))

    # ---- zero ONLY the 1-pixel halo ring of the stage-1 activation buffers --
    # (interior rows/cols are fully overwritten every grid step; per-step halo
    #  zeroing is megacore-safe, unlike a program_id==0-gated init).
    zrow = jnp.zeros((1, Wp, CPm), z2e_ref.dtype)
    zcol = jnp.zeros((Ho + 1, 1, CPm), z2e_ref.dtype)
    z2e_ref[0:1, :, :] = zrow            # top halo (padded row 0, even)
    z2o_ref[Ho:Ho + 1, :, :] = zrow      # bottom halo (padded row H+1, odd)
    z2e_ref[:, 0:1, :] = zcol            # left / right column halos
    z2e_ref[:, W + 1:W + 2, :] = zcol
    z2o_ref[:, 0:1, :] = zcol
    z2o_ref[:, W + 1:W + 2, :] = zcol

    s1 = s1_ref[...]
    b1 = b1_ref[...]

    # ---------------- stage 1: conv3x3 s=1 + BN + LeakyReLU -----------------
    # Row-chunked so the f32 accumulator stays <=16 vregs (bounded live range
    # via fori_loop, not a static Python loop).
    R = 8 if H % 8 == 0 else (4 if H % 4 == 0 else 2)
    half = R // 2
    num_chunks = H // R

    def s1_chunk(i, carry):
        r0 = i * R                                   # chunk's first output row (even)
        acc = jnp.zeros((R * W, CPm), jnp.float32)
        for t, (dy, dx) in enumerate(taps):          # 9 tap-wise MXU matmuls
            lhs = x_ref[pl.ds(r0 + dy, R), dx:dx + W, :].reshape(R * W, CPm)
            acc = acc + jnp.dot(lhs, w1_ref[t],
                                preferred_element_type=jnp.float32)
        y = acc * s1 + b1                            # folded BN (eval mode)
        y = jnp.maximum(y, LEAKY_SLOPE * y)          # LeakyReLU(0.2)
        y = y.reshape(half, 2, W, CPm).astype(z2e_ref.dtype)
        # chunk row 2m   -> padded row r0+1+2m (odd)  -> z2o[i*half + m]
        # chunk row 2m+1 -> padded row r0+2+2m (even) -> z2e[i*half + 1 + m]
        z2o_ref[pl.ds(i * half, half), 1:W + 1, :] = y[:, 0]
        z2e_ref[pl.ds(i * half + 1, half), 1:W + 1, :] = y[:, 1]
        return carry

    jax.lax.fori_loop(0, num_chunks, s1_chunk, 0)

    # ---------------- stage 2: conv3x3 s=2 + BN + LeakyReLU -----------------
    # Computed ONLY at even output rows (M = Ho*W): tap dy selects the parity
    # buffer, so every LHS is a plain contiguous leading-dim slice.
    acc2 = jnp.zeros((Ho * W, CPo), jnp.float32)
    for t, (dy, dx) in enumerate(taps):
        if dy == 0:
            lhs = z2e_ref[0:Ho, dx:dx + W, :]        # padded rows 2*ho
        elif dy == 1:
            lhs = z2o_ref[0:Ho, dx:dx + W, :]        # padded rows 2*ho + 1
        else:
            lhs = z2e_ref[1:Ho + 1, dx:dx + W, :]    # padded rows 2*ho + 2
        acc2 = acc2 + jnp.dot(lhs.reshape(Ho * W, CPm), w2_ref[t],
                              preferred_element_type=jnp.float32)
    y2 = acc2 * s2_ref[...] + b2_ref[...]
    y2 = jnp.maximum(y2, LEAKY_SLOPE * y2)
    # Single lane-dense unmasked store (last dim = CPo = 128).  Even-column
    # subsample + channel-pad strip happen in the wrapper (fused with the
    # NHWC->NCHW transpose), keeping all in-kernel reshapes layout-trivial.
    o_ref[...] = y2.reshape(Ho, W, CPo)


def _pack_weight(w_oihw, cp_in, cp_out):
    """PyTorch OIHW 3x3 weight -> (9, cp_in, cp_out) bf16, tap-major, lane-padded."""
    co, ci, kh, kw = w_oihw.shape
    w = jnp.transpose(w_oihw, (2, 3, 1, 0))                       # (3,3,Ci,Co)
    w = jnp.pad(w, ((0, 0), (0, 0), (0, cp_in - ci), (0, cp_out - co)))
    return w.reshape(kh * kw, cp_in, cp_out).astype(jnp.bfloat16)


def _fold_bn(gamma, beta, mean, var, cp):
    """Fold eval-mode BatchNorm into lane-padded per-channel scale / bias."""
    scale = (gamma / jnp.sqrt(var + BN_EPS)).astype(jnp.float32)
    bias = (beta - mean * scale).astype(jnp.float32)
    c = scale.shape[0]
    scale = jnp.pad(scale, (0, cp - c)).reshape(1, cp)
    bias = jnp.pad(bias, (0, cp - c)).reshape(1, cp)
    return scale, bias


def sub_conv_forward(x_nchw, params):
    """Forward pass of sub_conv. Input/output in PyTorch NCHW layout."""
    # TODO(synk): if the surrounding model kept activations NHWC, these two
    # boundary transposes (and their HBM round trips) would disappear.
    x = jnp.transpose(x_nchw, (0, 2, 3, 1))            # NCHW -> NHWC
    N, H, W, Cin = x.shape
    Cmid = params["w1"].shape[0]
    Cout = params["w2"].shape[0]
    assert H % 2 == 0 and W % 2 == 0, "even spatial dims assumed (see TODO)"
    Ho, Wo = H // 2, W // 2
    cpm = _round_up(max(Cin, Cmid), 128)               # lane-dense channel pad
    cpo = _round_up(Cout, 128)

    # Halo pad (1 px) AND channel lane-pad in HBM; bf16 cast.  The pipelined
    # BlockSpec DMA then lands a ready-to-use lane-dense tile in VMEM.
    xp = jnp.pad(x, ((0, 0), (1, 1), (1, 1), (0, cpm - Cin))).astype(jnp.bfloat16)

    w1p = _pack_weight(params["w1"], cpm, cpm)
    w2p = _pack_weight(params["w2"], cpm, cpo)
    s1, b1 = _fold_bn(params["g1"], params["b1"], params["m1"], params["v1"], cpm)
    s2, b2 = _fold_bn(params["g2"], params["b2"], params["m2"], params["v2"], cpo)

    out = pl.pallas_call(
        _sub_conv_kernel,
        out_shape=jax.ShapeDtypeStruct((N, Ho, W, cpo), jnp.float32),
        grid=(N,),
        in_specs=[
            pl.BlockSpec((None, H + 2, W + 2, cpm), lambda n: (n, 0, 0, 0)),
            pl.BlockSpec((9, cpm, cpm), lambda n: (0, 0, 0)),
            pl.BlockSpec((9, cpm, cpo), lambda n: (0, 0, 0)),
            pl.BlockSpec((1, cpm), lambda n: (0, 0)),
            pl.BlockSpec((1, cpm), lambda n: (0, 0)),
            pl.BlockSpec((1, cpo), lambda n: (0, 0)),
            pl.BlockSpec((1, cpo), lambda n: (0, 0)),
        ],
        out_specs=pl.BlockSpec((None, Ho, W, cpo), lambda n: (n, 0, 0, 0)),
        scratch_shapes=[
            pltpu.VMEM((Ho + 1, W + 2, cpm), jnp.bfloat16),  # z2e: even padded rows of stage-1 act
            pltpu.VMEM((Ho + 1, W + 2, cpm), jnp.bfloat16),  # z2o: odd  padded rows of stage-1 act
        ],
        compiler_params=pltpu.CompilerParams(
            dimension_semantics=("parallel",),
            # Actual per-step footprint at these shapes is ~1.6 MiB
            # (double-buffered input/weights/output + 2 x 41 KiB scratch).
            vmem_limit_bytes=16 * 1024 * 1024,
        ),
    )(xp, w1p, w2p, s1, b1, s2, b2)

    # Even output columns + strip channel lane padding; fuses with the
    # NHWC -> NCHW transpose in XLA (the kernel store stays lane-dense).
    out = out[:, :, ::2, :Cout]
    return jnp.transpose(out, (0, 3, 1, 2))            # NHWC -> NCHW


def _ref_forward(x_nchw, params):
    """Pure-JAX reference (lax.conv, f32 HIGHEST) for correctness checking."""
    def block(x, w_oihw, g, b, m, v, stride):
        w = jnp.transpose(w_oihw, (2, 3, 1, 0))  # OIHW -> HWIO
        y = jax.lax.conv_general_dilated(
            x, w, (stride, stride), ((1, 1), (1, 1)),
            dimension_numbers=("NHWC", "HWIO", "NHWC"),
            precision=jax.lax.Precision.HIGHEST)
        y = g * (y - m) / jnp.sqrt(v + BN_EPS) + b
        return jnp.where(y >= 0.0, y, LEAKY_SLOPE * y)

    x = jnp.transpose(x_nchw, (0, 2, 3, 1))
    y = block(x, params["w1"], params["g1"], params["b1"],
              params["m1"], params["v1"], 1)
    y = block(y, params["w2"], params["g2"], params["b2"],
              params["m2"], params["v2"], 2)
    return jnp.transpose(y, (0, 3, 1, 2))


if __name__ == "__main__":
    in_ch, out_ch = 4, 8
    N, H, W = 2, 16, 16

    key = jax.random.PRNGKey(0)
    ks = jax.random.split(key, 12)

    params = {
        # Conv weights, PyTorch OIHW layout, bias=False
        "w1": 0.1 * jax.random.normal(ks[0], (in_ch, in_ch, 3, 3), jnp.float32),
        "w2": 0.1 * jax.random.normal(ks[1], (out_ch, in_ch, 3, 3), jnp.float32),
        # BatchNorm2d(in_ch) params / running stats (eval mode)
        "g1": 1.0 + 0.1 * jax.random.normal(ks[2], (in_ch,), jnp.float32),
        "b1": 0.1 * jax.random.normal(ks[3], (in_ch,), jnp.float32),
        "m1": 0.1 * jax.random.normal(ks[4], (in_ch,), jnp.float32),
        "v1": 0.5 + jnp.abs(jax.random.normal(ks[5], (in_ch,), jnp.float32)),
        # BatchNorm2d(out_ch)
        "g2": 1.0 + 0.1 * jax.random.normal(ks[6], (out_ch,), jnp.float32),
        "b2": 0.1 * jax.random.normal(ks[7], (out_ch,), jnp.float32),
        "m2": 0.1 * jax.random.normal(ks[8], (out_ch,), jnp.float32),
        "v2": 0.5 + jnp.abs(jax.random.normal(ks[9], (out_ch,), jnp.float32)),
    }

    x = jax.random.normal(ks[10], (N, in_ch, H, W), jnp.float32)  # NCHW input

    out = jax.block_until_ready(jax.jit(sub_conv_forward)(x, params))
    ref = jax.block_until_ready(_ref_forward(x, params))

    assert out.shape == (N, out_ch, H // 2, W // 2), out.shape
    # Tolerance sized for the bf16 data path (f32 accumulation) vs. the
    # f32 HIGHEST-precision reference.
    if np.allclose(np.asarray(out), np.asarray(ref), rtol=1e-2, atol=1e-2):
        print("KERNEL_OK")
    else:
        print("MISMATCH max abs diff:",
              float(np.max(np.abs(np.asarray(out) - np.asarray(ref)))))
</pallas_src>

<mosaic_0001>
module attributes {stable_mosaic.version = 11 : i64} {
  func.func @_sub_conv_kernel(%arg0: i32, %arg1: memref<1x18x18x128xbf16, #tpu.memory_space<vmem>>, %arg2: memref<9x128x128xbf16, #tpu.memory_space<vmem>>, %arg3: memref<9x128x128xbf16, #tpu.memory_space<vmem>>, %arg4: memref<1x128xf32, #tpu.memory_space<vmem>>, %arg5: memref<1x128xf32, #tpu.memory_space<vmem>>, %arg6: memref<1x128xf32, #tpu.memory_space<vmem>>, %arg7: memref<1x128xf32, #tpu.memory_space<vmem>>, %arg8: memref<1x8x16x128xf32, #tpu.memory_space<vmem>>, %arg9: memref<9x18x128xbf16, #tpu.memory_space<vmem>>, %arg10: memref<9x18x128xbf16, #tpu.memory_space<vmem>>) attributes {dimension_semantics = [#tpu.dimension_semantics<parallel>], iteration_bounds = array<i64: 2>, scalar_prefetch = 0 : i64, scratch_operands = 2 : i64, tpu.core_type = #tpu.core_type<tc>, window_params = [{transform_indices = @transform_0, window_bounds = array<i64: 1, 18, 18, 128>}, {pipeline_mode = #tpu.pipeline_mode<synchronous>, transform_indices = @transform_1, window_bounds = array<i64: 9, 128, 128>}, {pipeline_mode = #tpu.pipeline_mode<synchronous>, transform_indices = @transform_2, window_bounds = array<i64: 9, 128, 128>}, {pipeline_mode = #tpu.pipeline_mode<synchronous>, transform_indices = @transform_3, window_bounds = array<i64: 1, 128>}, {pipeline_mode = #tpu.pipeline_mode<synchronous>, transform_indices = @transform_4, window_bounds = array<i64: 1, 128>}, {pipeline_mode = #tpu.pipeline_mode<synchronous>, transform_indices = @transform_5, window_bounds = array<i64: 1, 128>}, {pipeline_mode = #tpu.pipeline_mode<synchronous>, transform_indices = @transform_6, window_bounds = array<i64: 1, 128>}, {transform_indices = @transform_7, window_bounds = array<i64: 1, 8, 16, 128>}]} {
    %cst = arith.constant 0.000000e+00 : bf16
    %0 = vector.broadcast %cst : bf16 to vector<1x18x128xbf16>
    %cst_0 = arith.constant 0.000000e+00 : bf16
    %1 = vector.broadcast %cst_0 : bf16 to vector<9x1x128xbf16>
    %c0 = arith.constant 0 : index
    %c0_1 = arith.constant 0 : index
    %c0_2 = arith.constant 0 : index
    %2 = vector.load %arg9[%c0, %c0_1, %c0_2] : memref<9x18x128xbf16, #tpu.memory_space<vmem>>, vector<1x18x128xbf16>
    tpu.vector_store %arg9[%c0, %c0_1, %c0_2], %0 {strides = array<i32>} : memref<9x18x128xbf16, #tpu.memory_space<vmem>>, vector<1x18x128xbf16>,
    %c8 = arith.constant 8 : index
    %c0_3 = arith.constant 0 : index
    %c0_4 = arith.constant 0 : index
    %3 = vector.load %arg10[%c8, %c0_3, %c0_4] : memref<9x18x128xbf16, #tpu.memory_space<vmem>>, vector<1x18x128xbf16>
    tpu.vector_store %arg10[%c8, %c0_3, %c0_4], %0 {strides = array<i32>} : memref<9x18x128xbf16, #tpu.memory_space<vmem>>, vector<1x18x128xbf16>,
    %c0_5 = arith.constant 0 : index
    %c0_6 = arith.constant 0 : index
    %c0_7 = arith.constant 0 : index
    %4 = vector.load %arg9[%c0_5, %c0_6, %c0_7] : memref<9x18x128xbf16, #tpu.memory_space<vmem>>, vector<9x1x128xbf16>
    tpu.vector_store %arg9[%c0_5, %c0_6, %c0_7], %1 {strides = array<i32>} : memref<9x18x128xbf16, #tpu.memory_space<vmem>>, vector<9x1x128xbf16>,
    %c0_8 = arith.constant 0 : index
    %c17 = arith.constant 17 : index
    %c0_9 = arith.constant 0 : index
    %5 = vector.load %arg9[%c0_8, %c17, %c0_9] : memref<9x18x128xbf16, #tpu.memory_space<vmem>>, vector<9x1x128xbf16>
    tpu.vector_store %arg9[%c0_8, %c17, %c0_9], %1 {strides = array<i32>} : memref<9x18x128xbf16, #tpu.memory_space<vmem>>, vector<9x1x128xbf16>,
    %c0_10 = arith.constant 0 : index
    %c0_11 = arith.constant 0 : index
    %c0_12 = arith.constant 0 : index
    %6 = vector.load %arg10[%c0_10, %c0_11, %c0_12] : memref<9x18x128xbf16, #tpu.memory_space<vmem>>, vector<9x1x128xbf16>
    tpu.vector_store %arg10[%c0_10, %c0_11, %c0_12], %1 {strides = array<i32>} : memref<9x18x128xbf16, #tpu.memory_space<vmem>>, vector<9x1x128xbf16>,
    %c0_13 = arith.constant 0 : index
    %c17_14 = arith.constant 17 : index
    %c0_15 = arith.constant 0 : index
    %7 = vector.load %arg10[%c0_13, %c17_14, %c0_15] : memref<9x18x128xbf16, #tpu.memory_space<vmem>>, vector<9x1x128xbf16>
    tpu.vector_store %arg10[%c0_13, %c17_14, %c0_15], %1 {strides = array<i32>} : memref<9x18x128xbf16, #tpu.memory_space<vmem>>, vector<9x1x128xbf16>,
    %c0_16 = arith.constant 0 : index
    %c0_17 = arith.constant 0 : index
    %8 = vector.load %arg4[%c0_16, %c0_17] : memref<1x128xf32, #tpu.memory_space<vmem>>, vector<1x128xf32>
    %c0_18 = arith.constant 0 : index
    %c0_19 = arith.constant 0 : index
    %9 = vector.load %arg5[%c0_18, %c0_19] : memref<1x128xf32, #tpu.memory_space<vmem>>, vector<1x128xf32>
    %c0_i32 = arith.constant 0 : i32
    %c2_i32 = arith.constant 2 : i32
    %10 = arith.addi %c0_i32, %c2_i32 : i32
    %c1_i32 = arith.constant 1 : i32
    scf.for %arg11 = %c0_i32 to %10 step %c1_i32  : i32 {
      %c8_i32 = arith.constant 8 : i32
      %79 = arith.muli %arg11, %c8_i32 : i32
      %cst_87 = arith.constant 0.000000e+00 : f32
      %80 = vector.broadcast %cst_87 : f32 to vector<128x128xf32>
      %c0_i32_88 = arith.constant 0 : i32
      %81 = arith.addi %79, %c0_i32_88 : i32
      %c0_89 = arith.constant 0 : index
      %82 = arith.index_cast %81 : i32 to index
      %c0_90 = arith.constant 0 : index
      %c0_91 = arith.constant 0 : index
      %83 = vector.load %arg1[%c0_89, %82, %c0_90, %c0_91] : memref<1x18x18x128xbf16, #tpu.memory_space<vmem>>, vector<1x8x16x128xbf16>
      %84 = vector.shape_cast %83 : vector<1x8x16x128xbf16> to vector<8x16x128xbf16>
      %85 = vector.shape_cast %84 : vector<8x16x128xbf16> to vector<128x128xbf16>
      %c0_92 = arith.constant 0 : index
      %c0_93 = arith.constant 0 : index
      %c0_94 = arith.constant 0 : index
      %86 = vector.load %arg2[%c0_92, %c0_93, %c0_94] : memref<9x128x128xbf16, #tpu.memory_space<vmem>>, vector<1x128x128xbf16>
      %87 = vector.shape_cast %86 : vector<1x128x128xbf16> to vector<128x128xbf16>
      %cst_95 = arith.constant dense<0.000000e+00> : vector<128x128xf32>
      %88 = tpu.matmul %85, %87, %cst_95 {dimension_numbers = #tpu.dot_dimension_numbers<[1], [0], [0], [1], [0, 0, 1, 1], [], []>} : vector<128x128xbf16>, vector<128x128xbf16>, vector<128x128xf32> -> vector<128x128xf32>
      %89 = arith.addf %80, %88 : vector<128x128xf32>
      %c0_i32_96 = arith.constant 0 : i32
      %90 = arith.addi %79, %c0_i32_96 : i32
      %c0_97 = arith.constant 0 : index
      %91 = arith.index_cast %90 : i32 to index
      %c1_98 = arith.constant 1 : index
      %c0_99 = arith.constant 0 : index
      %92 = vector.load %arg1[%c0_97, %91, %c1_98, %c0_99] : memref<1x18x18x128xbf16, #tpu.memory_space<vmem>>, vector<1x8x16x128xbf16>
      %93 = vector.shape_cast %92 : vector<1x8x16x128xbf16> to vector<8x16x128xbf16>
      %94 = vector.shape_cast %93 : vector<8x16x128xbf16> to vector<128x128xbf16>
      %c1_100 = arith.constant 1 : index
      %c0_101 = arith.constant 0 : index
      %c0_102 = arith.constant 0 : index
      %95 = vector.load %arg2[%c1_100, %c0_101, %c0_102] : memref<9x128x128xbf16, #tpu.memory_space<vmem>>, vector<1x128x128xbf16>
      %96 = vector.shape_cast %95 : vector<1x128x128xbf16> to vector<128x128xbf16>
      %cst_103 = arith.constant dense<0.000000e+00> : vector<128x128xf32>
      %97 = tpu.matmul %94, %96, %cst_103 {dimension_numbers = #tpu.dot_dimension_numbers<[1], [0], [0], [1], [0, 0, 1, 1], [], []>} : vector<128x128xbf16>, vector<128x128xbf16>, vector<128x128xf32> -> vector<128x128xf32>
      %98 = arith.addf %89, %97 : vector<128x128xf32>
      %c0_i32_104 = arith.constant 0 : i32
      %99 = arith.addi %79, %c0_i32_104 : i32
      %c0_105 = arith.constant 0 : index
      %100 = arith.index_cast %99 : i32 to index
      %c2_106 = arith.constant 2 : index
      %c0_107 = arith.constant 0 : index
      %101 = vector.load %arg1[%c0_105, %100, %c2_106, %c0_107] : memref<1x18x18x128xbf16, #tpu.memory_space<vmem>>, vector<1x8x16x128xbf16>
      %102 = vector.shape_cast %101 : vector<1x8x16x128xbf16> to vector<8x16x128xbf16>
      %103 = vector.shape_cast %102 : vector<8x16x128xbf16> to vector<128x128xbf16>
      %c2_108 = arith.constant 2 : index
      %c0_109 = arith.constant 0 : index
      %c0_110 = arith.constant 0 : index
      %104 = vector.load %arg2[%c2_108, %c0_109, %c0_110] : memref<9x128x128xbf16, #tpu.memory_space<vmem>>, vector<1x128x128xbf16>
      %105 = vector.shape_cast %104 : vector<1x128x128xbf16> to vector<128x128xbf16>
      %cst_111 = arith.constant dense<0.000000e+00> : vector<128x128xf32>
      %106 = tpu.matmul %103, %105, %cst_111 {dimension_numbers = #tpu.dot_dimension_numbers<[1], [0], [0], [1], [0, 0, 1, 1], [], []>} : vector<128x128xbf16>, vector<128x128xbf16>, vector<128x128xf32> -> vector<128x128xf32>
      %107 = arith.addf %98, %106 : vector<128x128xf32>
      %c1_i32_112 = arith.constant 1 : i32
      %108 = arith.addi %79, %c1_i32_112 : i32
      %c0_113 = arith.constant 0 : index
      %109 = arith.index_cast %108 : i32 to index
      %c0_114 = arith.constant 0 : index
      %c0_115 = arith.constant 0 : index
      %110 = vector.load %arg1[%c0_113, %109, %c0_114, %c0_115] : memref<1x18x18x128xbf16, #tpu.memory_space<vmem>>, vector<1x8x16x128xbf16>
      %111 = vector.shape_cast %110 : vector<1x8x16x128xbf16> to vector<8x16x128xbf16>
      %112 = vector.shape_cast %111 : vector<8x16x128xbf16> to vector<128x128xbf16>
      %c3_116 = arith.constant 3 : index
      %c0_117 = arith.constant 0 : index
      %c0_118 = arith.constant 0 : index
      %113 = vector.load %arg2[%c3_116, %c0_117, %c0_118] : memref<9x128x128xbf16, #tpu.memory_space<vmem>>, vector<1x128x128xbf16>
      %114 = vector.shape_cast %113 : vector<1x128x128xbf16> to vector<128x128xbf16>
      %cst_119 = arith.constant dense<0.000000e+00> : vector<128x128xf32>
      %115 = tpu.matmul %112, %114, %cst_119 {dimension_numbers = #tpu.dot_dimension_numbers<[1], [0], [0], [1], [0, 0, 1, 1], [], []>} : vector<128x128xbf16>, vector<128x128xbf16>, vector<128x128xf32> -> vector<128x128xf32>
      %116 = arith.addf %107, %115 : vector<128x128xf32>
      %c1_i32_120 = arith.constant 1 : i32
      %117 = arith.addi %79, %c1_i32_120 : i32
      %c0_121 = arith.constant 0 : index
      %118 = arith.index_cast %117 : i32 to index
      %c1_122 = arith.constant 1 : index
      %c0_123 = arith.constant 0 : index
      %119 = vector.load %arg1[%c0_121, %118, %c1_122, %c0_123] : memref<1x18x18x128xbf16, #tpu.memory_space<vmem>>, vector<1x8x16x128xbf16>
      %120 = vector.shape_cast %119 : vector<1x8x16x128xbf16> to vector<8x16x128xbf16>
      %121 = vector.shape_cast %120 : vector<8x16x128xbf16> to vector<128x128xbf16>
      %c4_124 = arith.constant 4 : index
      %c0_125 = arith.constant 0 : index
      %c0_126 = arith.constant 0 : index
      %122 = vector.load %arg2[%c4_124, %c0_125, %c0_126] : memref<9x128x128xbf16, #tpu.memory_space<vmem>>, vector<1x128x128xbf16>
      %123 = vector.shape_cast %122 : vector<1x128x128xbf16> to vector<128x128xbf16>
      %cst_127 = arith.constant dense<0.000000e+00> : vector<128x128xf32>
      %124 = tpu.matmul %121, %123, %cst_127 {dimension_numbers = #tpu.dot_dimension_numbers<[1], [0], [0], [1], [0, 0, 1, 1], [], []>} : vector<128x128xbf16>, vector<128x128xbf16>, vector<128x128xf32> -> vector<128x128xf32>
      %125 = arith.addf %116, %124 : vector<128x128xf32>
      %c1_i32_128 = arith.constant 1 : i32
      %126 = arith.addi %79, %c1_i32_128 : i32
      %c0_129 = arith.constant 0 : index
      %127 = arith.index_cast %126 : i32 to index
      %c2_130 = arith.constant 2 : index
      %c0_131 = arith.constant 0 : index
      %128 = vector.load %arg1[%c0_129, %127, %c2_130, %c0_131] : memref<1x18x18x128xbf16, #tpu.memory_space<vmem>>, vector<1x8x16x128xbf16>
      %129 = vector.shape_cast %128 : vector<1x8x16x128xbf16> to vector<8x16x128xbf16>
      %130 = vector.shape_cast %129 : vector<8x16x128xbf16> to vector<128x128xbf16>
      %c5_132 = arith.constant 5 : index
      %c0_133 = arith.constant 0 : index
      %c0_134 = arith.constant 0 : index
      %131 = vector.load %arg2[%c5_132, %c0_133, %c0_134] : memref<9x128x128xbf16, #tpu.memory_space<vmem>>, vector<1x128x128xbf16>
      %132 = vector.shape_cast %131 : vector<1x128x128xbf16> to vector<128x128xbf16>
      %cst_135 = arith.constant dense<0.000000e+00> : vector<128x128xf32>
      %133 = tpu.matmul %130, %132, %cst_135 {dimension_numbers = #tpu.dot_dimension_numbers<[1], [0], [0], [1], [0, 0, 1, 1], [], []>} : vector<128x128xbf16>, vector<128x128xbf16>, vector<128x128xf32> -> vector<128x128xf32>
      %134 = arith.addf %125, %133 : vector<128x128xf32>
      %c2_i32_136 = arith.constant 2 : i32
      %135 = arith.addi %79, %c2_i32_136 : i32
      %c0_137 = arith.constant 0 : index
      %136 = arith.index_cast %135 : i32 to index
      %c0_138 = arith.constant 0 : index
      %c0_139 = arith.constant 0 : index
      %137 = vector.load %arg1[%c0_137, %136, %c0_138, %c0_139] : memref<1x18x18x128xbf16, #tpu.memory_space<vmem>>, vector<1x8x16x128xbf16>
      %138 = vector.shape_cast %137 : vector<1x8x16x128xbf16> to vector<8x16x128xbf16>
      %139 = vector.shape_cast %138 : vector<8x16x128xbf16> to vector<128x128xbf16>
      %c6_140 = arith.constant 6 : index
      %c0_141 = arith.constant 0 : index
      %c0_142 = arith.constant 0 : index
      %140 = vector.load %arg2[%c6_140, %c0_141, %c0_142] : memref<9x128x128xbf16, #tpu.memory_space<vmem>>, vector<1x128x128xbf16>
      %141 = vector.shape_cast %140 : vector<1x128x128xbf16> to vector<128x128xbf16>
      %cst_143 = arith.constant dense<0.000000e+00> : vector<128x128xf32>
      %142 = tpu.matmul %139, %141, %cst_143 {dimension_numbers = #tpu.dot_dimension_numbers<[1], [0], [0], [1], [0, 0, 1, 1], [], []>} : vector<128x128xbf16>, vector<128x128xbf16>, vector<128x128xf32> -> vector<128x128xf32>
      %143 = arith.addf %134, %142 : vector<128x128xf32>
      %c2_i32_144 = arith.constant 2 : i32
      %144 = arith.addi %79, %c2_i32_144 : i32
      %c0_145 = arith.constant 0 : index
      %145 = arith.index_cast %144 : i32 to index
      %c1_146 = arith.constant 1 : index
      %c0_147 = arith.constant 0 : index
      %146 = vector.load %arg1[%c0_145, %145, %c1_146, %c0_147] : memref<1x18x18x128xbf16, #tpu.memory_space<vmem>>, vector<1x8x16x128xbf16>
      %147 = vector.shape_cast %146 : vector<1x8x16x128xbf16> to vector<8x16x128xbf16>
      %148 = vector.shape_cast %147 : vector<8x16x128xbf16> to vector<128x128xbf16>
      %c7_148 = arith.constant 7 : index
      %c0_149 = arith.constant 0 : index
      %c0_150 = arith.constant 0 : index
      %149 = vector.load %arg2[%c7_148, %c0_149, %c0_150] : memref<9x128x128xbf16, #tpu.memory_space<vmem>>, vector<1x128x128xbf16>
      %150 = vector.shape_cast %149 : vector<1x128x128xbf16> to vector<128x128xbf16>
      %cst_151 = arith.constant dense<0.000000e+00> : vector<128x128xf32>
      %151 = tpu.matmul %148, %150, %cst_151 {dimension_numbers = #tpu.dot_dimension_numbers<[1], [0], [0], [1], [0, 0, 1, 1], [], []>} : vector<128x128xbf16>, vector<128x128xbf16>, vector<128x128xf32> -> vector<128x128xf32>
      %152 = arith.addf %143, %151 : vector<128x128xf32>
      %c2_i32_152 = arith.constant 2 : i32
      %153 = arith.addi %79, %c2_i32_152 : i32
      %c0_153 = arith.constant 0 : index
      %154 = arith.index_cast %153 : i32 to index
      %c2_154 = arith.constant 2 : index
      %c0_155 = arith.constant 0 : index
      %155 = vector.load %arg1[%c0_153, %154, %c2_154, %c0_155] : memref<1x18x18x128xbf16, #tpu.memory_space<vmem>>, vector<1x8x16x128xbf16>
      %156 = vector.shape_cast %155 : vector<1x8x16x128xbf16> to vector<8x16x128xbf16>
      %157 = vector.shape_cast %156 : vector<8x16x128xbf16> to vector<128x128xbf16>
      %c8_156 = arith.constant 8 : index
      %c0_157 = arith.constant 0 : index
      %c0_158 = arith.constant 0 : index
      %158 = vector.load %arg2[%c8_156, %c0_157, %c0_158] : memref<9x128x128xbf16, #tpu.memory_space<vmem>>, vector<1x128x128xbf16>
      %159 = vector.shape_cast %158 : vector<1x128x128xbf16> to vector<128x128xbf16>
      %cst_159 = arith.constant dense<0.000000e+00> : vector<128x128xf32>
      %160 = tpu.matmul %157, %159, %cst_159 {dimension_numbers = #tpu.dot_dimension_numbers<[1], [0], [0], [1], [0, 0, 1, 1], [], []>} : vector<128x128xbf16>, vector<128x128xbf16>, vector<128x128xf32> -> vector<128x128xf32>
      %161 = arith.addf %152, %160 : vector<128x128xf32>
      %162 = vector.broadcast %8 : vector<1x128xf32> to vector<128x128xf32>
      %163 = arith.mulf %161, %162 : vector<128x128xf32>
      %164 = vector.broadcast %9 : vector<1x128xf32> to vector<128x128xf32>
      %165 = arith.addf %163, %164 : vector<128x128xf32>
      %cst_160 = arith.constant 2.000000e-01 : f32
      %166 = vector.broadcast %cst_160 : f32 to vector<128x128xf32>
      %167 = arith.mulf %166, %165 : vector<128x128xf32>
      %168 = arith.maximumf %165, %167 : vector<128x128xf32>
      %169 = vector.shape_cast %168 : vector<128x128xf32> to vector<4x2x16x128xf32>
      %170 = arith.truncf %169 : vector<4x2x16x128xf32> to vector<4x2x16x128xbf16>
      %171 = vector.extract_strided_slice %170 {offsets = [0, 0, 0, 0], sizes = [4, 1, 16, 128], strides = [1, 1, 1, 1]} : vector<4x2x16x128xbf16> to vector<4x1x16x128xbf16>
      %172 = vector.shape_cast %171 : vector<4x1x16x128xbf16> to vector<4x16x128xbf16>
      %c4_i32 = arith.constant 4 : i32
      %173 = arith.muli %arg11, %c4_i32 : i32
      %174 = arith.index_cast %173 : i32 to index
      %c1_161 = arith.constant 1 : index
      %c0_162 = arith.constant 0 : index
      %175 = vector.load %arg10[%174, %c1_161, %c0_162] : memref<9x18x128xbf16, #tpu.memory_space<vmem>>, vector<4x16x128xbf16>
      tpu.vector_store %arg10[%174, %c1_161, %c0_162], %172 {strides = array<i32>} : memref<9x18x128xbf16, #tpu.memory_space<vmem>>, vector<4x16x128xbf16>,
      %176 = vector.extract_strided_slice %170 {offsets = [0, 1, 0, 0], sizes = [4, 1, 16, 128], strides = [1, 1, 1, 1]} : vector<4x2x16x128xbf16> to vector<4x1x16x128xbf16>
      %177 = vector.shape_cast %176 : vector<4x1x16x128xbf16> to vector<4x16x128xbf16>
      %c4_i32_163 = arith.constant 4 : i32
      %178 = arith.muli %arg11, %c4_i32_163 : i32
      %c1_i32_164 = arith.constant 1 : i32
      %179 = arith.addi %178, %c1_i32_164 : i32
      %180 = arith.index_cast %179 : i32 to index
      %c1_165 = arith.constant 1 : index
      %c0_166 = arith.constant 0 : index
      %181 = vector.load %arg9[%180, %c1_165, %c0_166] : memref<9x18x128xbf16, #tpu.memory_space<vmem>>, vector<4x16x128xbf16>
      tpu.vector_store %arg9[%180, %c1_165, %c0_166], %177 {strides = array<i32>} : memref<9x18x128xbf16, #tpu.memory_space<vmem>>, vector<4x16x128xbf16>,
    }
    %c2_i32_20 = arith.constant 2 : i32
    %cst_21 = arith.constant 0.000000e+00 : f32
    %11 = vector.broadcast %cst_21 : f32 to vector<128x128xf32>
    %c0_22 = arith.constant 0 : index
    %c0_23 = arith.constant 0 : index
    %c0_24 = arith.constant 0 : index
    %12 = vector.load %arg9[%c0_22, %c0_23, %c0_24] : memref<9x18x128xbf16, #tpu.memory_space<vmem>>, vector<8x16x128xbf16>
    %13 = vector.shape_cast %12 : vector<8x16x128xbf16> to vector<128x128xbf16>
    %c0_25 = arith.constant 0 : index
    %c0_26 = arith.constant 0 : index
    %c0_27 = arith.constant 0 : index
    %14 = vector.load %arg3[%c0_25, %c0_26, %c0_27] : memref<9x128x128xbf16, #tpu.memory_space<vmem>>, vector<1x128x128xbf16>
    %15 = vector.shape_cast %14 : vector<1x128x128xbf16> to vector<128x128xbf16>
    %cst_28 = arith.constant dense<0.000000e+00> : vector<128x128xf32>
    %16 = tpu.matmul %13, %15, %cst_28 {dimension_numbers = #tpu.dot_dimension_numbers<[1], [0], [0], [1], [0, 0, 1, 1], [], []>} : vector<128x128xbf16>, vector<128x128xbf16>, vector<128x128xf32> -> vector<128x128xf32>
    %17 = arith.addf %11, %16 : vector<128x128xf32>
    %c0_29 = arith.constant 0 : index
    %c1 = arith.constant 1 : index
    %c0_30 = arith.constant 0 : index
    %18 = vector.load %arg9[%c0_29, %c1, %c0_30] : memref<9x18x128xbf16, #tpu.memory_space<vmem>>, vector<8x16x128xbf16>
    %19 = vector.shape_cast %18 : vector<8x16x128xbf16> to vector<128x128xbf16>
    %c1_31 = arith.constant 1 : index
    %c0_32 = arith.constant 0 : index
    %c0_33 = arith.constant 0 : index
    %20 = vector.load %arg3[%c1_31, %c0_32, %c0_33] : memref<9x128x128xbf16, #tpu.memory_space<vmem>>, vector<1x128x128xbf16>
    %21 = vector.shape_cast %20 : vector<1x128x128xbf16> to vector<128x128xbf16>
    %cst_34 = arith.constant dense<0.000000e+00> : vector<128x128xf32>
    %22 = tpu.matmul %19, %21, %cst_34 {dimension_numbers = #tpu.dot_dimension_numbers<[1], [0], [0], [1], [0, 0, 1, 1], [], []>} : vector<128x128xbf16>, vector<128x128xbf16>, vector<128x128xf32> -> vector<128x128xf32>
    %23 = arith.addf %17, %22 : vector<128x128xf32>
    %c0_35 = arith.constant 0 : index
    %c2 = arith.constant 2 : index
    %c0_36 = arith.constant 0 : index
    %24 = vector.load %arg9[%c0_35, %c2, %c0_36] : memref<9x18x128xbf16, #tpu.memory_space<vmem>>, vector<8x16x128xbf16>
    %25 = vector.shape_cast %24 : vector<8x16x128xbf16> to vector<128x128xbf16>
    %c2_37 = arith.constant 2 : index
    %c0_38 = arith.constant 0 : index
    %c0_39 = arith.constant 0 : index
    %26 = vector.load %arg3[%c2_37, %c0_38, %c0_39] : memref<9x128x128xbf16, #tpu.memory_space<vmem>>, vector<1x128x128xbf16>
    %27 = vector.shape_cast %26 : vector<1x128x128xbf16> to vector<128x128xbf16>
    %cst_40 = arith.constant dense<0.000000e+00> : vector<128x128xf32>
    %28 = tpu.matmul %25, %27, %cst_40 {dimension_numbers = #tpu.dot_dimension_numbers<[1], [0], [0], [1], [0, 0, 1, 1], [], []>} : vector<128x128xbf16>, vector<128x128xbf16>, vector<128x128xf32> -> vector<128x128xf32>
    %29 = arith.addf %23, %28 : vector<128x128xf32>
    %c0_41 = arith.constant 0 : index
    %c0_42 = arith.constant 0 : index
    %c0_43 = arith.constant 0 : index
    %30 = vector.load %arg10[%c0_41, %c0_42, %c0_43] : memref<9x18x128xbf16, #tpu.memory_space<vmem>>, vector<8x16x128xbf16>
    %31 = vector.shape_cast %30 : vector<8x16x128xbf16> to vector<128x128xbf16>
    %c3 = arith.constant 3 : index
    %c0_44 = arith.constant 0 : index
    %c0_45 = arith.constant 0 : index
    %32 = vector.load %arg3[%c3, %c0_44, %c0_45] : memref<9x128x128xbf16, #tpu.memory_space<vmem>>, vector<1x128x128xbf16>
    %33 = vector.shape_cast %32 : vector<1x128x128xbf16> to vector<128x128xbf16>
    %cst_46 = arith.constant dense<0.000000e+00> : vector<128x128xf32>
    %34 = tpu.matmul %31, %33, %cst_46 {dimension_numbers = #tpu.dot_dimension_numbers<[1], [0], [0], [1], [0, 0, 1, 1], [], []>} : vector<128x128xbf16>, vector<128x128xbf16>, vector<128x128xf32> -> vector<128x128xf32>
    %35 = arith.addf %29, %34 : vector<128x128xf32>
    %c0_47 = arith.constant 0 : index
    %c1_48 = arith.constant 1 : index
    %c0_49 = arith.constant 0 : index
    %36 = vector.load %arg10[%c0_47, %c1_48, %c0_49] : memref<9x18x128xbf16, #tpu.memory_space<vmem>>, vector<8x16x128xbf16>
    %37 = vector.shape_cast %36 : vector<8x16x128xbf16> to vector<128x128xbf16>
    %c4 = arith.constant 4 : index
    %c0_50 = arith.constant 0 : index
    %c0_51 = arith.constant 0 : index
    %38 = vector.load %arg3[%c4, %c0_50, %c0_51] : memref<9x128x128xbf16, #tpu.memory_space<vmem>>, vector<1x128x128xbf16>
    %39 = vector.shape_cast %38 : vector<1x128x128xbf16> to vector<128x128xbf16>
    %cst_52 = arith.constant dense<0.000000e+00> : vector<128x128xf32>
    %40 = tpu.matmul %37, %39, %cst_52 {dimension_numbers = #tpu.dot_dimension_numbers<[1], [0], [0], [1], [0, 0, 1, 1], [], []>} : vector<128x128xbf16>, vector<128x128xbf16>, vector<128x128xf32> -> vector<128x128xf32>
    %41 = arith.addf %35, %40 : vector<128x128xf32>
    %c0_53 = arith.constant 0 : index
    %c2_54 = arith.constant 2 : index
    %c0_55 = arith.constant 0 : index
    %42 = vector.load %arg10[%c0_53, %c2_54, %c0_55] : memref<9x18x128xbf16, #tpu.memory_space<vmem>>, vector<8x16x128xbf16>
    %43 = vector.shape_cast %42 : vector<8x16x128xbf16> to vector<128x128xbf16>
    %c5 = arith.constant 5 : index
    %c0_56 = arith.constant 0 : index
    %c0_57 = arith.constant 0 : index
    %44 = vector.load %arg3[%c5, %c0_56, %c0_57] : memref<9x128x128xbf16, #tpu.memory_space<vmem>>, vector<1x128x128xbf16>
    %45 = vector.shape_cast %44 : vector<1x128x128xbf16> to vector<128x128xbf16>
    %cst_58 = arith.constant dense<0.000000e+00> : vector<128x128xf32>
    %46 = tpu.matmul %43, %45, %cst_58 {dimension_numbers = #tpu.dot_dimension_numbers<[1], [0], [0], [1], [0, 0, 1, 1], [], []>} : vector<128x128xbf16>, vector<128x128xbf16>, vector<128x128xf32> -> vector<128x128xf32>
    %47 = arith.addf %41, %46 : vector<128x128xf32>
    %c1_59 = arith.constant 1 : index
    %c0_60 = arith.constant 0 : index
    %c0_61 = arith.constant 0 : index
    %48 = vector.load %arg9[%c1_59, %c0_60, %c0_61] : memref<9x18x128xbf16, #tpu.memory_space<vmem>>, vector<8x16x128xbf16>
    %49 = vector.shape_cast %48 : vector<8x16x128xbf16> to vector<128x128xbf16>
    %c6 = arith.constant 6 : index
    %c0_62 = arith.constant 0 : index
    %c0_63 = arith.constant 0 : index
    %50 = vector.load %arg3[%c6, %c0_62, %c0_63] : memref<9x128x128xbf16, #tpu.memory_space<vmem>>, vector<1x128x128xbf16>
    %51 = vector.shape_cast %50 : vector<1x128x128xbf16> to vector<128x128xbf16>
    %cst_64 = arith.constant dense<0.000000e+00> : vector<128x128xf32>
    %52 = tpu.matmul %49, %51, %cst_64 {dimension_numbers = #tpu.dot_dimension_numbers<[1], [0], [0], [1], [0, 0, 1, 1], [], []>} : vector<128x128xbf16>, vector<128x128xbf16>, vector<128x128xf32> -> vector<128x128xf32>
    %53 = arith.addf %47, %52 : vector<128x128xf32>
    %c1_65 = arith.constant 1 : index
    %c1_66 = arith.constant 1 : index
    %c0_67 = arith.constant 0 : index
    %54 = vector.load %arg9[%c1_65, %c1_66, %c0_67] : memref<9x18x128xbf16, #tpu.memory_space<vmem>>, vector<8x16x128xbf16>
    %55 = vector.shape_cast %54 : vector<8x16x128xbf16> to vector<128x128xbf16>
    %c7 = arith.constant 7 : index
    %c0_68 = arith.constant 0 : index
    %c0_69 = arith.constant 0 : index
    %56 = vector.load %arg3[%c7, %c0_68, %c0_69] : memref<9x128x128xbf16, #tpu.memory_space<vmem>>, vector<1x128x128xbf16>
    %57 = vector.shape_cast %56 : vector<1x128x128xbf16> to vector<128x128xbf16>
    %cst_70 = arith.constant dense<0.000000e+00> : vector<128x128xf32>
    %58 = tpu.matmul %55, %57, %cst_70 {dimension_numbers = #tpu.dot_dimension_numbers<[1], [0], [0], [1], [0, 0, 1, 1], [], []>} : vector<128x128xbf16>, vector<128x128xbf16>, vector<128x128xf32> -> vector<128x128xf32>
    %59 = arith.addf %53, %58 : vector<128x128xf32>
    %c1_71 = arith.constant 1 : index
    %c2_72 = arith.constant 2 : index
    %c0_73 = arith.constant 0 : index
    %60 = vector.load %arg9[%c1_71, %c2_72, %c0_73] : memref<9x18x128xbf16, #tpu.memory_space<vmem>>, vector<8x16x128xbf16>
    %61 = vector.shape_cast %60 : vector<8x16x128xbf16> to vector<128x128xbf16>
    %c8_74 = arith.constant 8 : index
    %c0_75 = arith.constant 0 : index
    %c0_76 = arith.constant 0 : index
    %62 = vector.load %arg3[%c8_74, %c0_75, %c0_76] : memref<9x128x128xbf16, #tpu.memory_space<vmem>>, vector<1x128x128xbf16>
    %63 = vector.shape_cast %62 : vector<1x128x128xbf16> to vector<128x128xbf16>
    %cst_77 = arith.constant dense<0.000000e+00> : vector<128x128xf32>
    %64 = tpu.matmul %61, %63, %cst_77 {dimension_numbers = #tpu.dot_dimension_numbers<[1], [0], [0], [1], [0, 0, 1, 1], [], []>} : vector<128x128xbf16>, vector<128x128xbf16>, vector<128x128xf32> -> vector<128x128xf32>
    %65 = arith.addf %59, %64 : vector<128x128xf32>
    %c0_78 = arith.constant 0 : index
    %c0_79 = arith.constant 0 : index
    %66 = vector.load %arg6[%c0_78, %c0_79] : memref<1x128xf32, #tpu.memory_space<vmem>>, vector<1x128xf32>
    %67 = vector.broadcast %66 : vector<1x128xf32> to vector<128x128xf32>
    %68 = arith.mulf %65, %67 : vector<128x128xf32>
    %c0_80 = arith.constant 0 : index
    %c0_81 = arith.constant 0 : index
    %69 = vector.load %arg7[%c0_80, %c0_81] : memref<1x128xf32, #tpu.memory_space<vmem>>, vector<1x128xf32>
    %70 = vector.broadcast %69 : vector<1x128xf32> to vector<128x128xf32>
    %71 = arith.addf %68, %70 : vector<128x128xf32>
    %cst_82 = arith.constant 2.000000e-01 : f32
    %72 = vector.broadcast %cst_82 : f32 to vector<128x128xf32>
    %73 = arith.mulf %72, %71 : vector<128x128xf32>
    %74 = arith.maximumf %71, %73 : vector<128x128xf32>
    %75 = vector.shape_cast %74 : vector<128x128xf32> to vector<8x16x128xf32>
    %c0_83 = arith.constant 0 : index
    %c0_84 = arith.constant 0 : index
    %c0_85 = arith.constant 0 : index
    %c0_86 = arith.constant 0 : index
    %76 = vector.load %arg8[%c0_83, %c0_84, %c0_85, %c0_86] : memref<1x8x16x128xf32, #tpu.memory_space<vmem>>, vector<1x8x16x128xf32>
    %77 = vector.shape_cast %76 : vector<1x8x16x128xf32> to vector<8x16x128xf32>
    %78 = vector.shape_cast %75 : vector<8x16x128xf32> to vector<1x8x16x128xf32>
    tpu.vector_store %arg8[%c0_83, %c0_84, %c0_85, %c0_86], %78 {strides = array<i32>} : memref<1x8x16x128xf32, #tpu.memory_space<vmem>>, vector<1x8x16x128xf32>,
    return
  }
  func.func @transform_0(%arg0: i32) -> (i32, i32, i32, i32) {
    %c0_i32 = arith.constant 0 : i32
    %c0_i32_0 = arith.constant 0 : i32
    %c0_i32_1 = arith.constant 0 : i32
    %c0_i32_2 = arith.constant 0 : i32
    return %arg0, %c0_i32, %c0_i32_0, %c0_i32_1 : i32, i32, i32, i32
  }
  func.func @transform_1(%arg0: i32) -> (i32, i32, i32) {
    %c0_i32 = arith.constant 0 : i32
    %c0_i32_0 = arith.constant 0 : i32
    %c0_i32_1 = arith.constant 0 : i32
    %c0_i32_2 = arith.constant 0 : i32
    return %c0_i32, %c0_i32_0, %c0_i32_1 : i32, i32, i32
  }
  func.func @transform_2(%arg0: i32) -> (i32, i32, i32) {
    %c0_i32 = arith.constant 0 : i32
    %c0_i32_0 = arith.constant 0 : i32
    %c0_i32_1 = arith.constant 0 : i32
    %c0_i32_2 = arith.constant 0 : i32
    return %c0_i32, %c0_i32_0, %c0_i32_1 : i32, i32, i32
  }
  func.func @transform_3(%arg0: i32) -> (i32, i32) {
    %c0_i32 = arith.constant 0 : i32
    %c0_i32_0 = arith.constant 0 : i32
    %c0_i32_1 = arith.constant 0 : i32
    return %c0_i32, %c0_i32_0 : i32, i32
  }
  func.func @transform_4(%arg0: i32) -> (i32, i32) {
    %c0_i32 = arith.constant 0 : i32
    %c0_i32_0 = arith.constant 0 : i32
    %c0_i32_1 = arith.constant 0 : i32
    return %c0_i32, %c0_i32_0 : i32, i32
  }
  func.func @transform_5(%arg0: i32) -> (i32, i32) {
    %c0_i32 = arith.constant 0 : i32
    %c0_i32_0 = arith.constant 0 : i32
    %c0_i32_1 = arith.constant 0 : i32
    return %c0_i32, %c0_i32_0 : i32, i32
  }
  func.func @transform_6(%arg0: i32) -> (i32, i32) {
    %c0_i32 = arith.constant 0 : i32
    %c0_i32_0 = arith.constant 0 : i32
    %c0_i32_1 = arith.constant 0 : i32
    return %c0_i32, %c0_i32_0 : i32, i32
  }
  func.func @transform_7(%arg0: i32) -> (i32, i32, i32, i32) {
    %c0_i32 = arith.constant 0 : i32
    %c0_i32_0 = arith.constant 0 : i32
    %c0_i32_1 = arith.constant 0 : i32
    %c0_i32_2 = arith.constant 0 : i32
    return %arg0, %c0_i32, %c0_i32_0, %c0_i32_1 : i32, i32, i32, i32
  }
}

</mosaic_0001>

<llo_original>
// kernel: sub_conv_forward.1
$region0: #{sub_conv_forward.1}
  #allocation0 [shape = 'u32[]', space=smem, size = 0x4, offset = 0x4, fixed_abs, tag = 'smem constant byte address 0x4 - core index']
  #allocation1 [shape = 'u32[144,128]{1,0:T(1,128)}', space=vmem, size = 0x12000, scoped, tag = 'internal scratch']
  #allocation2 [shape = 'bf16[9,18,128]{2,1,0:T(8,128)(2,1)}', space=vmem, size = 0xd800, scoped, tag = 'scratch operand']
  #allocation3 [shape = 'bf16[9,18,128]{2,1,0:T(8,128)(2,1)}', space=vmem, size = 0xd800, scoped, tag = 'scratch operand']
  %s0 = inlined_call_operand.vmem [shape: bf16[2,18,18,128], index: 0, kind: input, shape index: {}]
  %s1 = inlined_call_operand.vmem [shape: bf16[9,128,128], index: 1, kind: input, shape index: {}]
  %s2 = inlined_call_operand.vmem [shape: bf16[9,128,128], index: 2, kind: input, shape index: {}]
  %s3 = inlined_call_operand.vmem [shape: f32[1,128], index: 3, kind: input, shape index: {}]
  %s4 = inlined_call_operand.vmem [shape: f32[1,128], index: 4, kind: input, shape index: {}]
  %s5 = inlined_call_operand.vmem [shape: f32[1,128], index: 5, kind: input, shape index: {}]
  %s6 = inlined_call_operand.vmem [shape: f32[1,128], index: 6, kind: input, shape index: {}]
  %s7 = inlined_call_operand.vmem [shape: f32[2,8,16,128], index: 7, kind: output, shape index: {}]
  %s8 = sld [smem:[#allocation0]]
  $region68: #{sub_conv_forward.1} parent=0
    _
  %s10 = ssub.s32 1, %s8
  %s11 = scalar_select 0, %s10, %s8
  loop: start=0, step=1, limit=4
  $region2: #{sub_conv_forward.1} parent=0 // loop_pre_header
    _
  $region3: #{sub_conv_forward.1} parent=0 // loop_header
    %s13 = sphi 0, %s17
    %p14 = scmp.ge.s32.totalorder %s13, 4
    %s23 = sphi 0, %s25
    %s26 = sphi 0, %s23
    %s27 = sphi 0, %s26
    %s43 = sphi 0, %s27
    %s47 = sphi 0, %s47
    %s49 = sphi 0, %s47
    %s50 = sphi 0, %s49
    %s64 = sphi 0, %s50
    %s68 = sphi 0, %s68
    %s70 = sphi 0, %s68
    %s71 = sphi 0, %s70
    %s85 = sphi 0, %s71
    %s89 = sphi 0, %s89
    %s91 = sphi 0, %s89
    %s92 = sphi 0, %s91
    %s106 = sphi 0, %s92
    %s110 = sphi 0, %s110
    %s112 = sphi 0, %s110
    %s113 = sphi 0, %s112
    %s127 = sphi 0, %s113
    %s131 = sphi 0, %s131
    %s133 = sphi 0, %s131
    %s134 = sphi 0, %s133
    %s148 = sphi 0, %s134
    %s152 = sphi 0, %s152
    %s154 = sphi 0, %s152
    %s155 = sphi 0, %s154
    %s169 = sphi 0, %s155
    %s175 = sphi 0, %s177
    %s178 = sphi 0, %s175
    %s179 = sphi 0, %s178
    %s195 = sphi 0, %s179
  $region4: #{sub_conv_forward.1} parent=0 // loop_header_branch
    %16 = sbr.rel (%p14) target = $region8
  $region5: #{sub_conv_forward.1} parent=0 // loop_body
    %s18 = ssub.s32 %s13, 1
    %s19 = ssub.s32 %s13, 2
    %s20 = sadd.s32 %s13, 1
    %s21 = ssub.s32 %s13, %s20
    %p22 = scmp.eq.s32.totalorder %s21, 0
    %s24 = sadd.s32 %s23, 1
    %s25 = scalar_select %p22, %s23, %s24
    %p28 = pneg %p22
    %p29 = scmp.eq.s32.totalorder %s13, 1
    %p30 = por %p28, %p29
    %p31 = scmp.ne.s32.totalorder %s23, %s26
    %p32 = scmp.eq.s32.totalorder %s13, 0
    %p33 = por %p31, %p32
    %p34 = scmp.ne.s32.totalorder %s23, %s26
    %p35 = scmp.eq.s32.totalorder %s18, 1
    %p36 = por %p34, %p35
    %p37 = scmp.ne.s32.totalorder %s26, %s27
    %p38 = scmp.eq.s32.totalorder %s18, 0
    %p39 = por %p37, %p38
    %p40 = scmp.ne.s32.totalorder %s26, %s27
    %p41 = scmp.eq.s32.totalorder %s19, 1
    %p42 = por %p40, %p41
    %p44 = scmp.ne.s32.totalorder %s27, %s43
    %p45 = scmp.eq.s32.totalorder %s19, 0
    %p46 = por %p44, %p45
    %s48 = sadd.s32 %s47, 1
    %p51 = scmp.eq.s32.totalorder %s13, 1
    %p52 = scmp.ne.s32.totalorder %s47, %s49
    %p53 = scmp.eq.s32.totalorder %s13, 0
    %p54 = por %p52, %p53
    %p55 = scmp.ne.s32.totalorder %s47, %s49
    %p56 = scmp.eq.s32.totalorder %s18, 1
    %p57 = por %p55, %p56
    %p58 = scmp.ne.s32.totalorder %s49, %s50
    %p59 = scmp.eq.s32.totalorder %s18, 0
    %p60 = por %p58, %p59
    %p61 = scmp.ne.s32.totalorder %s49, %s50
    %p62 = scmp.eq.s32.totalorder %s19, 1
    %p63 = por %p61, %p62
    %p65 = scmp.ne.s32.totalorder %s50, %s64
    %p66 = scmp.eq.s32.totalorder %s19, 0
    %p67 = por %p65, %p66
    %s69 = sadd.s32 %s68, 1
    %p72 = scmp.eq.s32.totalorder %s13, 1
    %p73 = scmp.ne.s32.totalorder %s68, %s70
    %p74 = scmp.eq.s32.totalorder %s13, 0
    %p75 = por %p73, %p74
    %p76 = scmp.ne.s32.totalorder %s68, %s70
    %p77 = scmp.eq.s32.totalorder %s18, 1
    %p78 = por %p76, %p77
    %p79 = scmp.ne.s32.totalorder %s70, %s71
    %p80 = scmp.eq.s32.totalorder %s18, 0
    %p81 = por %p79, %p80
    %p82 = scmp.ne.s32.totalorder %s70, %s71
    %p83 = scmp.eq.s32.totalorder %s19, 1
    %p84 = por %p82, %p83
    %p86 = scmp.ne.s32.totalorder %s71, %s85
    %p87 = scmp.eq.s32.totalorder %s19, 0
    %p88 = por %p86, %p87
    %s90 = sadd.s32 %s89, 1
    %p93 = scmp.eq.s32.totalorder %s13, 1
    %p94 = scmp.ne.s32.totalorder %s89, %s91
    %p95 = scmp.eq.s32.totalorder %s13, 0
    %p96 = por %p94, %p95
    %p97 = scmp.ne.s32.totalorder %s89, %s91
    %p98 = scmp.eq.s32.totalorder %s18, 1
    %p99 = por %p97, %p98
    %p100 = scmp.ne.s32.totalorder %s91, %s92
    %p101 = scmp.eq.s32.totalorder %s18, 0
    %p102 = por %p100, %p101
    %p103 = scmp.ne.s32.totalorder %s91, %s92
    %p104 = scmp.eq.s32.totalorder %s19, 1
    %p105 = por %p103, %p104
    %p107 = scmp.ne.s32.totalorder %s92, %s106
    %p108 = scmp.eq.s32.totalorder %s19, 0
    %p109 = por %p107, %p108
    %s111 = sadd.s32 %s110, 1
    %p114 = scmp.eq.s32.totalorder %s13, 1
    %p115 = scmp.ne.s32.totalorder %s110, %s112
    %p116 = scmp.eq.s32.totalorder %s13, 0
    %p117 = por %p115, %p116
    %p118 = scmp.ne.s32.totalorder %s110, %s112
    %p119 = scmp.eq.s32.totalorder %s18, 1
    %p120 = por %p118, %p119
    %p121 = scmp.ne.s32.totalorder %s112, %s113
    %p122 = scmp.eq.s32.totalorder %s18, 0
    %p123 = por %p121, %p122
    %p124 = scmp.ne.s32.totalorder %s112, %s113
    %p125 = scmp.eq.s32.totalorder %s19, 1
    %p126 = por %p124, %p125
    %p128 = scmp.ne.s32.totalorder %s113, %s127
    %p129 = scmp.eq.s32.totalorder %s19, 0
    %p130 = por %p128, %p129
    %s132 = sadd.s32 %s131, 1
    %p135 = scmp.eq.s32.totalorder %s13, 1
    %p136 = scmp.ne.s32.totalorder %s131, %s133
    %p137 = scmp.eq.s32.totalorder %s13, 0
    %p138 = por %p136, %p137
    %p139 = scmp.ne.s32.totalorder %s131, %s133
    %p140 = scmp.eq.s32.totalorder %s18, 1
    %p141 = por %p139, %p140
    %p142 = scmp.ne.s32.totalorder %s133, %s134
    %p143 = scmp.eq.s32.totalorder %s18, 0
    %p144 = por %p142, %p143
    %p145 = scmp.ne.s32.totalorder %s133, %s134
    %p146 = scmp.eq.s32.totalorder %s19, 1
    %p147 = por %p145, %p146
    %p149 = scmp.ne.s32.totalorder %s134, %s148
    %p150 = scmp.eq.s32.totalorder %s19, 0
    %p151 = por %p149, %p150
    %s153 = sadd.s32 %s152, 1
    %p156 = scmp.eq.s32.totalorder %s13, 1
    %p157 = scmp.ne.s32.totalorder %s152, %s154
    %p158 = scmp.eq.s32.totalorder %s13, 0
    %p159 = por %p157, %p158
    %p160 = scmp.ne.s32.totalorder %s152, %s154
    %p161 = scmp.eq.s32.totalorder %s18, 1
    %p162 = por %p160, %p161
    %p163 = scmp.ne.s32.totalorder %s154, %s155
    %p164 = scmp.eq.s32.totalorder %s18, 0
    %p165 = por %p163, %p164
    %p166 = scmp.ne.s32.totalorder %s154, %s155
    %p167 = scmp.eq.s32.totalorder %s19, 1
    %p168 = por %p166, %p167
    %p170 = scmp.ne.s32.totalorder %s155, %s169
    %p171 = scmp.eq.s32.totalorder %s19, 0
    %p172 = por %p170, %p171
    %s173 = ssub.s32 %s13, %s20
    %p174 = scmp.eq.s32.totalorder %s173, 0
    %s176 = sadd.s32 %s175, 1
    %s177 = scalar_select %p174, %s175, %s176
    %p180 = pneg %p174
    %p181 = scmp.eq.s32.totalorder %s13, 1
    %p182 = por %p180, %p181
    %p183 = scmp.ne.s32.totalorder %s175, %s178
    %p184 = scmp.eq.s32.totalorder %s13, 0
    %p185 = por %p183, %p184
    %p186 = scmp.ne.s32.totalorder %s175, %s178
    %p187 = scmp.eq.s32.totalorder %s18, 1
    %p188 = por %p186, %p187
    %p189 = scmp.ne.s32.totalorder %s178, %s179
    %p190 = scmp.eq.s32.totalorder %s18, 0
    %p191 = por %p189, %p190
    %p192 = scmp.ne.s32.totalorder %s178, %s179
    %p193 = scmp.eq.s32.totalorder %s19, 1
    %p194 = por %p192, %p193
    %p196 = scmp.ne.s32.totalorder %s179, %s195
    %p197 = scmp.eq.s32.totalorder %s19, 0
    %p198 = por %p196, %p197
    %p199 = scmp.le.s32.totalorder 1, %s13
    %p200 = scmp.lt.s32.totalorder %s13, 3
    %p201 = pnand %p199, %p200
    %p202 = pneg %p201
    // Predicated region
    $region9: #{sub_conv_forward.1} parent=5 // pred_check
      _
    $region10: #{sub_conv_forward.1} parent=5 // pred_check_branch
      %204 = sbr.rel (%p201) target = $region12
    $region11: #{sub_conv_forward.1} parent=5 // pred_region
      %s205 = ssub.s32 %s13, 1
      // Predicated region
      $region13: #{sub_conv_forward.1} parent=11 // pred_check
        %p206 = pneg %p60
      $region14: #{sub_conv_forward.1} parent=11 // pred_check_branch
        %208 = sbr.rel (%p206) target = $region16
      $region15: #{sub_conv_forward.1} parent=11 // pred_region
        _
      $region16: #{sub_conv_forward.1} parent=11 // pred_fallthru
        _
      // Predicated region
      $region17: #{sub_conv_forward.1} parent=11 // pred_check
        %p209 = pneg %p81
      $region18: #{sub_conv_forward.1} parent=11 // pred_check_branch
        %211 = sbr.rel (%p209) target = $region20
      $region19: #{sub_conv_forward.1} parent=11 // pred_region
        _
      $region20: #{sub_conv_forward.1} parent=11 // pred_fallthru
        _
      // Predicated region
      $region21: #{sub_conv_forward.1} parent=11 // pred_check
        %p212 = pneg %p102
      $region22: #{sub_conv_forward.1} parent=11 // pred_check_branch
        %214 = sbr.rel (%p212) target = $region24
      $region23: #{sub_conv_forward.1} parent=11 // pred_region
        _
      $region24: #{sub_conv_forward.1} parent=11 // pred_fallthru
        _
      // Predicated region
      $region25: #{sub_conv_forward.1} parent=11 // pred_check
        %p215 = pneg %p123
      $region26: #{sub_conv_forward.1} parent=11 // pred_check_branch
        %217 = sbr.rel (%p215) target = $region28
      $region27: #{sub_conv_forward.1} parent=11 // pred_region
        _
      $region28: #{sub_conv_forward.1} parent=11 // pred_fallthru
        _
      // Predicated region
      $region29: #{sub_conv_forward.1} parent=11 // pred_check
        %p218 = pneg %p144
      $region30: #{sub_conv_forward.1} parent=11 // pred_check_branch
        %220 = sbr.rel (%p218) target = $region32
      $region31: #{sub_conv_forward.1} parent=11 // pred_region
        _
      $region32: #{sub_conv_forward.1} parent=11 // pred_fallthru
        _
      // Predicated region
      $region33: #{sub_conv_forward.1} parent=11 // pred_check
        %p221 = pneg %p165
      $region34: #{sub_conv_forward.1} parent=11 // pred_check_branch
        %223 = sbr.rel (%p221) target = $region36
      $region35: #{sub_conv_forward.1} parent=11 // pred_region
        _
      $region36: #{sub_conv_forward.1} parent=11 // pred_fallthru
        _
    $region12: #{sub_conv_forward.1} parent=5 // pred_fallthru
      _
    %p224 = scmp.lt.s32.totalorder %s13, 2
    // Predicated region
    $region37: #{sub_conv_forward.1} parent=5 // pred_check
      %p225 = pneg %p224
    $region38: #{sub_conv_forward.1} parent=5 // pred_check_branch
      %227 = sbr.rel (%p225) target = $region40
    $region39: #{sub_conv_forward.1} parent=5 // pred_region
      // Predicated region
      $region41: #{sub_conv_forward.1} parent=39 // pred_check
        %p228 = pneg %p33
      $region42: #{sub_conv_forward.1} parent=39 // pred_check_branch
        %230 = sbr.rel (%p228) target = $region44
      $region43: #{sub_conv_forward.1} parent=39 // pred_region
        %p231 = scmp.lt.s32.totalorder %s13, 1
        %s232 = scalar_select %p231, %s13, 1
        %s233 = smul.addr %s232, 54
        %s234 = smul.addr %s233, 4
        %s235 = scalar_lea.vmem %s0, %s234
      $region44: #{sub_conv_forward.1} parent=39 // pred_fallthru
        _
    $region40: #{sub_conv_forward.1} parent=5 // pred_fallthru
      _
    %p236 = scmp.le.s32.totalorder 1, %s13
    %p237 = scmp.lt.s32.totalorder %s13, 3
    %p238 = pnand %p236, %p237
    %p239 = pneg %p238
    // Predicated region
    $region45: #{sub_conv_forward.1} parent=5 // pred_check
      _
    $region46: #{sub_conv_forward.1} parent=5 // pred_check_branch
      %241 = sbr.rel (%p238) target = $region48
    $region47: #{sub_conv_forward.1} parent=5 // pred_region
      %s242 = ssub.s32 %s13, 1
      %p243 = scmp.lt.s32.totalorder %s18, 1
      %s244 = scalar_select %p243, %s18, 1
      %s245 = smul.addr %s244, 54
      %s246 = smul.addr %s245, 4
      %s247 = scalar_lea.vmem %s0, %s246
      %p248 = pneg %p39
      %p249 = pneg %p36
      %p250 = pneg %p60
      %p251 = pneg %p57
      %p252 = pneg %p81
      %p253 = pneg %p78
      %p254 = pneg %p102
      %p255 = pneg %p99
      %p256 = pneg %p123
      %p257 = pneg %p120
      %p258 = pneg %p144
      %p259 = pneg %p141
      %p260 = pneg %p165
      %p261 = pneg %p162
      %p262 = pneg %p191
      %p263 = pneg %p188
      %p264 = scmp.lt.s32.totalorder %s18, 1
      %s265 = scalar_select %p264, %s18, 1
      %s266 = smul.addr %s265, 16
      %s267 = smul.addr %s266, 8
      %s268 = scalar_lea.vmem %s7, %s267
      %p269 = scmp.lt.s32.totalorder %s18, 1
      %s270 = scalar_select %p269, %s18, 1
      %s271 = smul.addr %s270, 54
      %s272 = smul.addr %s271, 4
      %s273 = scalar_lea.vmem %s0, %s272
      %p274 = scmp.lt.s32.totalorder %s18, 1
      %s275 = scalar_select %p274, %s18, 1
      %s276 = smul.addr %s275, 16
      %s277 = smul.addr %s276, 8
      %s278 = scalar_lea.vmem %s7, %s277
      %280 = vst [vmem:[#allocation2] sm:$0xf] 0
      %281 = vst [vmem:[#allocation2 + $0x4] sm:$0xf] 0
      %282 = vst [vmem:[#allocation2 + $0x8] sm:$0x1] 0
      %s283 = scalar_lea.vmem [#allocation3], 96
      %284 = vst [vmem:[%s283] sm:$0xf] 0
      %285 = vst [vmem:[%s283 + $0x4] sm:$0xf] 0
      %286 = vst [vmem:[%s283 + $0x8] sm:$0x1] 0
      %vm287 = vcmask 1040384
      %vm288 = vsmask.f32 256
      %vm289 = vmand %vm287, %vm288
      %v290 = vld [vmem:[#allocation2] sm:$0x1]
      %v291 = vsel %vm289, 0, %v290
      %292 = vst [vmem:[#allocation2] sm:$0x1] %v291
      %v293 = vld [vmem:[#allocation2 + $0xc] sm:$0x1]
      %v294 = vsel %vm289, 0, %v293
      %295 = vst [vmem:[#allocation2 + $0xc] sm:$0x1] %v294
      %v296 = vld [vmem:[#allocation2 + $0x18] sm:$0x1]
      %v297 = vsel %vm289, 0, %v296
      %298 = vst [vmem:[#allocation2 + $0x18] sm:$0x1] %v297
      %v299 = vld [vmem:[#allocation2 + $0x24] sm:$0x1]
      %v300 = vsel %vm289, 0, %v299
      %301 = vst [vmem:[#allocation2 + $0x24] sm:$0x1] %v300
      %v302 = vld [vmem:[#allocation2 + $0x30] sm:$0x1]
      %v303 = vsel %vm289, 0, %v302
      %304 = vst [vmem:[#allocation2 + $0x30] sm:$0x1] %v303
      %v305 = vld [vmem:[#allocation2 + $0x3c] sm:$0x1]
      %v306 = vsel %vm289, 0, %v305
      %307 = vst [vmem:[#allocation2 + $0x3c] sm:$0x1] %v306
      %v308 = vld [vmem:[#allocation2 + $0x48] sm:$0x1]
      %v309 = vsel %vm289, 0, %v308
      %310 = vst [vmem:[#allocation2 + $0x48] sm:$0x1] %v309
      %v311 = vld [vmem:[#allocation2 + $0x54] sm:$0x1]
      %v312 = vsel %vm289, 0, %v311
      %313 = vst [vmem:[#allocation2 + $0x54] sm:$0x1] %v312
      %v314 = vld [vmem:[#allocation2 + $0x60] sm:$0x1]
      %v315 = vsel %vm289, 0, %v314
      %316 = vst [vmem:[#allocation2 + $0x60] sm:$0x1] %v315
      %vm317 = vsmask.f32 7938
      %vm318 = vmand %vm287, %vm317
      %v319 = vld [vmem:[#allocation2 + $0x8] sm:$0x1]
      %v320 = vsel %vm318, 0, %v319
      %321 = vst [vmem:[#allocation2 + $0x8] sm:$0x1] %v320
      %v322 = vld [vmem:[#allocation2 + $0x14] sm:$0x1]
      %v323 = vsel %vm318, 0, %v322
      %324 = vst [vmem:[#allocation2 + $0x14] sm:$0x1] %v323
      %v325 = vld [vmem:[#allocation2 + $0x20] sm:$0x1]
      %v326 = vsel %vm318, 0, %v325
      %327 = vst [vmem:[#allocation2 + $0x20] sm:$0x1] %v326
      %v328 = vld [vmem:[#allocation2 + $0x2c] sm:$0x1]
      %v329 = vsel %vm318, 0, %v328
      %330 = vst [vmem:[#allocation2 + $0x2c] sm:$0x1] %v329
      %v331 = vld [vmem:[#allocation2 + $0x38] sm:$0x1]
      %v332 = vsel %vm318, 0, %v331
      %333 = vst [vmem:[#allocation2 + $0x38] sm:$0x1] %v332
      %v334 = vld [vmem:[#allocation2 + $0x44] sm:$0x1]
      %v335 = vsel %vm318, 0, %v334
      %336 = vst [vmem:[#allocation2 + $0x44] sm:$0x1] %v335
      %v337 = vld [vmem:[#allocation2 + $0x50] sm:$0x1]
      %v338 = vsel %vm318, 0, %v337
      %339 = vst [vmem:[#allocation2 + $0x50] sm:$0x1] %v338
      %v340 = vld [vmem:[#allocation2 + $0x5c] sm:$0x1]
      %v341 = vsel %vm318, 0, %v340
      %342 = vst [vmem:[#allocation2 + $0x5c] sm:$0x1] %v341
      %v343 = vld [vmem:[#allocation2 + $0x68] sm:$0x1]
      %v344 = vsel %vm318, 0, %v343
      %345 = vst [vmem:[#allocation2 + $0x68] sm:$0x1] %v344
      %v346 = vld [vmem:[#allocation3] sm:$0x1]
      %v347 = vsel %vm289, 0, %v346
      %348 = vst [vmem:[#allocation3] sm:$0x1] %v347
      %v349 = vld [vmem:[#allocation3 + $0xc] sm:$0x1]
      %v350 = vsel %vm289, 0, %v349
      %351 = vst [vmem:[#allocation3 + $0xc] sm:$0x1] %v350
      %v352 = vld [vmem:[#allocation3 + $0x18] sm:$0x1]
      %v353 = vsel %vm289, 0, %v352
      %354 = vst [vmem:[#allocation3 + $0x18] sm:$0x1] %v353
      %v355 = vld [vmem:[#allocation3 + $0x24] sm:$0x1]
      %v356 = vsel %vm289, 0, %v355
      %357 = vst [vmem:[#allocation3 + $0x24] sm:$0x1] %v356
      %v358 = vld [vmem:[#allocation3 + $0x30] sm:$0x1]
      %v359 = vsel %vm289, 0, %v358
      %360 = vst [vmem:[#allocation3 + $0x30] sm:$0x1] %v359
      %v361 = vld [vmem:[#allocation3 + $0x3c] sm:$0x1]
      %v362 = vsel %vm289, 0, %v361
      %363 = vst [vmem:[#allocation3 + $0x3c] sm:$0x1] %v362
      %v364 = vld [vmem:[#allocation3 + $0x48] sm:$0x1]
      %v365 = vsel %vm289, 0, %v364
      %366 = vst [vmem:[#allocation3 + $0x48] sm:$0x1] %v365
      %v367 = vld [vmem:[#allocation3 + $0x54] sm:$0x1]
      %v368 = vsel %vm289, 0, %v367
      %369 = vst [vmem:[#allocation3 + $0x54] sm:$0x1] %v368
      %v370 = vld [vmem:[#allocation3 + $0x60] sm:$0x1]
      %v371 = vsel %vm289, 0, %v370
      %372 = vst [vmem:[#allocation3 + $0x60] sm:$0x1] %v371
      %v373 = vld [vmem:[#allocation3 + $0x8] sm:$0x1]
      %v374 = vsel %vm318, 0, %v373
      %375 = vst [vmem:[#allocation3 + $0x8] sm:$0x1] %v374
      %v376 = vld [vmem:[#allocation3 + $0x14] sm:$0x1]
      %v377 = vsel %vm318, 0, %v376
      %378 = vst [vmem:[#allocation3 + $0x14] sm:$0x1] %v377
      %v379 = vld [vmem:[#allocation3 + $0x20] sm:$0x1]
      %v380 = vsel %vm318, 0, %v379
      %381 = vst [vmem:[#allocation3 + $0x20] sm:$0x1] %v380
      %v382 = vld [vmem:[#allocation3 + $0x2c] sm:$0x1]
      %v383 = vsel %vm318, 0, %v382
      %384 = vst [vmem:[#allocation3 + $0x2c] sm:$0x1] %v383
      %v385 = vld [vmem:[#allocation3 + $0x38] sm:$0x1]
      %v386 = vsel %vm318, 0, %v385
      %387 = vst [vmem:[#allocation3 + $0x38] sm:$0x1] %v386
      %v388 = vld [vmem:[#allocation3 + $0x44] sm:$0x1]
      %v389 = vsel %vm318, 0, %v388
      %390 = vst [vmem:[#allocation3 + $0x44] sm:$0x1] %v389
      %v391 = vld [vmem:[#allocation3 + $0x50] sm:$0x1]
      %v392 = vsel %vm318, 0, %v391
      %393 = vst [vmem:[#allocation3 + $0x50] sm:$0x1] %v392
      %v394 = vld [vmem:[#allocation3 + $0x5c] sm:$0x1]
      %v395 = vsel %vm318, 0, %v394
      %396 = vst [vmem:[#allocation3 + $0x5c] sm:$0x1] %v395
      %v397 = vld [vmem:[#allocation3 + $0x68] sm:$0x1]
      %v398 = vsel %vm318, 0, %v397
      %399 = vst [vmem:[#allocation3 + $0x68] sm:$0x1] %v398
      %v400 = vld [vmem:[%s3] sm:$0x1]
      %v401 = vld [vmem:[%s4] sm:$0x1]
      loop: start=0, step=1, limit=2
      $region49: #{sub_conv_forward.1} parent=47 // loop_pre_header
        _
      $region50: #{sub_conv_forward.1} parent=47 // loop_header
        %s403 = sphi 0, %s407
        %p404 = scmp.ge.s32.totalorder %s403, 2
      $region51: #{sub_conv_forward.1} parent=47 // loop_header_branch
        %406 = sbr.rel (%p404) target = $region55
      $region52: #{sub_conv_forward.1} parent=47 // loop_body
        %s408 = smul.u32 %s403, 8
        %s409 = smul.u32 %s408, 3
        %s410 = smul.addr %s409, 4
        %s411 = scalar_lea.vmem %s273, %s410
        %v412 = vld [vmem:[%s411] sm:$0xf]
        %v413 = vld [vmem:[%s411 + $0x4] sm:$0xf]
        %v414 = vld [vmem:[%s411 + $0xc] sm:$0xf]
        %v415 = vld [vmem:[%s411 + $0x10] sm:$0xf]
        %v416 = vld [vmem:[%s411 + $0x18] sm:$0xf]
        %v417 = vld [vmem:[%s411 + $0x1c] sm:$0xf]
        %v418 = vld [vmem:[%s411 + $0x24] sm:$0xf]
        %v419 = vld [vmem:[%s411 + $0x28] sm:$0xf]
        %v420 = vld [vmem:[%s411 + $0x30] sm:$0xf]
        %v421 = vld [vmem:[%s411 + $0x34] sm:$0xf]
        %v422 = vld [vmem:[%s411 + $0x3c] sm:$0xf]
        %v423 = vld [vmem:[%s411 + $0x40] sm:$0xf]
        %v424 = vld [vmem:[%s411 + $0x48] sm:$0xf]
        %v425 = vld [vmem:[%s411 + $0x4c] sm:$0xf]
        %v426 = vld [vmem:[%s411 + $0x54] sm:$0xf]
        %v427 = vld [vmem:[%s411 + $0x58] sm:$0xf]
        %v428 = vld [vmem:[%s1] sm:$0xf]
        %v429 = vld [vmem:[%s1 + $0x4] sm:$0xf]
        %v430 = vld [vmem:[%s1 + $0x8] sm:$0xf]
        %v431 = vld [vmem:[%s1 + $0xc] sm:$0xf]
        %v432 = vld [vmem:[%s1 + $0x10] sm:$0xf]
        %v433 = vld [vmem:[%s1 + $0x14] sm:$0xf]
        %v434 = vld [vmem:[%s1 + $0x18] sm:$0xf]
        %v435 = vld [vmem:[%s1 + $0x1c] sm:$0xf]
        %v436 = vld [vmem:[%s1 + $0x20] sm:$0xf]
        %v437 = vld [vmem:[%s1 + $0x24] sm:$0xf]
        %v438 = vld [vmem:[%s1 + $0x28] sm:$0xf]
        %v439 = vld [vmem:[%s1 + $0x2c] sm:$0xf]
        %v440 = vld [vmem:[%s1 + $0x30] sm:$0xf]
        %v441 = vld [vmem:[%s1 + $0x34] sm:$0xf]
        %v442 = vld [vmem:[%s1 + $0x38] sm:$0xf]
        %v443 = vld [vmem:[%s1 + $0x3c] sm:$0xf]
        %v444 = vld [vmem:[%s411 + $0x8] sm:$0x1]
        %v445 = vld [vmem:[%s411 + $0x14] sm:$0x1]
        %v446 = vld [vmem:[%s411 + $0x20] sm:$0x1]
        %v447 = vld [vmem:[%s411 + $0x2c] sm:$0x1]
        %v448 = vld [vmem:[%s411 + $0x38] sm:$0x1]
        %v449 = vld [vmem:[%s411 + $0x44] sm:$0x1]
        %v450 = vld [vmem:[%s411 + $0x50] sm:$0x1]
        %v451 = vld [vmem:[%s411 + $0x5c] sm:$0x1]
        %vm452 = vsmask.f32 3328
        %vm453 = vsmask.f32 7440
        %vm454 = vmor %vm452, %vm453
        %v456 = vshrl.u32 %v412, 16
        %v458 = vrot.slane %v456, 4
        %v459 = vshll.u32 %v412, 16
        %v461 = vrot.slane %v459, 5
        %v462 = vor.u32 %v458, %v461
        %v463 = vrot.slane %v462, 4
        %v465 = vshll.u32 %v413, 16
        %v467 = vrot.slane %v465, 5
        %v468 = vsel %vm454, %v463, %v467
        %v469 = vshrl.u32 %v413, 16
        %v471 = vrot.slane %v469, 4
        %v472 = vor.u32 %v471, %v467
        %v473 = vrot.slane %v472, 4
        %v475 = vshll.u32 %v444, 16
        %v477 = vrot.slane %v475, 5
        %v478 = vsel %vm454, %v473, %v477
        %v480 = vshrl.u32 %v414, 16
        %v482 = vrot.slane %v480, 4
        %v483 = vshll.u32 %v414, 16
        %v485 = vrot.slane %v483, 5
        %v486 = vor.u32 %v482, %v485
        %v487 = vrot.slane %v486, 4
        %v489 = vshll.u32 %v415, 16
        %v491 = vrot.slane %v489, 5
        %v492 = vsel %vm454, %v487, %v491
        %v493 = vshrl.u32 %v415, 16
        %v495 = vrot.slane %v493, 4
        %v496 = vor.u32 %v495, %v491
        %v497 = vrot.slane %v496, 4
        %v499 = vshll.u32 %v445, 16
        %v501 = vrot.slane %v499, 5
        %v502 = vsel %vm454, %v497, %v501
        %v504 = vshrl.u32 %v416, 16
        %v506 = vrot.slane %v504, 4
        %v507 = vshll.u32 %v416, 16
        %v509 = vrot.slane %v507, 5
        %v510 = vor.u32 %v506, %v509
        %v511 = vrot.slane %v510, 4
        %v513 = vshll.u32 %v417, 16
        %v515 = vrot.slane %v513, 5
        %v516 = vsel %vm454, %v511, %v515
        %v517 = vshrl.u32 %v417, 16
        %v519 = vrot.slane %v517, 4
        %v520 = vor.u32 %v519, %v515
        %v521 = vrot.slane %v520, 4
        %v523 = vshll.u32 %v446, 16
        %v525 = vrot.slane %v523, 5
        %v526 = vsel %vm454, %v521, %v525
        %v528 = vshrl.u32 %v418, 16
        %v530 = vrot.slane %v528, 4
        %v531 = vshll.u32 %v418, 16
        %v533 = vrot.slane %v531, 5
        %v534 = vor.u32 %v530, %v533
        %v535 = vrot.slane %v534, 4
        %v537 = vshll.u32 %v419, 16
        %v539 = vrot.slane %v537, 5
        %v540 = vsel %vm454, %v535, %v539
        %v541 = vshrl.u32 %v419, 16
        %v543 = vrot.slane %v541, 4
        %v544 = vor.u32 %v543, %v539
        %v545 = vrot.slane %v544, 4
        %v547 = vshll.u32 %v447, 16
        %v549 = vrot.slane %v547, 5
        %v550 = vsel %vm454, %v545, %v549
        %v552 = vshrl.u32 %v420, 16
        %v554 = vrot.slane %v552, 4
        %v555 = vshll.u32 %v420, 16
        %v557 = vrot.slane %v555, 5
        %v558 = vor.u32 %v554, %v557
        %v559 = vrot.slane %v558, 4
        %v561 = vshll.u32 %v421, 16
        %v563 = vrot.slane %v561, 5
        %v564 = vsel %vm454, %v559, %v563
        %v565 = vshrl.u32 %v421, 16
        %v567 = vrot.slane %v565, 4
        %v568 = vor.u32 %v567, %v563
        %v569 = vrot.slane %v568, 4
        %v571 = vshll.u32 %v448, 16
        %v573 = vrot.slane %v571, 5
        %v574 = vsel %vm454, %v569, %v573
        %v576 = vshrl.u32 %v422, 16
        %v578 = vrot.slane %v576, 4
        %v579 = vshll.u32 %v422, 16
        %v581 = vrot.slane %v579, 5
        %v582 = vor.u32 %v578, %v581
        %v583 = vrot.slane %v582, 4
        %v585 = vshll.u32 %v423, 16
        %v587 = vrot.slane %v585, 5
        %v588 = vsel %vm454, %v583, %v587
        %v589 = vshrl.u32 %v423, 16
        %v591 = vrot.slane %v589, 4
        %v592 = vor.u32 %v591, %v587
        %v593 = vrot.slane %v592, 4
        %v595 = vshll.u32 %v449, 16
        %v597 = vrot.slane %v595, 5
        %v598 = vsel %vm454, %v593, %v597
        %v600 = vshrl.u32 %v424, 16
        %v602 = vrot.slane %v600, 4
        %v603 = vshll.u32 %v424, 16
        %v605 = vrot.slane %v603, 5
        %v606 = vor.u32 %v602, %v605
        %v607 = vrot.slane %v606, 4
        %v609 = vshll.u32 %v425, 16
        %v611 = vrot.slane %v609, 5
        %v612 = vsel %vm454, %v607, %v611
        %v613 = vshrl.u32 %v425, 16
        %v615 = vrot.slane %v613, 4
        %v616 = vor.u32 %v615, %v611
        %v617 = vrot.slane %v616, 4
        %v619 = vshll.u32 %v450, 16
        %v621 = vrot.slane %v619, 5
        %v622 = vsel %vm454, %v617, %v621
        %v624 = vshrl.u32 %v426, 16
        %v626 = vrot.slane %v624, 4
        %v627 = vshll.u32 %v426, 16
        %v629 = vrot.slane %v627, 5
        %v630 = vor.u32 %v626, %v629
        %v631 = vrot.slane %v630, 4
        %v633 = vshll.u32 %v427, 16
        %v635 = vrot.slane %v633, 5
        %v636 = vsel %vm454, %v631, %v635
        %v637 = vshrl.u32 %v427, 16
        %v639 = vrot.slane %v637, 4
        %v640 = vor.u32 %v639, %v635
        %v641 = vrot.slane %v640, 4
        %v643 = vshll.u32 %v451, 16
        %v645 = vrot.slane %v643, 5
        %v646 = vsel %vm454, %v641, %v645
        %s647 = scalar_lea.vmem %s1, 64
        %v648 = vld [vmem:[%s647] sm:$0xf]
        %v649 = vld [vmem:[%s647 + $0x4] sm:$0xf]
        %v650 = vld [vmem:[%s647 + $0x8] sm:$0xf]
        %v651 = vld [vmem:[%s647 + $0xc] sm:$0xf]
        %v652 = vld [vmem:[%s647 + $0x10] sm:$0xf]
        %v653 = vld [vmem:[%s647 + $0x14] sm:$0xf]
        %v654 = vld [vmem:[%s647 + $0x18] sm:$0xf]
        %v655 = vld [vmem:[%s647 + $0x1c] sm:$0xf]
        %v656 = vld [vmem:[%s647 + $0x20] sm:$0xf]
        %v657 = vld [vmem:[%s647 + $0x24] sm:$0xf]
        %v658 = vld [vmem:[%s647 + $0x28] sm:$0xf]
        %v659 = vld [vmem:[%s647 + $0x2c] sm:$0xf]
        %v660 = vld [vmem:[%s647 + $0x30] sm:$0xf]
        %v661 = vld [vmem:[%s647 + $0x34] sm:$0xf]
        %v662 = vld [vmem:[%s647 + $0x38] sm:$0xf]
        %v663 = vld [vmem:[%s647 + $0x3c] sm:$0xf]
        %v664 = vunpack.c.l.b16 %v468
        %v665 = vunpack.c.l.b16 %v478
        %v666 = vunpack.c.l.b16 %v492
        %v667 = vunpack.c.l.b16 %v502
        %v668 = vunpack.c.l.b16 %v516
        %v669 = vunpack.c.l.b16 %v526
        %v670 = vunpack.c.l.b16 %v540
        %v671 = vunpack.c.l.b16 %v550
        %v672 = vunpack.c.l.b16 %v564
        %v673 = vunpack.c.l.b16 %v574
        %v674 = vunpack.c.l.b16 %v588
        %v675 = vunpack.c.l.b16 %v598
        %v676 = vunpack.c.l.b16 %v612
        %v677 = vunpack.c.l.b16 %v622
        %v678 = vunpack.c.l.b16 %v636
        %v679 = vunpack.c.l.b16 %v646
        %v680 = vpack.c.b16 %v665, %v664
        %v681 = vpack.c.b16 %v667, %v666
        %v682 = vpack.c.b16 %v669, %v668
        %v683 = vpack.c.b16 %v671, %v670
        %v684 = vpack.c.b16 %v673, %v672
        %v685 = vpack.c.b16 %v675, %v674
        %v686 = vpack.c.b16 %v677, %v676
        %v687 = vpack.c.b16 %v679, %v678
        %v712 = vunpack.c.l.b16 %v648
        %v713 = vunpack.c.l.b16 %v649
        %v714 = vunpack.c.l.b16 %v650
        %v715 = vunpack.c.l.b16 %v651
        %v716 = vunpack.c.l.b16 %v652
        %v717 = vunpack.c.l.b16 %v653
        %v718 = vunpack.c.l.b16 %v654
        %v719 = vunpack.c.l.b16 %v655
        %v720 = vunpack.c.l.b16 %v656
        %v721 = vunpack.c.l.b16 %v657
        %v722 = vunpack.c.l.b16 %v658
        %v723 = vunpack.c.l.b16 %v659
        %v724 = vunpack.c.l.b16 %v660
        %v725 = vunpack.c.l.b16 %v661
        %v726 = vunpack.c.l.b16 %v662
        %v727 = vunpack.c.l.b16 %v663
        %v728 = vpack.c.b16 %v713, %v712
        %v729 = vpack.c.b16 %v715, %v714
        %v730 = vpack.c.b16 %v717, %v716
        %v731 = vpack.c.b16 %v719, %v718
        %v732 = vpack.c.b16 %v721, %v720
        %v733 = vpack.c.b16 %v723, %v722
        %v734 = vpack.c.b16 %v725, %v724
        %v735 = vpack.c.b16 %v727, %v726
        %744 = vmatprep.subr.bf16.mxu0 0
        %745 = vmatpush1.bf16.msra.mxu0 %v728
        %746 = vmatprep.subr.bf16.mxu0 0
        %747 = vmatpush1.bf16.msra.mxu0 %v729
        %748 = vmatprep.subr.bf16.mxu0 0
        %749 = vmatpush1.bf16.msra.mxu0 %v730
        %750 = vmatprep.subr.bf16.mxu0 0
        %751 = vmatpush1.bf16.msra.mxu0 %v731
        %752 = vmatprep.subr.bf16.mxu0 0
        %753 = vmatpush1.bf16.msra.mxu0 %v732
        %754 = vmatprep.subr.bf16.mxu0 0
        %755 = vmatpush1.bf16.msra.mxu0 %v733
        %756 = vmatprep.subr.bf16.mxu0 0
        %757 = vmatpush1.bf16.msra.mxu0 %v734
        %758 = vmatprep.subr.bf16.mxu0 0
        %759 = vmatpush1.bf16.msra.mxu0 %v735
        %760 = vmatprep.subr.bf16.mxu0 0
        %761 = vmatpush1.bf16.msra.mxu0 0
        %762 = vmatprep.subr.bf16.mxu0 0
        %763 = vmatpush1.bf16.msra.mxu0 0
        %764 = vmatprep.subr.bf16.mxu0 0
        %765 = vmatpush1.bf16.msra.mxu0 0
        %766 = vmatprep.subr.bf16.mxu0 0
        %767 = vmatpush1.bf16.msra.mxu0 0
        %768 = vmatprep.subr.bf16.mxu0 0
        %769 = vmatpush1.bf16.msra.mxu0 0
        %770 = vmatprep.subr.bf16.mxu0 0
        %771 = vmatpush1.bf16.msra.mxu0 0
        %772 = vmatprep.subr.bf16.mxu0 0
        %773 = vmatpush1.bf16.msra.mxu0 0
        %774 = vmatprep.subr.bf16.mxu0 0
        %775 = vmatpush1.bf16.msra.mxu0 0
        %776 = vmatprep.mubr.bf16.mxu0 0
        %777 = vmatmul.mubr.bf16.gmra.mrb[0].mxu0 %v680
        %v778 = vpop.f32.mrb[0].mxu0
        %v779 = vadd.f32 0.0, %v778
        %v780 = vpop.f32.mrb[0].mxu0
        %v781 = vpop.f32.mrb[0].mxu0
        %v782 = vadd.f32 0.0, %v781
        %v783 = vpop.f32.mrb[0].mxu0
        %784 = vmatprep.mubr.bf16.mxu0 0
        %785 = vmatmul.mubr.bf16.gmra.mrb[0].mxu0 %v681
        %v786 = vpop.f32.mrb[0].mxu0
        %v787 = vadd.f32 0.0, %v786
        %v788 = vpop.f32.mrb[0].mxu0
        %v789 = vpop.f32.mrb[0].mxu0
        %v790 = vadd.f32 0.0, %v789
        %v791 = vpop.f32.mrb[0].mxu0
        %792 = vmatprep.mubr.bf16.mxu0 0
        %793 = vmatmul.mubr.bf16.gmra.mrb[0].mxu0 %v682
        %v794 = vpop.f32.mrb[0].mxu0
        %v795 = vadd.f32 0.0, %v794
        %v796 = vpop.f32.mrb[0].mxu0
        %v797 = vpop.f32.mrb[0].mxu0
        %v798 = vadd.f32 0.0, %v797
        %v799 = vpop.f32.mrb[0].mxu0
        %800 = vmatprep.mubr.bf16.mxu0 0
        %801 = vmatmul.mubr.bf16.gmra.mrb[0].mxu0 %v683
        %v802 = vpop.f32.mrb[0].mxu0
        %v803 = vadd.f32 0.0, %v802
        %v804 = vpop.f32.mrb[0].mxu0
        %v805 = vpop.f32.mrb[0].mxu0
        %v806 = vadd.f32 0.0, %v805
        %v807 = vpop.f32.mrb[0].mxu0
        %808 = vmatprep.mubr.bf16.mxu0 0
        %809 = vmatmul.mubr.bf16.gmra.mrb[0].mxu0 %v684
        %v810 = vpop.f32.mrb[0].mxu0
        %v811 = vadd.f32 0.0, %v810
        %v812 = vpop.f32.mrb[0].mxu0
        %v813 = vpop.f32.mrb[0].mxu0
        %v814 = vadd.f32 0.0, %v813
        %v815 = vpop.f32.mrb[0].mxu0
        %816 = vmatprep.mubr.bf16.mxu0 0
        %817 = vmatmul.mubr.bf16.gmra.mrb[0].mxu0 %v685
        %v818 = vpop.f32.mrb[0].mxu0
        %v819 = vadd.f32 0.0, %v818
        %v820 = vpop.f32.mrb[0].mxu0
        %v821 = vpop.f32.mrb[0].mxu0
        %v822 = vadd.f32 0.0, %v821
        %v823 = vpop.f32.mrb[0].mxu0
        %824 = vmatprep.mubr.bf16.mxu0 0
        %825 = vmatmul.mubr.bf16.gmra.mrb[0].mxu0 %v686
        %v826 = vpop.f32.mrb[0].mxu0
        %v827 = vadd.f32 0.0, %v826
        %v828 = vpop.f32.mrb[0].mxu0
        %v829 = vpop.f32.mrb[0].mxu0
        %v830 = vadd.f32 0.0, %v829
        %v831 = vpop.f32.mrb[0].mxu0
        %832 = vmatprep.mubr.bf16.mxu0 0
        %833 = vmatmul.mubr.bf16.gmra.mrb[0].mxu0 %v687
        %v834 = vpop.f32.mrb[0].mxu0
        %v835 = vadd.f32 0.0, %v834
        %v836 = vpop.f32.mrb[0].mxu0
        %v837 = vpop.f32.mrb[0].mxu0
        %v838 = vadd.f32 0.0, %v837
        %v839 = vpop.f32.mrb[0].mxu0
        %840 = vdwg.mxu0
        %v857 = vunpack.c.l.b16 %v412
        %v858 = vunpack.c.l.b16 %v413
        %v859 = vunpack.c.l.b16 %v414
        %v860 = vunpack.c.l.b16 %v415
        %v861 = vunpack.c.l.b16 %v416
        %v862 = vunpack.c.l.b16 %v417
        %v863 = vunpack.c.l.b16 %v418
        %v864 = vunpack.c.l.b16 %v419
        %v865 = vunpack.c.l.b16 %v420
        %v866 = vunpack.c.l.b16 %v421
        %v867 = vunpack.c.l.b16 %v422
        %v868 = vunpack.c.l.b16 %v423
        %v869 = vunpack.c.l.b16 %v424
        %v870 = vunpack.c.l.b16 %v425
        %v871 = vunpack.c.l.b16 %v426
        %v872 = vunpack.c.l.b16 %v427
        %v873 = vpack.c.b16 %v858, %v857
        %v874 = vpack.c.b16 %v860, %v859
        %v875 = vpack.c.b16 %v862, %v861
        %v876 = vpack.c.b16 %v864, %v863
        %v877 = vpack.c.b16 %v866, %v865
        %v878 = vpack.c.b16 %v868, %v867
        %v879 = vpack.c.b16 %v870, %v869
        %v880 = vpack.c.b16 %v872, %v871
        %v905 = vunpack.c.l.b16 %v428
        %v906 = vunpack.c.l.b16 %v429
        %v907 = vunpack.c.l.b16 %v430
        %v908 = vunpack.c.l.b16 %v431
        %v909 = vunpack.c.l.b16 %v432
        %v910 = vunpack.c.l.b16 %v433
        %v911 = vunpack.c.l.b16 %v434
        %v912 = vunpack.c.l.b16 %v435
        %v913 = vunpack.c.l.b16 %v436
        %v914 = vunpack.c.l.b16 %v437
        %v915 = vunpack.c.l.b16 %v438
        %v916 = vunpack.c.l.b16 %v439
        %v917 = vunpack.c.l.b16 %v440
        %v918 = vunpack.c.l.b16 %v441
        %v919 = vunpack.c.l.b16 %v442
        %v920 = vunpack.c.l.b16 %v443
        %v921 = vpack.c.b16 %v906, %v905
        %v922 = vpack.c.b16 %v908, %v907
        %v923 = vpack.c.b16 %v910, %v909
        %v924 = vpack.c.b16 %v912, %v911
        %v925 = vpack.c.b16 %v914, %v913
        %v926 = vpack.c.b16 %v916, %v915
        %v927 = vpack.c.b16 %v918, %v917
        %v928 = vpack.c.b16 %v920, %v919
        %937 = vmatprep.subr.bf16.mxu0 0
        %938 = vmatpush1.bf16.msra.mxu0 %v921
        %939 = vmatprep.subr.bf16.mxu0 0
        %940 = vmatpush1.bf16.msra.mxu0 %v922
        %941 = vmatprep.subr.bf16.mxu0 0
        %942 = vmatpush1.bf16.msra.mxu0 %v923
        %943 = vmatprep.subr.bf16.mxu0 0
        %944 = vmatpush1.bf16.msra.mxu0 %v924
        %945 = vmatprep.subr.bf16.mxu0 0
        %946 = vmatpush1.bf16.msra.mxu0 %v925
        %947 = vmatprep.subr.bf16.mxu0 0
        %948 = vmatpush1.bf16.msra.mxu0 %v926
        %949 = vmatprep.subr.bf16.mxu0 0
        %950 = vmatpush1.bf16.msra.mxu0 %v927
        %951 = vmatprep.subr.bf16.mxu0 0
        %952 = vmatpush1.bf16.msra.mxu0 %v928
        %953 = vmatprep.subr.bf16.mxu0 0
        %954 = vmatpush1.bf16.msra.mxu0 0
        %955 = vmatprep.subr.bf16.mxu0 0
        %956 = vmatpush1.bf16.msra.mxu0 0
        %957 = vmatprep.subr.bf16.mxu0 0
        %958 = vmatpush1.bf16.msra.mxu0 0
        %959 = vmatprep.subr.bf16.mxu0 0
        %960 = vmatpush1.bf16.msra.mxu0 0
        %961 = vmatprep.subr.bf16.mxu0 0
        %962 = vmatpush1.bf16.msra.mxu0 0
        %963 = vmatprep.subr.bf16.mxu0 0
        %964 = vmatpush1.bf16.msra.mxu0 0
        %965 = vmatprep.subr.bf16.mxu0 0
        %966 = vmatpush1.bf16.msra.mxu0 0
        %967 = vmatprep.subr.bf16.mxu0 0
        %968 = vmatpush1.bf16.msra.mxu0 0
        %969 = vmatprep.mubr.bf16.mxu0 0
        %970 = vmatmul.mubr.bf16.gmra.mrb[0].mxu0 %v873
        %v971 = vpop.f32.mrb[0].mxu0
        %v972 = vadd.f32 %v779, %v971
        %v973 = vpop.f32.mrb[0].mxu0
        %v974 = vpop.f32.mrb[0].mxu0
        %v975 = vadd.f32 %v782, %v974
        %v976 = vpop.f32.mrb[0].mxu0
        %977 = vmatprep.mubr.bf16.mxu0 0
        %978 = vmatmul.mubr.bf16.gmra.mrb[0].mxu0 %v874
        %v979 = vpop.f32.mrb[0].mxu0
        %v980 = vadd.f32 %v787, %v979
        %v981 = vpop.f32.mrb[0].mxu0
        %v982 = vpop.f32.mrb[0].mxu0
        %v983 = vadd.f32 %v790, %v982
        %v984 = vpop.f32.mrb[0].mxu0
        %985 = vmatprep.mubr.bf16.mxu0 0
        %986 = vmatmul.mubr.bf16.gmra.mrb[0].mxu0 %v875
        %v987 = vpop.f32.mrb[0].mxu0
        %v988 = vadd.f32 %v795, %v987
        %v989 = vpop.f32.mrb[0].mxu0
        %v990 = vpop.f32.mrb[0].mxu0
        %v991 = vadd.f32 %v798, %v990
        %v992 = vpop.f32.mrb[0].mxu0
        %993 = vmatprep.mubr.bf16.mxu0 0
        %994 = vmatmul.mubr.bf16.gmra.mrb[0].mxu0 %v876
        %v995 = vpop.f32.mrb[0].mxu0
        %v996 = vadd.f32 %v803, %v995
        %v997 = vpop.f32.mrb[0].mxu0
        %v998 = vpop.f32.mrb[0].mxu0
        %v999 = vadd.f32 %v806, %v998
        %v1000 = vpop.f32.mrb[0].mxu0
        %1001 = vmatprep.mubr.bf16.mxu0 0
        %1002 = vmatmul.mubr.bf16.gmra.mrb[0].mxu0 %v877
        %v1003 = vpop.f32.mrb[0].mxu0
        %v1004 = vadd.f32 %v811, %v1003
        %v1005 = vpop.f32.mrb[0].mxu0
        %v1006 = vpop.f32.mrb[0].mxu0
        %v1007 = vadd.f32 %v814, %v1006
        %v1008 = vpop.f32.mrb[0].mxu0
        %1009 = vmatprep.mubr.bf16.mxu0 0
        %1010 = vmatmul.mubr.bf16.gmra.mrb[0].mxu0 %v878
        %v1011 = vpop.f32.mrb[0].mxu0
        %v1012 = vadd.f32 %v819, %v1011
        %v1013 = vpop.f32.mrb[0].mxu0
        %v1014 = vpop.f32.mrb[0].mxu0
        %v1015 = vadd.f32 %v822, %v1014
        %v1016 = vpop.f32.mrb[0].mxu0
        %1017 = vmatprep.mubr.bf16.mxu0 0
        %1018 = vmatmul.mubr.bf16.gmra.mrb[0].mxu0 %v879
        %v1019 = vpop.f32.mrb[0].mxu0
        %v1020 = vadd.f32 %v827, %v1019
        %v1021 = vpop.f32.mrb[0].mxu0
        %v1022 = vpop.f32.mrb[0].mxu0
        %v1023 = vadd.f32 %v830, %v1022
        %v1024 = vpop.f32.mrb[0].mxu0
        %1025 = vmatprep.mubr.bf16.mxu0 0
        %1026 = vmatmul.mubr.bf16.gmra.mrb[0].mxu0 %v880
        %v1027 = vpop.f32.mrb[0].mxu0
        %v1028 = vadd.f32 %v835, %v1027
        %v1029 = vpop.f32.mrb[0].mxu0
        %v1030 = vpop.f32.mrb[0].mxu0
        %v1031 = vadd.f32 %v838, %v1030
        %v1032 = vpop.f32.mrb[0].mxu0
        %1033 = vdwg.mxu0
        %v1034 = vld [vmem:[%s411] sm:$0xe]
        %v1035 = vld [vmem:[%s411 + $0xc] sm:$0xe]
        %v1036 = vld [vmem:[%s411 + $0x18] sm:$0xe]
        %v1037 = vld [vmem:[%s411 + $0x24] sm:$0xe]
        %v1038 = vld [vmem:[%s411 + $0x30] sm:$0xe]
        %v1039 = vld [vmem:[%s411 + $0x3c] sm:$0xe]
        %v1040 = vld [vmem:[%s411 + $0x48] sm:$0xe]
        %v1041 = vld [vmem:[%s411 + $0x54] sm:$0xe]
        %vm1058 = vcmask 1042432
        %vm1059 = vcmask 1046532
        %vm1060 = vmor %vm1058, %vm1059
        %v1061 = vrot.slane %v1034, 5
        %v1062 = vrot.slane %v1061, 4
        %v1063 = vrot.slane %v413, 5
        %v1064 = vsel %vm1060, %v1062, %v1063
        %v1065 = vrot.slane %v1063, 4
        %v1066 = vrot.slane %v444, 5
        %v1067 = vsel %vm1060, %v1065, %v1066
        %v1068 = vrot.slane %v1035, 5
        %v1069 = vrot.slane %v1068, 4
        %v1070 = vrot.slane %v415, 5
        %v1071 = vsel %vm1060, %v1069, %v1070
        %v1072 = vrot.slane %v1070, 4
        %v1073 = vrot.slane %v445, 5
        %v1074 = vsel %vm1060, %v1072, %v1073
        %v1075 = vrot.slane %v1036, 5
        %v1076 = vrot.slane %v1075, 4
        %v1077 = vrot.slane %v417, 5
        %v1078 = vsel %vm1060, %v1076, %v1077
        %v1079 = vrot.slane %v1077, 4
        %v1080 = vrot.slane %v446, 5
        %v1081 = vsel %vm1060, %v1079, %v1080
        %v1082 = vrot.slane %v1037, 5
        %v1083 = vrot.slane %v1082, 4
        %v1084 = vrot.slane %v419, 5
        %v1085 = vsel %vm1060, %v1083, %v1084
        %v1086 = vrot.slane %v1084, 4
        %v1087 = vrot.slane %v447, 5
        %v1088 = vsel %vm1060, %v1086, %v1087
        %v1089 = vrot.slane %v1038, 5
        %v1090 = vrot.slane %v1089, 4
        %v1091 = vrot.slane %v421, 5
        %v1092 = vsel %vm1060, %v1090, %v1091
        %v1093 = vrot.slane %v1091, 4
        %v1094 = vrot.slane %v448, 5
        %v1095 = vsel %vm1060, %v1093, %v1094
        %v1096 = vrot.slane %v1039, 5
        %v1097 = vrot.slane %v1096, 4
        %v1098 = vrot.slane %v423, 5
        %v1099 = vsel %vm1060, %v1097, %v1098
        %v1100 = vrot.slane %v1098, 4
        %v1101 = vrot.slane %v449, 5
        %v1102 = vsel %vm1060, %v1100, %v1101
        %v1103 = vrot.slane %v1040, 5
        %v1104 = vrot.slane %v1103, 4
        %v1105 = vrot.slane %v425, 5
        %v1106 = vsel %vm1060, %v1104, %v1105
        %v1107 = vrot.slane %v1105, 4
        %v1108 = vrot.slane %v450, 5
        %v1109 = vsel %vm1060, %v1107, %v1108
        %v1110 = vrot.slane %v1041, 5
        %v1111 = vrot.slane %v1110, 4
        %v1112 = vrot.slane %v427, 5
        %v1113 = vsel %vm1060, %v1111, %v1112
        %v1114 = vrot.slane %v1112, 4
        %v1115 = vrot.slane %v451, 5
        %v1116 = vsel %vm1060, %v1114, %v1115
        %s1117 = scalar_lea.vmem %s1, 128
        %v1118 = vld [vmem:[%s1117] sm:$0xf]
        %v1119 = vld [vmem:[%s1117 + $0x4] sm:$0xf]
        %v1120 = vld [vmem:[%s1117 + $0x8] sm:$0xf]
        %v1121 = vld [vmem:[%s1117 + $0xc] sm:$0xf]
        %v1122 = vld [vmem:[%s1117 + $0x10] sm:$0xf]
        %v1123 = vld [vmem:[%s1117 + $0x14] sm:$0xf]
        %v1124 = vld [vmem:[%s1117 + $0x18] sm:$0xf]
        %v1125 = vld [vmem:[%s1117 + $0x1c] sm:$0xf]
        %v1126 = vld [vmem:[%s1117 + $0x20] sm:$0xf]
        %v1127 = vld [vmem:[%s1117 + $0x24] sm:$0xf]
        %v1128 = vld [vmem:[%s1117 + $0x28] sm:$0xf]
        %v1129 = vld [vmem:[%s1117 + $0x2c] sm:$0xf]
        %v1130 = vld [vmem:[%s1117 + $0x30] sm:$0xf]
        %v1131 = vld [vmem:[%s1117 + $0x34] sm:$0xf]
        %v1132 = vld [vmem:[%s1117 + $0x38] sm:$0xf]
        %v1133 = vld [vmem:[%s1117 + $0x3c] sm:$0xf]
        %v1134 = vunpack.c.l.b16 %v1064
        %v1135 = vunpack.c.l.b16 %v1067
        %v1136 = vunpack.c.l.b16 %v1071
        %v1137 = vunpack.c.l.b16 %v1074
        %v1138 = vunpack.c.l.b16 %v1078
        %v1139 = vunpack.c.l.b16 %v1081
        %v1140 = vunpack.c.l.b16 %v1085
        %v1141 = vunpack.c.l.b16 %v1088
        %v1142 = vunpack.c.l.b16 %v1092
        %v1143 = vunpack.c.l.b16 %v1095
        %v1144 = vunpack.c.l.b16 %v1099
        %v1145 = vunpack.c.l.b16 %v1102
        %v1146 = vunpack.c.l.b16 %v1106
        %v1147 = vunpack.c.l.b16 %v1109
        %v1148 = vunpack.c.l.b16 %v1113
        %v1149 = vunpack.c.l.b16 %v1116
        %v1150 = vpack.c.b16 %v1135, %v1134
        %v1151 = vpack.c.b16 %v1137, %v1136
        %v1152 = vpack.c.b16 %v1139, %v1138
        %v1153 = vpack.c.b16 %v1141, %v1140
        %v1154 = vpack.c.b16 %v1143, %v1142
        %v1155 = vpack.c.b16 %v1145, %v1144
        %v1156 = vpack.c.b16 %v1147, %v1146
        %v1157 = vpack.c.b16 %v1149, %v1148
        %v1182 = vunpack.c.l.b16 %v1118
        %v1183 = vunpack.c.l.b16 %v1119
        %v1184 = vunpack.c.l.b16 %v1120
        %v1185 = vunpack.c.l.b16 %v1121
        %v1186 = vunpack.c.l.b16 %v1122
        %v1187 = vunpack.c.l.b16 %v1123
        %v1188 = vunpack.c.l.b16 %v1124
        %v1189 = vunpack.c.l.b16 %v1125
        %v1190 = vunpack.c.l.b16 %v1126
        %v1191 = vunpack.c.l.b16 %v1127
        %v1192 = vunpack.c.l.b16 %v1128
        %v1193 = vunpack.c.l.b16 %v1129
        %v1194 = vunpack.c.l.b16 %v1130
        %v1195 = vunpack.c.l.b16 %v1131
        %v1196 = vunpack.c.l.b16 %v1132
        %v1197 = vunpack.c.l.b16 %v1133
        %v1198 = vpack.c.b16 %v1183, %v1182
        %v1199 = vpack.c.b16 %v1185, %v1184
        %v1200 = vpack.c.b16 %v1187, %v1186
        %v1201 = vpack.c.b16 %v1189, %v1188
        %v1202 = vpack.c.b16 %v1191, %v1190
        %v1203 = vpack.c.b16 %v1193, %v1192
        %v1204 = vpack.c.b16 %v1195, %v1194
        %v1205 = vpack.c.b16 %v1197, %v1196
        %1214 = vmatprep.subr.bf16.mxu0 0
        %1215 = vmatpush1.bf16.msra.mxu0 %v1198
        %1216 = vmatprep.subr.bf16.mxu0 0
        %1217 = vmatpush1.bf16.msra.mxu0 %v1199
        %1218 = vmatprep.subr.bf16.mxu0 0
        %1219 = vmatpush1.bf16.msra.mxu0 %v1200
        %1220 = vmatprep.subr.bf16.mxu0 0
        %1221 = vmatpush1.bf16.msra.mxu0 %v1201
        %1222 = vmatprep.subr.bf16.mxu0 0
        %1223 = vmatpush1.bf16.msra.mxu0 %v1202
        %1224 = vmatprep.subr.bf16.mxu0 0
        %1225 = vmatpush1.bf16.msra.mxu0 %v1203
        %1226 = vmatprep.subr.bf16.mxu0 0
        %1227 = vmatpush1.bf16.msra.mxu0 %v1204
        %1228 = vmatprep.subr.bf16.mxu0 0
        %1229 = vmatpush1.bf16.msra.mxu0 %v1205
        %1230 = vmatprep.subr.bf16.mxu0 0
        %1231 = vmatpush1.bf16.msra.mxu0 0
        %1232 = vmatprep.subr.bf16.mxu0 0
        %1233 = vmatpush1.bf16.msra.mxu0 0
        %1234 = vmatprep.subr.bf16.mxu0 0
        %1235 = vmatpush1.bf16.msra.mxu0 0
        %1236 = vmatprep.subr.bf16.mxu0 0
        %1237 = vmatpush1.bf16.msra.mxu0 0
        %1238 = vmatprep.subr.bf16.mxu0 0
        %1239 = vmatpush1.bf16.msra.mxu0 0
        %1240 = vmatprep.subr.bf16.mxu0 0
        %1241 = vmatpush1.bf16.msra.mxu0 0
        %1242 = vmatprep.subr.bf16.mxu0 0
        %1243 = vmatpush1.bf16.msra.mxu0 0
        %1244 = vmatprep.subr.bf16.mxu0 0
        %1245 = vmatpush1.bf16.msra.mxu0 0
        %1246 = vmatprep.mubr.bf16.mxu0 0
        %1247 = vmatmul.mubr.bf16.gmra.mrb[0].mxu0 %v1150
        %v1248 = vpop.f32.mrb[0].mxu0
        %v1249 = vadd.f32 0.0, %v1248
        %v1250 = vpop.f32.mrb[0].mxu0
        %v1251 = vpop.f32.mrb[0].mxu0
        %v1252 = vadd.f32 0.0, %v1251
        %v1253 = vpop.f32.mrb[0].mxu0
        %1254 = vmatprep.mubr.bf16.mxu0 0
        %1255 = vmatmul.mubr.bf16.gmra.mrb[0].mxu0 %v1151
        %v1256 = vpop.f32.mrb[0].mxu0
        %v1257 = vadd.f32 0.0, %v1256
        %v1258 = vpop.f32.mrb[0].mxu0
        %v1259 = vpop.f32.mrb[0].mxu0
        %v1260 = vadd.f32 0.0, %v1259
        %v1261 = vpop.f32.mrb[0].mxu0
        %1262 = vmatprep.mubr.bf16.mxu0 0
        %1263 = vmatmul.mubr.bf16.gmra.mrb[0].mxu0 %v1152
        %v1264 = vpop.f32.mrb[0].mxu0
        %v1265 = vadd.f32 0.0, %v1264
        %v1266 = vpop.f32.mrb[0].mxu0
        %v1267 = vpop.f32.mrb[0].mxu0
        %v1268 = vadd.f32 0.0, %v1267
        %v1269 = vpop.f32.mrb[0].mxu0
        %1270 = vmatprep.mubr.bf16.mxu0 0
        %1271 = vmatmul.mubr.bf16.gmra.mrb[0].mxu0 %v1153
        %v1272 = vpop.f32.mrb[0].mxu0
        %v1273 = vadd.f32 0.0, %v1272
        %v1274 = vpop.f32.mrb[0].mxu0
        %v1275 = vpop.f32.mrb[0].mxu0
        %v1276 = vadd.f32 0.0, %v1275
        %v1277 = vpop.f32.mrb[0].mxu0
        %1278 = vmatprep.mubr.bf16.mxu0 0
        %1279 = vmatmul.mubr.bf16.gmra.mrb[0].mxu0 %v1154
        %v1280 = vpop.f32.mrb[0].mxu0
        %v1281 = vadd.f32 0.0, %v1280
        %v1282 = vpop.f32.mrb[0].mxu0
        %v1283 = vpop.f32.mrb[0].mxu0
        %v1284 = vadd.f32 0.0, %v1283
        %v1285 = vpop.f32.mrb[0].mxu0
        %1286 = vmatprep.mubr.bf16.mxu0 0
        %1287 = vmatmul.mubr.bf16.gmra.mrb[0].mxu0 %v1155
        %v1288 = vpop.f32.mrb[0].mxu0
        %v1289 = vadd.f32 0.0, %v1288
        %v1290 = vpop.f32.mrb[0].mxu0
        %v1291 = vpop.f32.mrb[0].mxu0
        %v1292 = vadd.f32 0.0, %v1291
        %v1293 = vpop.f32.mrb[0].mxu0
        %1294 = vmatprep.mubr.bf16.mxu0 0
        %1295 = vmatmul.mubr.bf16.gmra.mrb[0].mxu0 %v1156
        %v1296 = vpop.f32.mrb[0].mxu0
        %v1297 = vadd.f32 0.0, %v1296
        %v1298 = vpop.f32.mrb[0].mxu0
        %v1299 = vpop.f32.mrb[0].mxu0
        %v1300 = vadd.f32 0.0, %v1299
        %v1301 = vpop.f32.mrb[0].mxu0
        %1302 = vmatprep.mubr.bf16.mxu0 0
        %1303 = vmatmul.mubr.bf16.gmra.mrb[0].mxu0 %v1157
        %v1304 = vpop.f32.mrb[0].mxu0
        %v1305 = vadd.f32 0.0, %v1304
        %v1306 = vpop.f32.mrb[0].mxu0
        %v1307 = vpop.f32.mrb[0].mxu0
        %v1308 = vadd.f32 0.0, %v1307
        %v1309 = vpop.f32.mrb[0].mxu0
        %1310 = vdwg.mxu0
        %v1311 = vadd.f32 %v972, %v1249
        %v1312 = vadd.f32 %v975, %v1252
        %v1313 = vadd.f32 %v980, %v1257
        %v1314 = vadd.f32 %v983, %v1260
        %v1315 = vadd.f32 %v988, %v1265
        %v1316 = vadd.f32 %v991, %v1268
        %v1317 = vadd.f32 %v996, %v1273
        %v1318 = vadd.f32 %v999, %v1276
        %v1319 = vadd.f32 %v1004, %v1281
        %v1320 = vadd.f32 %v1007, %v1284
        %v1321 = vadd.f32 %v1012, %v1289
        %v1322 = vadd.f32 %v1015, %v1292
        %v1323 = vadd.f32 %v1020, %v1297
        %v1324 = vadd.f32 %v1023, %v1300
        %v1325 = vadd.f32 %v1028, %v1305
        %v1326 = vadd.f32 %v1031, %v1308
        %s1327 = sadd.s32 %s408, 1
        %s1328 = smul.u32 %s1327, 3
        %s1329 = smul.addr %s1328, 4
        %s1330 = scalar_lea.vmem %s273, %s1329
        %v1331 = vld [vmem:[%s1330] sm:$0xf]
        %v1332 = vld [vmem:[%s1330 + $0x4] sm:$0xf]
        %v1333 = vld [vmem:[%s1330 + $0xc] sm:$0xf]
        %v1334 = vld [vmem:[%s1330 + $0x10] sm:$0xf]
        %v1335 = vld [vmem:[%s1330 + $0x18] sm:$0xf]
        %v1336 = vld [vmem:[%s1330 + $0x1c] sm:$0xf]
        %v1337 = vld [vmem:[%s1330 + $0x24] sm:$0xf]
        %v1338 = vld [vmem:[%s1330 + $0x28] sm:$0xf]
        %v1339 = vld [vmem:[%s1330 + $0x30] sm:$0xf]
        %v1340 = vld [vmem:[%s1330 + $0x34] sm:$0xf]
        %v1341 = vld [vmem:[%s1330 + $0x3c] sm:$0xf]
        %v1342 = vld [vmem:[%s1330 + $0x40] sm:$0xf]
        %v1343 = vld [vmem:[%s1330 + $0x48] sm:$0xf]
        %v1344 = vld [vmem:[%s1330 + $0x4c] sm:$0xf]
        %v1345 = vld [vmem:[%s1330 + $0x54] sm:$0xf]
        %v1346 = vld [vmem:[%s1330 + $0x58] sm:$0xf]
        %s1347 = scalar_lea.vmem %s1, 192
        %v1348 = vld [vmem:[%s1347] sm:$0xf]
        %v1349 = vld [vmem:[%s1347 + $0x4] sm:$0xf]
        %v1350 = vld [vmem:[%s1347 + $0x8] sm:$0xf]
        %v1351 = vld [vmem:[%s1347 + $0xc] sm:$0xf]
        %v1352 = vld [vmem:[%s1347 + $0x10] sm:$0xf]
        %v1353 = vld [vmem:[%s1347 + $0x14] sm:$0xf]
        %v1354 = vld [vmem:[%s1347 + $0x18] sm:$0xf]
        %v1355 = vld [vmem:[%s1347 + $0x1c] sm:$0xf]
        %v1356 = vld [vmem:[%s1347 + $0x20] sm:$0xf]
        %v1357 = vld [vmem:[%s1347 + $0x24] sm:$0xf]
        %v1358 = vld [vmem:[%s1347 + $0x28] sm:$0xf]
        %v1359 = vld [vmem:[%s1347 + $0x2c] sm:$0xf]
        %v1360 = vld [vmem:[%s1347 + $0x30] sm:$0xf]
        %v1361 = vld [vmem:[%s1347 + $0x34] sm:$0xf]
        %v1362 = vld [vmem:[%s1347 + $0x38] sm:$0xf]
        %v1363 = vld [vmem:[%s1347 + $0x3c] sm:$0xf]
        %v1380 = vunpack.c.l.b16 %v1331
        %v1381 = vunpack.c.l.b16 %v1332
        %v1382 = vunpack.c.l.b16 %v1333
        %v1383 = vunpack.c.l.b16 %v1334
        %v1384 = vunpack.c.l.b16 %v1335
        %v1385 = vunpack.c.l.b16 %v1336
        %v1386 = vunpack.c.l.b16 %v1337
        %v1387 = vunpack.c.l.b16 %v1338
        %v1388 = vunpack.c.l.b16 %v1339
        %v1389 = vunpack.c.l.b16 %v1340
        %v1390 = vunpack.c.l.b16 %v1341
        %v1391 = vunpack.c.l.b16 %v1342
        %v1392 = vunpack.c.l.b16 %v1343
        %v1393 = vunpack.c.l.b16 %v1344
        %v1394 = vunpack.c.l.b16 %v1345
        %v1395 = vunpack.c.l.b16 %v1346
        %v1396 = vpack.c.b16 %v1381, %v1380
        %v1397 = vpack.c.b16 %v1383, %v1382
        %v1398 = vpack.c.b16 %v1385, %v1384
        %v1399 = vpack.c.b16 %v1387, %v1386
        %v1400 = vpack.c.b16 %v1389, %v1388
        %v1401 = vpack.c.b16 %v1391, %v1390
        %v1402 = vpack.c.b16 %v1393, %v1392
        %v1403 = vpack.c.b16 %v1395, %v1394
        %v1428 = vunpack.c.l.b16 %v1348
        %v1429 = vunpack.c.l.b16 %v1349
        %v1430 = vunpack.c.l.b16 %v1350
        %v1431 = vunpack.c.l.b16 %v1351
        %v1432 = vunpack.c.l.b16 %v1352
        %v1433 = vunpack.c.l.b16 %v1353
        %v1434 = vunpack.c.l.b16 %v1354
        %v1435 = vunpack.c.l.b16 %v1355
        %v1436 = vunpack.c.l.b16 %v1356
        %v1437 = vunpack.c.l.b16 %v1357
        %v1438 = vunpack.c.l.b16 %v1358
        %v1439 = vunpack.c.l.b16 %v1359
        %v1440 = vunpack.c.l.b16 %v1360
        %v1441 = vunpack.c.l.b16 %v1361
        %v1442 = vunpack.c.l.b16 %v1362
        %v1443 = vunpack.c.l.b16 %v1363
        %v1444 = vpack.c.b16 %v1429, %v1428
        %v1445 = vpack.c.b16 %v1431, %v1430
        %v1446 = vpack.c.b16 %v1433, %v1432
        %v1447 = vpack.c.b16 %v1435, %v1434
        %v1448 = vpack.c.b16 %v1437, %v1436
        %v1449 = vpack.c.b16 %v1439, %v1438
        %v1450 = vpack.c.b16 %v1441, %v1440
        %v1451 = vpack.c.b16 %v1443, %v1442
        %1460 = vmatprep.subr.bf16.mxu0 0
        %1461 = vmatpush1.bf16.msra.mxu0 %v1444
        %1462 = vmatprep.subr.bf16.mxu0 0
        %1463 = vmatpush1.bf16.msra.mxu0 %v1445
        %1464 = vmatprep.subr.bf16.mxu0 0
        %1465 = vmatpush1.bf16.msra.mxu0 %v1446
        %1466 = vmatprep.subr.bf16.mxu0 0
        %1467 = vmatpush1.bf16.msra.mxu0 %v1447
        %1468 = vmatprep.subr.bf16.mxu0 0
        %1469 = vmatpush1.bf16.msra.mxu0 %v1448
        %1470 = vmatprep.subr.bf16.mxu0 0
        %1471 = vmatpush1.bf16.msra.mxu0 %v1449
        %1472 = vmatprep.subr.bf16.mxu0 0
        %1473 = vmatpush1.bf16.msra.mxu0 %v1450
        %1474 = vmatprep.subr.bf16.mxu0 0
        %1475 = vmatpush1.bf16.msra.mxu0 %v1451
        %1476 = vmatprep.subr.bf16.mxu0 0
        %1477 = vmatpush1.bf16.msra.mxu0 0
        %1478 = vmatprep.subr.bf16.mxu0 0
        %1479 = vmatpush1.bf16.msra.mxu0 0
        %1480 = vmatprep.subr.bf16.mxu0 0
        %1481 = vmatpush1.bf16.msra.mxu0 0
        %1482 = vmatprep.subr.bf16.mxu0 0
        %1483 = vmatpush1.bf16.msra.mxu0 0
        %1484 = vmatprep.subr.bf16.mxu0 0
        %1485 = vmatpush1.bf16.msra.mxu0 0
        %1486 = vmatprep.subr.bf16.mxu0 0
        %1487 = vmatpush1.bf16.msra.mxu0 0
        %1488 = vmatprep.subr.bf16.mxu0 0
        %1489 = vmatpush1.bf16.msra.mxu0 0
        %1490 = vmatprep.subr.bf16.mxu0 0
        %1491 = vmatpush1.bf16.msra.mxu0 0
        %1492 = vmatprep.mubr.bf16.mxu0 0
        %1493 = vmatmul.mubr.bf16.gmra.mrb[0].mxu0 %v1396
        %v1494 = vpop.f32.mrb[0].mxu0
        %v1495 = vadd.f32 0.0, %v1494
        %v1496 = vpop.f32.mrb[0].mxu0
        %v1497 = vpop.f32.mrb[0].mxu0
        %v1498 = vadd.f32 0.0, %v1497
        %v1499 = vpop.f32.mrb[0].mxu0
        %1500 = vmatprep.mubr.bf16.mxu0 0
        %1501 = vmatmul.mubr.bf16.gmra.mrb[0].mxu0 %v1397
        %v1502 = vpop.f32.mrb[0].mxu0
        %v1503 = vadd.f32 0.0, %v1502
        %v1504 = vpop.f32.mrb[0].mxu0
        %v1505 = vpop.f32.mrb[0].mxu0
        %v1506 = vadd.f32 0.0, %v1505
        %v1507 = vpop.f32.mrb[0].mxu0
        %1508 = vmatprep.mubr.bf16.mxu0 0
        %1509 = vmatmul.mubr.bf16.gmra.mrb[0].mxu0 %v1398
        %v1510 = vpop.f32.mrb[0].mxu0
        %v1511 = vadd.f32 0.0, %v1510
        %v1512 = vpop.f32.mrb[0].mxu0
        %v1513 = vpop.f32.mrb[0].mxu0
        %v1514 = vadd.f32 0.0, %v1513
        %v1515 = vpop.f32.mrb[0].mxu0
        %1516 = vmatprep.mubr.bf16.mxu0 0
        %1517 = vmatmul.mubr.bf16.gmra.mrb[0].mxu0 %v1399
        %v1518 = vpop.f32.mrb[0].mxu0
        %v1519 = vadd.f32 0.0, %v1518
        %v1520 = vpop.f32.mrb[0].mxu0
        %v1521 = vpop.f32.mrb[0].mxu0
        %v1522 = vadd.f32 0.0, %v1521
        %v1523 = vpop.f32.mrb[0].mxu0
        %1524 = vmatprep.mubr.bf16.mxu0 0
        %1525 = vmatmul.mubr.bf16.gmra.mrb[0].mxu0 %v1400
        %v1526 = vpop.f32.mrb[0].mxu0
        %v1527 = vadd.f32 0.0, %v1526
        %v1528 = vpop.f32.mrb[0].mxu0
        %v1529 = vpop.f32.mrb[0].mxu0
        %v1530 = vadd.f32 0.0, %v1529
        %v1531 = vpop.f32.mrb[0].mxu0
        %1532 = vmatprep.mubr.bf16.mxu0 0
        %1533 = vmatmul.mubr.bf16.gmra.mrb[0].mxu0 %v1401
        %v1534 = vpop.f32.mrb[0].mxu0
        %v1535 = vadd.f32 0.0, %v1534
        %v1536 = vpop.f32.mrb[0].mxu0
        %v1537 = vpop.f32.mrb[0].mxu0
        %v1538 = vadd.f32 0.0, %v1537
        %v1539 = vpop.f32.mrb[0].mxu0
        %1540 = vmatprep.mubr.bf16.mxu0 0
        %1541 = vmatmul.mubr.bf16.gmra.mrb[0].mxu0 %v1402
        %v1542 = vpop.f32.mrb[0].mxu0
        %v1543 = vadd.f32 0.0, %v1542
        %v1544 = vpop.f32.mrb[0].mxu0
        %v1545 = vpop.f32.mrb[0].mxu0
        %v1546 = vadd.f32 0.0, %v1545
        %v1547 = vpop.f32.mrb[0].mxu0
        %1548 = vmatprep.mubr.bf16.mxu0 0
        %1549 = vmatmul.mubr.bf16.gmra.mrb[0].mxu0 %v1403
        %v1550 = vpop.f32.mrb[0].mxu0
        %v1551 = vadd.f32 0.0, %v1550
        %v1552 = vpop.f32.mrb[0].mxu0
        %v1553 = vpop.f32.mrb[0].mxu0
        %v1554 = vadd.f32 0.0, %v1553
        %v1555 = vpop.f32.mrb[0].mxu0
        %1556 = vdwg.mxu0
        %v1557 = vadd.f32 %v1311, %v1495
        %v1558 = vadd.f32 %v1312, %v1498
        %v1559 = vadd.f32 %v1313, %v1503
        %v1560 = vadd.f32 %v1314, %v1506
        %v1561 = vadd.f32 %v1315, %v1511
        %v1562 = vadd.f32 %v1316, %v1514
        %v1563 = vadd.f32 %v1317, %v1519
        %v1564 = vadd.f32 %v1318, %v1522
        %v1565 = vadd.f32 %v1319, %v1527
        %v1566 = vadd.f32 %v1320, %v1530
        %v1567 = vadd.f32 %v1321, %v1535
        %v1568 = vadd.f32 %v1322, %v1538
        %v1569 = vadd.f32 %v1323, %v1543
        %v1570 = vadd.f32 %v1324, %v1546
        %v1571 = vadd.f32 %v1325, %v1551
        %v1572 = vadd.f32 %v1326, %v1554
        %v1573 = vld [vmem:[%s1330] sm:$0xf]
        %v1574 = vld [vmem:[%s1330 + $0x4] sm:$0xf]
        %v1575 = vld [vmem:[%s1330 + $0x8] sm:$0x1]
        %v1576 = vld [vmem:[%s1330 + $0xc] sm:$0xf]
        %v1577 = vld [vmem:[%s1330 + $0x10] sm:$0xf]
        %v1578 = vld [vmem:[%s1330 + $0x14] sm:$0x1]
        %v1579 = vld [vmem:[%s1330 + $0x18] sm:$0xf]
        %v1580 = vld [vmem:[%s1330 + $0x1c] sm:$0xf]
        %v1581 = vld [vmem:[%s1330 + $0x20] sm:$0x1]
        %v1582 = vld [vmem:[%s1330 + $0x24] sm:$0xf]
        %v1583 = vld [vmem:[%s1330 + $0x28] sm:$0xf]
        %v1584 = vld [vmem:[%s1330 + $0x2c] sm:$0x1]
        %v1585 = vld [vmem:[%s1330 + $0x30] sm:$0xf]
        %v1586 = vld [vmem:[%s1330 + $0x34] sm:$0xf]
        %v1587 = vld [vmem:[%s1330 + $0x38] sm:$0x1]
        %v1588 = vld [vmem:[%s1330 + $0x3c] sm:$0xf]
        %v1589 = vld [vmem:[%s1330 + $0x40] sm:$0xf]
        %v1590 = vld [vmem:[%s1330 + $0x44] sm:$0x1]
        %v1591 = vld [vmem:[%s1330 + $0x48] sm:$0xf]
        %v1592 = vld [vmem:[%s1330 + $0x4c] sm:$0xf]
        %v1593 = vld [vmem:[%s1330 + $0x50] sm:$0x1]
        %v1594 = vld [vmem:[%s1330 + $0x54] sm:$0xf]
        %v1595 = vld [vmem:[%s1330 + $0x58] sm:$0xf]
        %v1596 = vld [vmem:[%s1330 + $0x5c] sm:$0x1]
        %v1598 = vshrl.u32 %v1573, 16
        %v1600 = vrot.slane %v1598, 4
        %v1601 = vshll.u32 %v1573, 16
        %v1603 = vrot.slane %v1601, 5
        %v1604 = vor.u32 %v1600, %v1603
        %v1605 = vrot.slane %v1604, 4
        %v1607 = vshll.u32 %v1574, 16
        %v1609 = vrot.slane %v1607, 5
        %v1610 = vsel %vm454, %v1605, %v1609
        %v1611 = vshrl.u32 %v1574, 16
        %v1613 = vrot.slane %v1611, 4
        %v1614 = vor.u32 %v1613, %v1609
        %v1615 = vrot.slane %v1614, 4
        %v1617 = vshll.u32 %v1575, 16
        %v1619 = vrot.slane %v1617, 5
        %v1620 = vsel %vm454, %v1615, %v1619
        %v1622 = vshrl.u32 %v1576, 16
        %v1624 = vrot.slane %v1622, 4
        %v1625 = vshll.u32 %v1576, 16
        %v1627 = vrot.slane %v1625, 5
        %v1628 = vor.u32 %v1624, %v1627
        %v1629 = vrot.slane %v1628, 4
        %v1631 = vshll.u32 %v1577, 16
        %v1633 = vrot.slane %v1631, 5
        %v1634 = vsel %vm454, %v1629, %v1633
        %v1635 = vshrl.u32 %v1577, 16
        %v1637 = vrot.slane %v1635, 4
        %v1638 = vor.u32 %v1637, %v1633
        %v1639 = vrot.slane %v1638, 4
        %v1641 = vshll.u32 %v1578, 16
        %v1643 = vrot.slane %v1641, 5
        %v1644 = vsel %vm454, %v1639, %v1643
        %v1646 = vshrl.u32 %v1579, 16
        %v1648 = vrot.slane %v1646, 4
        %v1649 = vshll.u32 %v1579, 16
        %v1651 = vrot.slane %v1649, 5
        %v1652 = vor.u32 %v1648, %v1651
        %v1653 = vrot.slane %v1652, 4
        %v1655 = vshll.u32 %v1580, 16
        %v1657 = vrot.slane %v1655, 5
        %v1658 = vsel %vm454, %v1653, %v1657
        %v1659 = vshrl.u32 %v1580, 16
        %v1661 = vrot.slane %v1659, 4
        %v1662 = vor.u32 %v1661, %v1657
        %v1663 = vrot.slane %v1662, 4
        %v1665 = vshll.u32 %v1581, 16
        %v1667 = vrot.slane %v1665, 5
        %v1668 = vsel %vm454, %v1663, %v1667
        %v1670 = vshrl.u32 %v1582, 16
        %v1672 = vrot.slane %v1670, 4
        %v1673 = vshll.u32 %v1582, 16
        %v1675 = vrot.slane %v1673, 5
        %v1676 = vor.u32 %v1672, %v1675
        %v1677 = vrot.slane %v1676, 4
        %v1679 = vshll.u32 %v1583, 16
        %v1681 = vrot.slane %v1679, 5
        %v1682 = vsel %vm454, %v1677, %v1681
        %v1683 = vshrl.u32 %v1583, 16
        %v1685 = vrot.slane %v1683, 4
        %v1686 = vor.u32 %v1685, %v1681
        %v1687 = vrot.slane %v1686, 4
        %v1689 = vshll.u32 %v1584, 16
        %v1691 = vrot.slane %v1689, 5
        %v1692 = vsel %vm454, %v1687, %v1691
        %v1694 = vshrl.u32 %v1585, 16
        %v1696 = vrot.slane %v1694, 4
        %v1697 = vshll.u32 %v1585, 16
        %v1699 = vrot.slane %v1697, 5
        %v1700 = vor.u32 %v1696, %v1699
        %v1701 = vrot.slane %v1700, 4
        %v1703 = vshll.u32 %v1586, 16
        %v1705 = vrot.slane %v1703, 5
        %v1706 = vsel %vm454, %v1701, %v1705
        %v1707 = vshrl.u32 %v1586, 16
        %v1709 = vrot.slane %v1707, 4
        %v1710 = vor.u32 %v1709, %v1705
        %v1711 = vrot.slane %v1710, 4
        %v1713 = vshll.u32 %v1587, 16
        %v1715 = vrot.slane %v1713, 5
        %v1716 = vsel %vm454, %v1711, %v1715
        %v1718 = vshrl.u32 %v1588, 16
        %v1720 = vrot.slane %v1718, 4
        %v1721 = vshll.u32 %v1588, 16
        %v1723 = vrot.slane %v1721, 5
        %v1724 = vor.u32 %v1720, %v1723
        %v1725 = vrot.slane %v1724, 4
        %v1727 = vshll.u32 %v1589, 16
        %v1729 = vrot.slane %v1727, 5
        %v1730 = vsel %vm454, %v1725, %v1729
        %v1731 = vshrl.u32 %v1589, 16
        %v1733 = vrot.slane %v1731, 4
        %v1734 = vor.u32 %v1733, %v1729
        %v1735 = vrot.slane %v1734, 4
        %v1737 = vshll.u32 %v1590, 16
        %v1739 = vrot.slane %v1737, 5
        %v1740 = vsel %vm454, %v1735, %v1739
        %v1742 = vshrl.u32 %v1591, 16
        %v1744 = vrot.slane %v1742, 4
        %v1745 = vshll.u32 %v1591, 16
        %v1747 = vrot.slane %v1745, 5
        %v1748 = vor.u32 %v1744, %v1747
        %v1749 = vrot.slane %v1748, 4
        %v1751 = vshll.u32 %v1592, 16
        %v1753 = vrot.slane %v1751, 5
        %v1754 = vsel %vm454, %v1749, %v1753
        %v1755 = vshrl.u32 %v1592, 16
        %v1757 = vrot.slane %v1755, 4
        %v1758 = vor.u32 %v1757, %v1753
        %v1759 = vrot.slane %v1758, 4
        %v1761 = vshll.u32 %v1593, 16
        %v1763 = vrot.slane %v1761, 5
        %v1764 = vsel %vm454, %v1759, %v1763
        %v1766 = vshrl.u32 %v1594, 16
        %v1768 = vrot.slane %v1766, 4
        %v1769 = vshll.u32 %v1594, 16
        %v1771 = vrot.slane %v1769, 5
        %v1772 = vor.u32 %v1768, %v1771
        %v1773 = vrot.slane %v1772, 4
        %v1775 = vshll.u32 %v1595, 16
        %v1777 = vrot.slane %v1775, 5
        %v1778 = vsel %vm454, %v1773, %v1777
        %v1779 = vshrl.u32 %v1595, 16
        %v1781 = vrot.slane %v1779, 4
        %v1782 = vor.u32 %v1781, %v1777
        %v1783 = vrot.slane %v1782, 4
        %v1785 = vshll.u32 %v1596, 16
        %v1787 = vrot.slane %v1785, 5
        %v1788 = vsel %vm454, %v1783, %v1787
        %s1789 = scalar_lea.vmem %s1, 256
        %v1790 = vld [vmem:[%s1789] sm:$0xf]
        %v1791 = vld [vmem:[%s1789 + $0x4] sm:$0xf]
        %v1792 = vld [vmem:[%s1789 + $0x8] sm:$0xf]
        %v1793 = vld [vmem:[%s1789 + $0xc] sm:$0xf]
        %v1794 = vld [vmem:[%s1789 + $0x10] sm:$0xf]
        %v1795 = vld [vmem:[%s1789 + $0x14] sm:$0xf]
        %v1796 = vld [vmem:[%s1789 + $0x18] sm:$0xf]
        %v1797 = vld [vmem:[%s1789 + $0x1c] sm:$0xf]
        %v1798 = vld [vmem:[%s1789 + $0x20] sm:$0xf]
        %v1799 = vld [vmem:[%s1789 + $0x24] sm:$0xf]
        %v1800 = vld [vmem:[%s1789 + $0x28] sm:$0xf]
        %v1801 = vld [vmem:[%s1789 + $0x2c] sm:$0xf]
        %v1802 = vld [vmem:[%s1789 + $0x30] sm:$0xf]
        %v1803 = vld [vmem:[%s1789 + $0x34] sm:$0xf]
        %v1804 = vld [vmem:[%s1789 + $0x38] sm:$0xf]
        %v1805 = vld [vmem:[%s1789 + $0x3c] sm:$0xf]
        %v1806 = vunpack.c.l.b16 %v1610
        %v1807 = vunpack.c.l.b16 %v1620
        %v1808 = vunpack.c.l.b16 %v1634
        %v1809 = vunpack.c.l.b16 %v1644
        %v1810 = vunpack.c.l.b16 %v1658
        %v1811 = vunpack.c.l.b16 %v1668
        %v1812 = vunpack.c.l.b16 %v1682
        %v1813 = vunpack.c.l.b16 %v1692
        %v1814 = vunpack.c.l.b16 %v1706
        %v1815 = vunpack.c.l.b16 %v1716
        %v1816 = vunpack.c.l.b16 %v1730
        %v1817 = vunpack.c.l.b16 %v1740
        %v1818 = vunpack.c.l.b16 %v1754
        %v1819 = vunpack.c.l.b16 %v1764
        %v1820 = vunpack.c.l.b16 %v1778
        %v1821 = vunpack.c.l.b16 %v1788
        %v1822 = vpack.c.b16 %v1807, %v1806
        %v1823 = vpack.c.b16 %v1809, %v1808
        %v1824 = vpack.c.b16 %v1811, %v1810
        %v1825 = vpack.c.b16 %v1813, %v1812
        %v1826 = vpack.c.b16 %v1815, %v1814
        %v1827 = vpack.c.b16 %v1817, %v1816
        %v1828 = vpack.c.b16 %v1819, %v1818
        %v1829 = vpack.c.b16 %v1821, %v1820
        %v1854 = vunpack.c.l.b16 %v1790
        %v1855 = vunpack.c.l.b16 %v1791
        %v1856 = vunpack.c.l.b16 %v1792
        %v1857 = vunpack.c.l.b16 %v1793
        %v1858 = vunpack.c.l.b16 %v1794
        %v1859 = vunpack.c.l.b16 %v1795
        %v1860 = vunpack.c.l.b16 %v1796
        %v1861 = vunpack.c.l.b16 %v1797
        %v1862 = vunpack.c.l.b16 %v1798
        %v1863 = vunpack.c.l.b16 %v1799
        %v1864 = vunpack.c.l.b16 %v1800
        %v1865 = vunpack.c.l.b16 %v1801
        %v1866 = vunpack.c.l.b16 %v1802
        %v1867 = vunpack.c.l.b16 %v1803
        %v1868 = vunpack.c.l.b16 %v1804
        %v1869 = vunpack.c.l.b16 %v1805
        %v1870 = vpack.c.b16 %v1855, %v1854
        %v1871 = vpack.c.b16 %v1857, %v1856
        %v1872 = vpack.c.b16 %v1859, %v1858
        %v1873 = vpack.c.b16 %v1861, %v1860
        %v1874 = vpack.c.b16 %v1863, %v1862
        %v1875 = vpack.c.b16 %v1865, %v1864
        %v1876 = vpack.c.b16 %v1867, %v1866
        %v1877 = vpack.c.b16 %v1869, %v1868
        %1886 = vmatprep.subr.bf16.mxu0 0
        %1887 = vmatpush1.bf16.msra.mxu0 %v1870
        %1888 = vmatprep.subr.bf16.mxu0 0
        %1889 = vmatpush1.bf16.msra.mxu0 %v1871
        %1890 = vmatprep.subr.bf16.mxu0 0
        %1891 = vmatpush1.bf16.msra.mxu0 %v1872
        %1892 = vmatprep.subr.bf16.mxu0 0
        %1893 = vmatpush1.bf16.msra.mxu0 %v1873
        %1894 = vmatprep.subr.bf16.mxu0 0
        %1895 = vmatpush1.bf16.msra.mxu0 %v1874
        %1896 = vmatprep.subr.bf16.mxu0 0
        %1897 = vmatpush1.bf16.msra.mxu0 %v1875
        %1898 = vmatprep.subr.bf16.mxu0 0
        %1899 = vmatpush1.bf16.msra.mxu0 %v1876
        %1900 = vmatprep.subr.bf16.mxu0 0
        %1901 = vmatpush1.bf16.msra.mxu0 %v1877
        %1902 = vmatprep.subr.bf16.mxu0 0
        %1903 = vmatpush1.bf16.msra.mxu0 0
        %1904 = vmatprep.subr.bf16.mxu0 0
        %1905 = vmatpush1.bf16.msra.mxu0 0
        %1906 = vmatprep.subr.bf16.mxu0 0
        %1907 = vmatpush1.bf16.msra.mxu0 0
        %1908 = vmatprep.subr.bf16.mxu0 0
        %1909 = vmatpush1.bf16.msra.mxu0 0
        %1910 = vmatprep.subr.bf16.mxu0 0
        %1911 = vmatpush1.bf16.msra.mxu0 0
        %1912 = vmatprep.subr.bf16.mxu0 0
        %1913 = vmatpush1.bf16.msra.mxu0 0
        %1914 = vmatprep.subr.bf16.mxu0 0
        %1915 = vmatpush1.bf16.msra.mxu0 0
        %1916 = vmatprep.subr.bf16.mxu0 0
        %1917 = vmatpush1.bf16.msra.mxu0 0
        %1918 = vmatprep.mubr.bf16.mxu0 0
        %1919 = vmatmul.mubr.bf16.gmra.mrb[0].mxu0 %v1822
        %v1920 = vpop.f32.mrb[0].mxu0
        %v1921 = vadd.f32 0.0, %v1920
        %v1922 = vpop.f32.mrb[0].mxu0
        %v1923 = vpop.f32.mrb[0].mxu0
        %v1924 = vadd.f32 0.0, %v1923
        %v1925 = vpop.f32.mrb[0].mxu0
        %1926 = vmatprep.mubr.bf16.mxu0 0
        %1927 = vmatmul.mubr.bf16.gmra.mrb[0].mxu0 %v1823
        %v1928 = vpop.f32.mrb[0].mxu0
        %v1929 = vadd.f32 0.0, %v1928
        %v1930 = vpop.f32.mrb[0].mxu0
        %v1931 = vpop.f32.mrb[0].mxu0
        %v1932 = vadd.f32 0.0, %v1931
        %v1933 = vpop.f32.mrb[0].mxu0
        %1934 = vmatprep.mubr.bf16.mxu0 0
        %1935 = vmatmul.mubr.bf16.gmra.mrb[0].mxu0 %v1824
        %v1936 = vpop.f32.mrb[0].mxu0
        %v1937 = vadd.f32 0.0, %v1936
        %v1938 = vpop.f32.mrb[0].mxu0
        %v1939 = vpop.f32.mrb[0].mxu0
        %v1940 = vadd.f32 0.0, %v1939
        %v1941 = vpop.f32.mrb[0].mxu0
        %1942 = vmatprep.mubr.bf16.mxu0 0
        %1943 = vmatmul.mubr.bf16.gmra.mrb[0].mxu0 %v1825
        %v1944 = vpop.f32.mrb[0].mxu0
        %v1945 = vadd.f32 0.0, %v1944
        %v1946 = vpop.f32.mrb[0].mxu0
        %v1947 = vpop.f32.mrb[0].mxu0
        %v1948 = vadd.f32 0.0, %v1947
        %v1949 = vpop.f32.mrb[0].mxu0
        %1950 = vmatprep.mubr.bf16.mxu0 0
        %1951 = vmatmul.mubr.bf16.gmra.mrb[0].mxu0 %v1826
        %v1952 = vpop.f32.mrb[0].mxu0
        %v1953 = vadd.f32 0.0, %v1952
        %v1954 = vpop.f32.mrb[0].mxu0
        %v1955 = vpop.f32.mrb[0].mxu0
        %v1956 = vadd.f32 0.0, %v1955
        %v1957 = vpop.f32.mrb[0].mxu0
        %1958 = vmatprep.mubr.bf16.mxu0 0
        %1959 = vmatmul.mubr.bf16.gmra.mrb[0].mxu0 %v1827
        %v1960 = vpop.f32.mrb[0].mxu0
        %v1961 = vadd.f32 0.0, %v1960
        %v1962 = vpop.f32.mrb[0].mxu0
        %v1963 = vpop.f32.mrb[0].mxu0
        %v1964 = vadd.f32 0.0, %v1963
        %v1965 = vpop.f32.mrb[0].mxu0
        %1966 = vmatprep.mubr.bf16.mxu0 0
        %1967 = vmatmul.mubr.bf16.gmra.mrb[0].mxu0 %v1828
        %v1968 = vpop.f32.mrb[0].mxu0
        %v1969 = vadd.f32 0.0, %v1968
        %v1970 = vpop.f32.mrb[0].mxu0
        %v1971 = vpop.f32.mrb[0].mxu0
        %v1972 = vadd.f32 0.0, %v1971
        %v1973 = vpop.f32.mrb[0].mxu0
        %1974 = vmatprep.mubr.bf16.mxu0 0
        %1975 = vmatmul.mubr.bf16.gmra.mrb[0].mxu0 %v1829
        %v1976 = vpop.f32.mrb[0].mxu0
        %v1977 = vadd.f32 0.0, %v1976
        %v1978 = vpop.f32.mrb[0].mxu0
        %v1979 = vpop.f32.mrb[0].mxu0
        %v1980 = vadd.f32 0.0, %v1979
        %v1981 = vpop.f32.mrb[0].mxu0
        %1982 = vdwg.mxu0
        %v1983 = vadd.f32 %v1557, %v1921
        %v1984 = vadd.f32 %v1558, %v1924
        %v1985 = vadd.f32 %v1559, %v1929
        %v1986 = vadd.f32 %v1560, %v1932
        %v1987 = vadd.f32 %v1561, %v1937
        %v1988 = vadd.f32 %v1562, %v1940
        %v1989 = vadd.f32 %v1563, %v1945
        %v1990 = vadd.f32 %v1564, %v1948
        %v1991 = vadd.f32 %v1565, %v1953
        %v1992 = vadd.f32 %v1566, %v1956
        %v1993 = vadd.f32 %v1567, %v1961
        %v1994 = vadd.f32 %v1568, %v1964
        %v1995 = vadd.f32 %v1569, %v1969
        %v1996 = vadd.f32 %v1570, %v1972
        %v1997 = vadd.f32 %v1571, %v1977
        %v1998 = vadd.f32 %v1572, %v1980
        %v1999 = vld [vmem:[%s1330] sm:$0xe]
        %v2000 = vld [vmem:[%s1330 + $0xc] sm:$0xe]
        %v2001 = vld [vmem:[%s1330 + $0x18] sm:$0xe]
        %v2002 = vld [vmem:[%s1330 + $0x24] sm:$0xe]
        %v2003 = vld [vmem:[%s1330 + $0x30] sm:$0xe]
        %v2004 = vld [vmem:[%s1330 + $0x3c] sm:$0xe]
        %v2005 = vld [vmem:[%s1330 + $0x48] sm:$0xe]
        %v2006 = vld [vmem:[%s1330 + $0x54] sm:$0xe]
        %v2031 = vrot.slane %v1999, 5
        %v2032 = vrot.slane %v2031, 4
        %v2033 = vrot.slane %v1574, 5
        %v2034 = vsel %vm1060, %v2032, %v2033
        %v2035 = vrot.slane %v2033, 4
        %v2036 = vrot.slane %v1575, 5
        %v2037 = vsel %vm1060, %v2035, %v2036
        %v2038 = vrot.slane %v2000, 5
        %v2039 = vrot.slane %v2038, 4
        %v2040 = vrot.slane %v1577, 5
        %v2041 = vsel %vm1060, %v2039, %v2040
        %v2042 = vrot.slane %v2040, 4
        %v2043 = vrot.slane %v1578, 5
        %v2044 = vsel %vm1060, %v2042, %v2043
        %v2045 = vrot.slane %v2001, 5
        %v2046 = vrot.slane %v2045, 4
        %v2047 = vrot.slane %v1580, 5
        %v2048 = vsel %vm1060, %v2046, %v2047
        %v2049 = vrot.slane %v2047, 4
        %v2050 = vrot.slane %v1581, 5
        %v2051 = vsel %vm1060, %v2049, %v2050
        %v2052 = vrot.slane %v2002, 5
        %v2053 = vrot.slane %v2052, 4
        %v2054 = vrot.slane %v1583, 5
        %v2055 = vsel %vm1060, %v2053, %v2054
        %v2056 = vrot.slane %v2054, 4
        %v2057 = vrot.slane %v1584, 5
        %v2058 = vsel %vm1060, %v2056, %v2057
        %v2059 = vrot.slane %v2003, 5
        %v2060 = vrot.slane %v2059, 4
        %v2061 = vrot.slane %v1586, 5
        %v2062 = vsel %vm1060, %v2060, %v2061
        %v2063 = vrot.slane %v2061, 4
        %v2064 = vrot.slane %v1587, 5
        %v2065 = vsel %vm1060, %v2063, %v2064
        %v2066 = vrot.slane %v2004, 5
        %v2067 = vrot.slane %v2066, 4
        %v2068 = vrot.slane %v1589, 5
        %v2069 = vsel %vm1060, %v2067, %v2068
        %v2070 = vrot.slane %v2068, 4
        %v2071 = vrot.slane %v1590, 5
        %v2072 = vsel %vm1060, %v2070, %v2071
        %v2073 = vrot.slane %v2005, 5
        %v2074 = vrot.slane %v2073, 4
        %v2075 = vrot.slane %v1592, 5
        %v2076 = vsel %vm1060, %v2074, %v2075
        %v2077 = vrot.slane %v2075, 4
        %v2078 = vrot.slane %v1593, 5
        %v2079 = vsel %vm1060, %v2077, %v2078
        %v2080 = vrot.slane %v2006, 5
        %v2081 = vrot.slane %v2080, 4
        %v2082 = vrot.slane %v1595, 5
        %v2083 = vsel %vm1060, %v2081, %v2082
        %v2084 = vrot.slane %v2082, 4
        %v2085 = vrot.slane %v1596, 5
        %v2086 = vsel %vm1060, %v2084, %v2085
        %s2087 = scalar_lea.vmem %s1, 320
        %v2088 = vld [vmem:[%s2087] sm:$0xf]
        %v2089 = vld [vmem:[%s2087 + $0x4] sm:$0xf]
        %v2090 = vld [vmem:[%s2087 + $0x8] sm:$0xf]
        %v2091 = vld [vmem:[%s2087 + $0xc] sm:$0xf]
        %v2092 = vld [vmem:[%s2087 + $0x10] sm:$0xf]
        %v2093 = vld [vmem:[%s2087 + $0x14] sm:$0xf]
        %v2094 = vld [vmem:[%s2087 + $0x18] sm:$0xf]
        %v2095 = vld [vmem:[%s2087 + $0x1c] sm:$0xf]
        %v2096 = vld [vmem:[%s2087 + $0x20] sm:$0xf]
        %v2097 = vld [vmem:[%s2087 + $0x24] sm:$0xf]
        %v2098 = vld [vmem:[%s2087 + $0x28] sm:$0xf]
        %v2099 = vld [vmem:[%s2087 + $0x2c] sm:$0xf]
        %v2100 = vld [vmem:[%s2087 + $0x30] sm:$0xf]
        %v2101 = vld [vmem:[%s2087 + $0x34] sm:$0xf]
        %v2102 = vld [vmem:[%s2087 + $0x38] sm:$0xf]
        %v2103 = vld [vmem:[%s2087 + $0x3c] sm:$0xf]
        %v2104 = vunpack.c.l.b16 %v2034
        %v2105 = vunpack.c.l.b16 %v2037
        %v2106 = vunpack.c.l.b16 %v2041
        %v2107 = vunpack.c.l.b16 %v2044
        %v2108 = vunpack.c.l.b16 %v2048
        %v2109 = vunpack.c.l.b16 %v2051
        %v2110 = vunpack.c.l.b16 %v2055
        %v2111 = vunpack.c.l.b16 %v2058
        %v2112 = vunpack.c.l.b16 %v2062
        %v2113 = vunpack.c.l.b16 %v2065
        %v2114 = vunpack.c.l.b16 %v2069
        %v2115 = vunpack.c.l.b16 %v2072
        %v2116 = vunpack.c.l.b16 %v2076
        %v2117 = vunpack.c.l.b16 %v2079
        %v2118 = vunpack.c.l.b16 %v2083
        %v2119 = vunpack.c.l.b16 %v2086
        %v2120 = vpack.c.b16 %v2105, %v2104
        %v2121 = vpack.c.b16 %v2107, %v2106
        %v2122 = vpack.c.b16 %v2109, %v2108
        %v2123 = vpack.c.b16 %v2111, %v2110
        %v2124 = vpack.c.b16 %v2113, %v2112
        %v2125 = vpack.c.b16 %v2115, %v2114
        %v2126 = vpack.c.b16 %v2117, %v2116
        %v2127 = vpack.c.b16 %v2119, %v2118
        %v2152 = vunpack.c.l.b16 %v2088
        %v2153 = vunpack.c.l.b16 %v2089
        %v2154 = vunpack.c.l.b16 %v2090
        %v2155 = vunpack.c.l.b16 %v2091
        %v2156 = vunpack.c.l.b16 %v2092
        %v2157 = vunpack.c.l.b16 %v2093
        %v2158 = vunpack.c.l.b16 %v2094
        %v2159 = vunpack.c.l.b16 %v2095
        %v2160 = vunpack.c.l.b16 %v2096
        %v2161 = vunpack.c.l.b16 %v2097
        %v2162 = vunpack.c.l.b16 %v2098
        %v2163 = vunpack.c.l.b16 %v2099
        %v2164 = vunpack.c.l.b16 %v2100
        %v2165 = vunpack.c.l.b16 %v2101
        %v2166 = vunpack.c.l.b16 %v2102
        %v2167 = vunpack.c.l.b16 %v2103
        %v2168 = vpack.c.b16 %v2153, %v2152
        %v2169 = vpack.c.b16 %v2155, %v2154
        %v2170 = vpack.c.b16 %v2157, %v2156
        %v2171 = vpack.c.b16 %v2159, %v2158
        %v2172 = vpack.c.b16 %v2161, %v2160
        %v2173 = vpack.c.b16 %v2163, %v2162
        %v2174 = vpack.c.b16 %v2165, %v2164
        %v2175 = vpack.c.b16 %v2167, %v2166
        %2184 = vmatprep.subr.bf16.mxu0 0
        %2185 = vmatpush1.bf16.msra.mxu0 %v2168
        %2186 = vmatprep.subr.bf16.mxu0 0
        %2187 = vmatpush1.bf16.msra.mxu0 %v2169
        %2188 = vmatprep.subr.bf16.mxu0 0
        %2189 = vmatpush1.bf16.msra.mxu0 %v2170
        %2190 = vmatprep.subr.bf16.mxu0 0
        %2191 = vmatpush1.bf16.msra.mxu0 %v2171
        %2192 = vmatprep.subr.bf16.mxu0 0
        %2193 = vmatpush1.bf16.msra.mxu0 %v2172
        %2194 = vmatprep.subr.bf16.mxu0 0
        %2195 = vmatpush1.bf16.msra.mxu0 %v2173
        %2196 = vmatprep.subr.bf16.mxu0 0
        %2197 = vmatpush1.bf16.msra.mxu0 %v2174
        %2198 = vmatprep.subr.bf16.mxu0 0
        %2199 = vmatpush1.bf16.msra.mxu0 %v2175
        %2200 = vmatprep.subr.bf16.mxu0 0
        %2201 = vmatpush1.bf16.msra.mxu0 0
        %2202 = vmatprep.subr.bf16.mxu0 0
        %2203 = vmatpush1.bf16.msra.mxu0 0
        %2204 = vmatprep.subr.bf16.mxu0 0
        %2205 = vmatpush1.bf16.msra.mxu0 0
        %2206 = vmatprep.subr.bf16.mxu0 0
        %2207 = vmatpush1.bf16.msra.mxu0 0
        %2208 = vmatprep.subr.bf16.mxu0 0
        %2209 = vmatpush1.bf16.msra.mxu0 0
        %2210 = vmatprep.subr.bf16.mxu0 0
        %2211 = vmatpush1.bf16.msra.mxu0 0
        %2212 = vmatprep.subr.bf16.mxu0 0
        %2213 = vmatpush1.bf16.msra.mxu0 0
        %2214 = vmatprep.subr.bf16.mxu0 0
        %2215 = vmatpush1.bf16.msra.mxu0 0
        %2216 = vmatprep.mubr.bf16.mxu0 0
        %2217 = vmatmul.mubr.bf16.gmra.mrb[0].mxu0 %v2120
        %v2218 = vpop.f32.mrb[0].mxu0
        %v2219 = vadd.f32 0.0, %v2218
        %v2220 = vpop.f32.mrb[0].mxu0
        %v2221 = vpop.f32.mrb[0].mxu0
        %v2222 = vadd.f32 0.0, %v2221
        %v2223 = vpop.f32.mrb[0].mxu0
        %2224 = vmatprep.mubr.bf16.mxu0 0
        %2225 = vmatmul.mubr.bf16.gmra.mrb[0].mxu0 %v2121
        %v2226 = vpop.f32.mrb[0].mxu0
        %v2227 = vadd.f32 0.0, %v2226
        %v2228 = vpop.f32.mrb[0].mxu0
        %v2229 = vpop.f32.mrb[0].mxu0
        %v2230 = vadd.f32 0.0, %v2229
        %v2231 = vpop.f32.mrb[0].mxu0
        %2232 = vmatprep.mubr.bf16.mxu0 0
        %2233 = vmatmul.mubr.bf16.gmra.mrb[0].mxu0 %v2122
        %v2234 = vpop.f32.mrb[0].mxu0
        %v2235 = vadd.f32 0.0, %v2234
        %v2236 = vpop.f32.mrb[0].mxu0
        %v2237 = vpop.f32.mrb[0].mxu0
        %v2238 = vadd.f32 0.0, %v2237
        %v2239 = vpop.f32.mrb[0].mxu0
        %2240 = vmatprep.mubr.bf16.mxu0 0
        %2241 = vmatmul.mubr.bf16.gmra.mrb[0].mxu0 %v2123
        %v2242 = vpop.f32.mrb[0].mxu0
        %v2243 = vadd.f32 0.0, %v2242
        %v2244 = vpop.f32.mrb[0].mxu0
        %v2245 = vpop.f32.mrb[0].mxu0
        %v2246 = vadd.f32 0.0, %v2245
        %v2247 = vpop.f32.mrb[0].mxu0
        %2248 = vmatprep.mubr.bf16.mxu0 0
        %2249 = vmatmul.mubr.bf16.gmra.mrb[0].mxu0 %v2124
        %v2250 = vpop.f32.mrb[0].mxu0
        %v2251 = vadd.f32 0.0, %v2250
        %v2252 = vpop.f32.mrb[0].mxu0
        %v2253 = vpop.f32.mrb[0].mxu0
        %v2254 = vadd.f32 0.0, %v2253
        %v2255 = vpop.f32.mrb[0].mxu0
        %2256 = vmatprep.mubr.bf16.mxu0 0
        %2257 = vmatmul.mubr.bf16.gmra.mrb[0].mxu0 %v2125
        %v2258 = vpop.f32.mrb[0].mxu0
        %v2259 = vadd.f32 0.0, %v2258
        %v2260 = vpop.f32.mrb[0].mxu0
        %v2261 = vpop.f32.mrb[0].mxu0
        %v2262 = vadd.f32 0.0, %v2261
        %v2263 = vpop.f32.mrb[0].mxu0
        %2264 = vmatprep.mubr.bf16.mxu0 0
        %2265 = vmatmul.mubr.bf16.gmra.mrb[0].mxu0 %v2126
        %v2266 = vpop.f32.mrb[0].mxu0
        %v2267 = vadd.f32 0.0, %v2266
        %v2268 = vpop.f32.mrb[0].mxu0
        %v2269 = vpop.f32.mrb[0].mxu0
        %v2270 = vadd.f32 0.0, %v2269
        %v2271 = vpop.f32.mrb[0].mxu0
        %2272 = vmatprep.mubr.bf16.mxu0 0
        %2273 = vmatmul.mubr.bf16.gmra.mrb[0].mxu0 %v2127
        %v2274 = vpop.f32.mrb[0].mxu0
        %v2275 = vadd.f32 0.0, %v2274
        %v2276 = vpop.f32.mrb[0].mxu0
        %v2277 = vpop.f32.mrb[0].mxu0
        %v2278 = vadd.f32 0.0, %v2277
        %v2279 = vpop.f32.mrb[0].mxu0
        %2280 = vdwg.mxu0
        %v2281 = vadd.f32 %v1983, %v2219
        %v2282 = vadd.f32 %v1984, %v2222
        %v2283 = vadd.f32 %v1985, %v2227
        %v2284 = vadd.f32 %v1986, %v2230
        %v2285 = vadd.f32 %v1987, %v2235
        %v2286 = vadd.f32 %v1988, %v2238
        %v2287 = vadd.f32 %v1989, %v2243
        %v2288 = vadd.f32 %v1990, %v2246
        %v2289 = vadd.f32 %v1991, %v2251
        %v2290 = vadd.f32 %v1992, %v2254
        %v2291 = vadd.f32 %v1993, %v2259
        %v2292 = vadd.f32 %v1994, %v2262
        %v2293 = vadd.f32 %v1995, %v2267
        %v2294 = vadd.f32 %v1996, %v2270
        %v2295 = vadd.f32 %v1997, %v2275
        %v2296 = vadd.f32 %v1998, %v2278
        %s2297 = sadd.s32 %s408, 2
        %s2298 = smul.u32 %s2297, 3
        %s2299 = smul.addr %s2298, 4
        %s2300 = scalar_lea.vmem %s273, %s2299
        %v2301 = vld [vmem:[%s2300] sm:$0xf]
        %v2302 = vld [vmem:[%s2300 + $0x4] sm:$0xf]
        %v2303 = vld [vmem:[%s2300 + $0xc] sm:$0xf]
        %v2304 = vld [vmem:[%s2300 + $0x10] sm:$0xf]
        %v2305 = vld [vmem:[%s2300 + $0x18] sm:$0xf]
        %v2306 = vld [vmem:[%s2300 + $0x1c] sm:$0xf]
        %v2307 = vld [vmem:[%s2300 + $0x24] sm:$0xf]
        %v2308 = vld [vmem:[%s2300 + $0x28] sm:$0xf]
        %v2309 = vld [vmem:[%s2300 + $0x30] sm:$0xf]
        %v2310 = vld [vmem:[%s2300 + $0x34] sm:$0xf]
        %v2311 = vld [vmem:[%s2300 + $0x3c] sm:$0xf]
        %v2312 = vld [vmem:[%s2300 + $0x40] sm:$0xf]
        %v2313 = vld [vmem:[%s2300 + $0x48] sm:$0xf]
        %v2314 = vld [vmem:[%s2300 + $0x4c] sm:$0xf]
        %v2315 = vld [vmem:[%s2300 + $0x54] sm:$0xf]
        %v2316 = vld [vmem:[%s2300 + $0x58] sm:$0xf]
        %s2317 = scalar_lea.vmem %s1, 384
        %v2318 = vld [vmem:[%s2317] sm:$0xf]
        %v2319 = vld [vmem:[%s2317 + $0x4] sm:$0xf]
        %v2320 = vld [vmem:[%s2317 + $0x8] sm:$0xf]
        %v2321 = vld [vmem:[%s2317 + $0xc] sm:$0xf]
        %v2322 = vld [vmem:[%s2317 + $0x10] sm:$0xf]
        %v2323 = vld [vmem:[%s2317 + $0x14] sm:$0xf]
        %v2324 = vld [vmem:[%s2317 + $0x18] sm:$0xf]
        %v2325 = vld [vmem:[%s2317 + $0x1c] sm:$0xf]
        %v2326 = vld [vmem:[%s2317 + $0x20] sm:$0xf]
        %v2327 = vld [vmem:[%s2317 + $0x24] sm:$0xf]
        %v2328 = vld [vmem:[%s2317 + $0x28] sm:$0xf]
        %v2329 = vld [vmem:[%s2317 + $0x2c] sm:$0xf]
        %v2330 = vld [vmem:[%s2317 + $0x30] sm:$0xf]
        %v2331 = vld [vmem:[%s2317 + $0x34] sm:$0xf]
        %v2332 = vld [vmem:[%s2317 + $0x38] sm:$0xf]
        %v2333 = vld [vmem:[%s2317 + $0x3c] sm:$0xf]
        %v2350 = vunpack.c.l.b16 %v2301
        %v2351 = vunpack.c.l.b16 %v2302
        %v2352 = vunpack.c.l.b16 %v2303
        %v2353 = vunpack.c.l.b16 %v2304
        %v2354 = vunpack.c.l.b16 %v2305
        %v2355 = vunpack.c.l.b16 %v2306
        %v2356 = vunpack.c.l.b16 %v2307
        %v2357 = vunpack.c.l.b16 %v2308
        %v2358 = vunpack.c.l.b16 %v2309
        %v2359 = vunpack.c.l.b16 %v2310
        %v2360 = vunpack.c.l.b16 %v2311
        %v2361 = vunpack.c.l.b16 %v2312
        %v2362 = vunpack.c.l.b16 %v2313
        %v2363 = vunpack.c.l.b16 %v2314
        %v2364 = vunpack.c.l.b16 %v2315
        %v2365 = vunpack.c.l.b16 %v2316
        %v2366 = vpack.c.b16 %v2351, %v2350
        %v2367 = vpack.c.b16 %v2353, %v2352
        %v2368 = vpack.c.b16 %v2355, %v2354
        %v2369 = vpack.c.b16 %v2357, %v2356
        %v2370 = vpack.c.b16 %v2359, %v2358
        %v2371 = vpack.c.b16 %v2361, %v2360
        %v2372 = vpack.c.b16 %v2363, %v2362
        %v2373 = vpack.c.b16 %v2365, %v2364
        %v2398 = vunpack.c.l.b16 %v2318
        %v2399 = vunpack.c.l.b16 %v2319
        %v2400 = vunpack.c.l.b16 %v2320
        %v2401 = vunpack.c.l.b16 %v2321
        %v2402 = vunpack.c.l.b16 %v2322
        %v2403 = vunpack.c.l.b16 %v2323
        %v2404 = vunpack.c.l.b16 %v2324
        %v2405 = vunpack.c.l.b16 %v2325
        %v2406 = vunpack.c.l.b16 %v2326
        %v2407 = vunpack.c.l.b16 %v2327
        %v2408 = vunpack.c.l.b16 %v2328
        %v2409 = vunpack.c.l.b16 %v2329
        %v2410 = vunpack.c.l.b16 %v2330
        %v2411 = vunpack.c.l.b16 %v2331
        %v2412 = vunpack.c.l.b16 %v2332
        %v2413 = vunpack.c.l.b16 %v2333
        %v2414 = vpack.c.b16 %v2399, %v2398
        %v2415 = vpack.c.b16 %v2401, %v2400
        %v2416 = vpack.c.b16 %v2403, %v2402
        %v2417 = vpack.c.b16 %v2405, %v2404
        %v2418 = vpack.c.b16 %v2407, %v2406
        %v2419 = vpack.c.b16 %v2409, %v2408
        %v2420 = vpack.c.b16 %v2411, %v2410
        %v2421 = vpack.c.b16 %v2413, %v2412
        %2430 = vmatprep.subr.bf16.mxu0 0
        %2431 = vmatpush1.bf16.msra.mxu0 %v2414
        %2432 = vmatprep.subr.bf16.mxu0 0
        %2433 = vmatpush1.bf16.msra.mxu0 %v2415
        %2434 = vmatprep.subr.bf16.mxu0 0
        %2435 = vmatpush1.bf16.msra.mxu0 %v2416
        %2436 = vmatprep.subr.bf16.mxu0 0
        %2437 = vmatpush1.bf16.msra.mxu0 %v2417
        %2438 = vmatprep.subr.bf16.mxu0 0
        %2439 = vmatpush1.bf16.msra.mxu0 %v2418
        %2440 = vmatprep.subr.bf16.mxu0 0
        %2441 = vmatpush1.bf16.msra.mxu0 %v2419
        %2442 = vmatprep.subr.bf16.mxu0 0
        %2443 = vmatpush1.bf16.msra.mxu0 %v2420
        %2444 = vmatprep.subr.bf16.mxu0 0
        %2445 = vmatpush1.bf16.msra.mxu0 %v2421
        %2446 = vmatprep.subr.bf16.mxu0 0
        %2447 = vmatpush1.bf16.msra.mxu0 0
        %2448 = vmatprep.subr.bf16.mxu0 0
        %2449 = vmatpush1.bf16.msra.mxu0 0
        %2450 = vmatprep.subr.bf16.mxu0 0
        %2451 = vmatpush1.bf16.msra.mxu0 0
        %2452 = vmatprep.subr.bf16.mxu0 0
        %2453 = vmatpush1.bf16.msra.mxu0 0
        %2454 = vmatprep.subr.bf16.mxu0 0
        %2455 = vmatpush1.bf16.msra.mxu0 0
        %2456 = vmatprep.subr.bf16.mxu0 0
        %2457 = vmatpush1.bf16.msra.mxu0 0
        %2458 = vmatprep.subr.bf16.mxu0 0
        %2459 = vmatpush1.bf16.msra.mxu0 0
        %2460 = vmatprep.subr.bf16.mxu0 0
        %2461 = vmatpush1.bf16.msra.mxu0 0
        %2462 = vmatprep.mubr.bf16.mxu0 0
        %2463 = vmatmul.mubr.bf16.gmra.mrb[0].mxu0 %v2366
        %v2464 = vpop.f32.mrb[0].mxu0
        %v2465 = vadd.f32 0.0, %v2464
        %v2466 = vpop.f32.mrb[0].mxu0
        %v2467 = vpop.f32.mrb[0].mxu0
        %v2468 = vadd.f32 0.0, %v2467
        %v2469 = vpop.f32.mrb[0].mxu0
        %2470 = vmatprep.mubr.bf16.mxu0 0
        %2471 = vmatmul.mubr.bf16.gmra.mrb[0].mxu0 %v2367
        %v2472 = vpop.f32.mrb[0].mxu0
        %v2473 = vadd.f32 0.0, %v2472
        %v2474 = vpop.f32.mrb[0].mxu0
        %v2475 = vpop.f32.mrb[0].mxu0
        %v2476 = vadd.f32 0.0, %v2475
        %v2477 = vpop.f32.mrb[0].mxu0
        %2478 = vmatprep.mubr.bf16.mxu0 0
        %2479 = vmatmul.mubr.bf16.gmra.mrb[0].mxu0 %v2368
        %v2480 = vpop.f32.mrb[0].mxu0
        %v2481 = vadd.f32 0.0, %v2480
        %v2482 = vpop.f32.mrb[0].mxu0
        %v2483 = vpop.f32.mrb[0].mxu0
        %v2484 = vadd.f32 0.0, %v2483
        %v2485 = vpop.f32.mrb[0].mxu0
        %2486 = vmatprep.mubr.bf16.mxu0 0
        %2487 = vmatmul.mubr.bf16.gmra.mrb[0].mxu0 %v2369
        %v2488 = vpop.f32.mrb[0].mxu0
        %v2489 = vadd.f32 0.0, %v2488
        %v2490 = vpop.f32.mrb[0].mxu0
        %v2491 = vpop.f32.mrb[0].mxu0
        %v2492 = vadd.f32 0.0, %v2491
        %v2493 = vpop.f32.mrb[0].mxu0
        %2494 = vmatprep.mubr.bf16.mxu0 0
        %2495 = vmatmul.mubr.bf16.gmra.mrb[0].mxu0 %v2370
        %v2496 = vpop.f32.mrb[0].mxu0
        %v2497 = vadd.f32 0.0, %v2496
        %v2498 = vpop.f32.mrb[0].mxu0
        %v2499 = vpop.f32.mrb[0].mxu0
        %v2500 = vadd.f32 0.0, %v2499
        %v2501 = vpop.f32.mrb[0].mxu0
        %2502 = vmatprep.mubr.bf16.mxu0 0
        %2503 = vmatmul.mubr.bf16.gmra.mrb[0].mxu0 %v2371
        %v2504 = vpop.f32.mrb[0].mxu0
        %v2505 = vadd.f32 0.0, %v2504
        %v2506 = vpop.f32.mrb[0].mxu0
        %v2507 = vpop.f32.mrb[0].mxu0
        %v2508 = vadd.f32 0.0, %v2507
        %v2509 = vpop.f32.mrb[0].mxu0
        %2510 = vmatprep.mubr.bf16.mxu0 0
        %2511 = vmatmul.mubr.bf16.gmra.mrb[0].mxu0 %v2372
        %v2512 = vpop.f32.mrb[0].mxu0
        %v2513 = vadd.f32 0.0, %v2512
        %v2514 = vpop.f32.mrb[0].mxu0
        %v2515 = vpop.f32.mrb[0].mxu0
        %v2516 = vadd.f32 0.0, %v2515
        %v2517 = vpop.f32.mrb[0].mxu0
        %2518 = vmatprep.mubr.bf16.mxu0 0
        %2519 = vmatmul.mubr.bf16.gmra.mrb[0].mxu0 %v2373
        %v2520 = vpop.f32.mrb[0].mxu0
        %v2521 = vadd.f32 0.0, %v2520
        %v2522 = vpop.f32.mrb[0].mxu0
        %v2523 = vpop.f32.mrb[0].mxu0
        %v2524 = vadd.f32 0.0, %v2523
        %v2525 = vpop.f32.mrb[0].mxu0
        %2526 = vdwg.mxu0
        %v2527 = vadd.f32 %v2281, %v2465
        %v2528 = vadd.f32 %v2282, %v2468
        %v2529 = vadd.f32 %v2283, %v2473
        %v2530 = vadd.f32 %v2284, %v2476
        %v2531 = vadd.f32 %v2285, %v2481
        %v2532 = vadd.f32 %v2286, %v2484
        %v2533 = vadd.f32 %v2287, %v2489
        %v2534 = vadd.f32 %v2288, %v2492
        %v2535 = vadd.f32 %v2289, %v2497
        %v2536 = vadd.f32 %v2290, %v2500
        %v2537 = vadd.f32 %v2291, %v2505
        %v2538 = vadd.f32 %v2292, %v2508
        %v2539 = vadd.f32 %v2293, %v2513
        %v2540 = vadd.f32 %v2294, %v2516
        %v2541 = vadd.f32 %v2295, %v2521
        %v2542 = vadd.f32 %v2296, %v2524
        %v2543 = vld [vmem:[%s2300] sm:$0xf]
        %v2544 = vld [vmem:[%s2300 + $0x4] sm:$0xf]
        %v2545 = vld [vmem:[%s2300 + $0x8] sm:$0x1]
        %v2546 = vld [vmem:[%s2300 + $0xc] sm:$0xf]
        %v2547 = vld [vmem:[%s2300 + $0x10] sm:$0xf]
        %v2548 = vld [vmem:[%s2300 + $0x14] sm:$0x1]
        %v2549 = vld [vmem:[%s2300 + $0x18] sm:$0xf]
        %v2550 = vld [vmem:[%s2300 + $0x1c] sm:$0xf]
        %v2551 = vld [vmem:[%s2300 + $0x20] sm:$0x1]
        %v2552 = vld [vmem:[%s2300 + $0x24] sm:$0xf]
        %v2553 = vld [vmem:[%s2300 + $0x28] sm:$0xf]
        %v2554 = vld [vmem:[%s2300 + $0x2c] sm:$0x1]
        %v2555 = vld [vmem:[%s2300 + $0x30] sm:$0xf]
        %v2556 = vld [vmem:[%s2300 + $0x34] sm:$0xf]
        %v2557 = vld [vmem:[%s2300 + $0x38] sm:$0x1]
        %v2558 = vld [vmem:[%s2300 + $0x3c] sm:$0xf]
        %v2559 = vld [vmem:[%s2300 + $0x40] sm:$0xf]
        %v2560 = vld [vmem:[%s2300 + $0x44] sm:$0x1]
        %v2561 = vld [vmem:[%s2300 + $0x48] sm:$0xf]
        %v2562 = vld [vmem:[%s2300 + $0x4c] sm:$0xf]
        %v2563 = vld [vmem:[%s2300 + $0x50] sm:$0x1]
        %v2564 = vld [vmem:[%s2300 + $0x54] sm:$0xf]
        %v2565 = vld [vmem:[%s2300 + $0x58] sm:$0xf]
        %v2566 = vld [vmem:[%s2300 + $0x5c] sm:$0x1]
        %v2568 = vshrl.u32 %v2543, 16
        %v2570 = vrot.slane %v2568, 4
        %v2571 = vshll.u32 %v2543, 16
        %v2573 = vrot.slane %v2571, 5
        %v2574 = vor.u32 %v2570, %v2573
        %v2575 = vrot.slane %v2574, 4
        %v2577 = vshll.u32 %v2544, 16
        %v2579 = vrot.slane %v2577, 5
        %v2580 = vsel %vm454, %v2575, %v2579
        %v2581 = vshrl.u32 %v2544, 16
        %v2583 = vrot.slane %v2581, 4
        %v2584 = vor.u32 %v2583, %v2579
        %v2585 = vrot.slane %v2584, 4
        %v2587 = vshll.u32 %v2545, 16
        %v2589 = vrot.slane %v2587, 5
        %v2590 = vsel %vm454, %v2585, %v2589
        %v2592 = vshrl.u32 %v2546, 16
        %v2594 = vrot.slane %v2592, 4
        %v2595 = vshll.u32 %v2546, 16
        %v2597 = vrot.slane %v2595, 5
        %v2598 = vor.u32 %v2594, %v2597
        %v2599 = vrot.slane %v2598, 4
        %v2601 = vshll.u32 %v2547, 16
        %v2603 = vrot.slane %v2601, 5
        %v2604 = vsel %vm454, %v2599, %v2603
        %v2605 = vshrl.u32 %v2547, 16
        %v2607 = vrot.slane %v2605, 4
        %v2608 = vor.u32 %v2607, %v2603
        %v2609 = vrot.slane %v2608, 4
        %v2611 = vshll.u32 %v2548, 16
        %v2613 = vrot.slane %v2611, 5
        %v2614 = vsel %vm454, %v2609, %v2613
        %v2616 = vshrl.u32 %v2549, 16
        %v2618 = vrot.slane %v2616, 4
        %v2619 = vshll.u32 %v2549, 16
        %v2621 = vrot.slane %v2619, 5
        %v2622 = vor.u32 %v2618, %v2621
        %v2623 = vrot.slane %v2622, 4
        %v2625 = vshll.u32 %v2550, 16
        %v2627 = vrot.slane %v2625, 5
        %v2628 = vsel %vm454, %v2623, %v2627
        %v2629 = vshrl.u32 %v2550, 16
        %v2631 = vrot.slane %v2629, 4
        %v2632 = vor.u32 %v2631, %v2627
        %v2633 = vrot.slane %v2632, 4
        %v2635 = vshll.u32 %v2551, 16
        %v2637 = vrot.slane %v2635, 5
        %v2638 = vsel %vm454, %v2633, %v2637
        %v2640 = vshrl.u32 %v2552, 16
        %v2642 = vrot.slane %v2640, 4
        %v2643 = vshll.u32 %v2552, 16
        %v2645 = vrot.slane %v2643, 5
        %v2646 = vor.u32 %v2642, %v2645
        %v2647 = vrot.slane %v2646, 4
        %v2649 = vshll.u32 %v2553, 16
        %v2651 = vrot.slane %v2649, 5
        %v2652 = vsel %vm454, %v2647, %v2651
        %v2653 = vshrl.u32 %v2553, 16
        %v2655 = vrot.slane %v2653, 4
        %v2656 = vor.u32 %v2655, %v2651
        %v2657 = vrot.slane %v2656, 4
        %v2659 = vshll.u32 %v2554, 16
        %v2661 = vrot.slane %v2659, 5
        %v2662 = vsel %vm454, %v2657, %v2661
        %v2664 = vshrl.u32 %v2555, 16
        %v2666 = vrot.slane %v2664, 4
        %v2667 = vshll.u32 %v2555, 16
        %v2669 = vrot.slane %v2667, 5
        %v2670 = vor.u32 %v2666, %v2669
        %v2671 = vrot.slane %v2670, 4
        %v2673 = vshll.u32 %v2556, 16
        %v2675 = vrot.slane %v2673, 5
        %v2676 = vsel %vm454, %v2671, %v2675
        %v2677 = vshrl.u32 %v2556, 16
        %v2679 = vrot.slane %v2677, 4
        %v2680 = vor.u32 %v2679, %v2675
        %v2681 = vrot.slane %v2680, 4
        %v2683 = vshll.u32 %v2557, 16
        %v2685 = vrot.slane %v2683, 5
        %v2686 = vsel %vm454, %v2681, %v2685
        %v2688 = vshrl.u32 %v2558, 16
        %v2690 = vrot.slane %v2688, 4
        %v2691 = vshll.u32 %v2558, 16
        %v2693 = vrot.slane %v2691, 5
        %v2694 = vor.u32 %v2690, %v2693
        %v2695 = vrot.slane %v2694, 4
        %v2697 = vshll.u32 %v2559, 16
        %v2699 = vrot.slane %v2697, 5
        %v2700 = vsel %vm454, %v2695, %v2699
        %v2701 = vshrl.u32 %v2559, 16
        %v2703 = vrot.slane %v2701, 4
        %v2704 = vor.u32 %v2703, %v2699
        %v2705 = vrot.slane %v2704, 4
        %v2707 = vshll.u32 %v2560, 16
        %v2709 = vrot.slane %v2707, 5
        %v2710 = vsel %vm454, %v2705, %v2709
        %v2712 = vshrl.u32 %v2561, 16
        %v2714 = vrot.slane %v2712, 4
        %v2715 = vshll.u32 %v2561, 16
        %v2717 = vrot.slane %v2715, 5
        %v2718 = vor.u32 %v2714, %v2717
        %v2719 = vrot.slane %v2718, 4
        %v2721 = vshll.u32 %v2562, 16
        %v2723 = vrot.slane %v2721, 5
        %v2724 = vsel %vm454, %v2719, %v2723
        %v2725 = vshrl.u32 %v2562, 16
        %v2727 = vrot.slane %v2725, 4
        %v2728 = vor.u32 %v2727, %v2723
        %v2729 = vrot.slane %v2728, 4
        %v2731 = vshll.u32 %v2563, 16
        %v2733 = vrot.slane %v2731, 5
        %v2734 = vsel %vm454, %v2729, %v2733
        %v2736 = vshrl.u32 %v2564, 16
        %v2738 = vrot.slane %v2736, 4
        %v2739 = vshll.u32 %v2564, 16
        %v2741 = vrot.slane %v2739, 5
        %v2742 = vor.u32 %v2738, %v2741
        %v2743 = vrot.slane %v2742, 4
        %v2745 = vshll.u32 %v2565, 16
        %v2747 = vrot.slane %v2745, 5
        %v2748 = vsel %vm454, %v2743, %v2747
        %v2749 = vshrl.u32 %v2565, 16
        %v2751 = vrot.slane %v2749, 4
        %v2752 = vor.u32 %v2751, %v2747
        %v2753 = vrot.slane %v2752, 4
        %v2755 = vshll.u32 %v2566, 16
        %v2757 = vrot.slane %v2755, 5
        %v2758 = vsel %vm454, %v2753, %v2757
        %s2759 = scalar_lea.vmem %s1, 448
        %v2760 = vld [vmem:[%s2759] sm:$0xf]
        %v2761 = vld [vmem:[%s2759 + $0x4] sm:$0xf]
        %v2762 = vld [vmem:[%s2759 + $0x8] sm:$0xf]
        %v2763 = vld [vmem:[%s2759 + $0xc] sm:$0xf]
        %v2764 = vld [vmem:[%s2759 + $0x10] sm:$0xf]
        %v2765 = vld [vmem:[%s2759 + $0x14] sm:$0xf]
        %v2766 = vld [vmem:[%s2759 + $0x18] sm:$0xf]
        %v2767 = vld [vmem:[%s2759 + $0x1c] sm:$0xf]
        %v2768 = vld [vmem:[%s2759 + $0x20] sm:$0xf]
        %v2769 = vld [vmem:[%s2759 + $0x24] sm:$0xf]
        %v2770 = vld [vmem:[%s2759 + $0x28] sm:$0xf]
        %v2771 = vld [vmem:[%s2759 + $0x2c] sm:$0xf]
        %v2772 = vld [vmem:[%s2759 + $0x30] sm:$0xf]
        %v2773 = vld [vmem:[%s2759 + $0x34] sm:$0xf]
        %v2774 = vld [vmem:[%s2759 + $0x38] sm:$0xf]
        %v2775 = vld [vmem:[%s2759 + $0x3c] sm:$0xf]
        %v2776 = vunpack.c.l.b16 %v2580
        %v2777 = vunpack.c.l.b16 %v2590
        %v2778 = vunpack.c.l.b16 %v2604
        %v2779 = vunpack.c.l.b16 %v2614
        %v2780 = vunpack.c.l.b16 %v2628
        %v2781 = vunpack.c.l.b16 %v2638
        %v2782 = vunpack.c.l.b16 %v2652
        %v2783 = vunpack.c.l.b16 %v2662
        %v2784 = vunpack.c.l.b16 %v2676
        %v2785 = vunpack.c.l.b16 %v2686
        %v2786 = vunpack.c.l.b16 %v2700
        %v2787 = vunpack.c.l.b16 %v2710
        %v2788 = vunpack.c.l.b16 %v2724
        %v2789 = vunpack.c.l.b16 %v2734
        %v2790 = vunpack.c.l.b16 %v2748
        %v2791 = vunpack.c.l.b16 %v2758
        %v2792 = vpack.c.b16 %v2777, %v2776
        %v2793 = vpack.c.b16 %v2779, %v2778
        %v2794 = vpack.c.b16 %v2781, %v2780
        %v2795 = vpack.c.b16 %v2783, %v2782
        %v2796 = vpack.c.b16 %v2785, %v2784
        %v2797 = vpack.c.b16 %v2787, %v2786
        %v2798 = vpack.c.b16 %v2789, %v2788
        %v2799 = vpack.c.b16 %v2791, %v2790
        %v2824 = vunpack.c.l.b16 %v2760
        %v2825 = vunpack.c.l.b16 %v2761
        %v2826 = vunpack.c.l.b16 %v2762
        %v2827 = vunpack.c.l.b16 %v2763
        %v2828 = vunpack.c.l.b16 %v2764
        %v2829 = vunpack.c.l.b16 %v2765
        %v2830 = vunpack.c.l.b16 %v2766
        %v2831 = vunpack.c.l.b16 %v2767
        %v2832 = vunpack.c.l.b16 %v2768
        %v2833 = vunpack.c.l.b16 %v2769
        %v2834 = vunpack.c.l.b16 %v2770
        %v2835 = vunpack.c.l.b16 %v2771
        %v2836 = vunpack.c.l.b16 %v2772
        %v2837 = vunpack.c.l.b16 %v2773
        %v2838 = vunpack.c.l.b16 %v2774
        %v2839 = vunpack.c.l.b16 %v2775
        %v2840 = vpack.c.b16 %v2825, %v2824
        %v2841 = vpack.c.b16 %v2827, %v2826
        %v2842 = vpack.c.b16 %v2829, %v2828
        %v2843 = vpack.c.b16 %v2831, %v2830
        %v2844 = vpack.c.b16 %v2833, %v2832
        %v2845 = vpack.c.b16 %v2835, %v2834
        %v2846 = vpack.c.b16 %v2837, %v2836
        %v2847 = vpack.c.b16 %v2839, %v2838
        %2856 = vmatprep.subr.bf16.mxu0 0
        %2857 = vmatpush1.bf16.msra.mxu0 %v2840
        %2858 = vmatprep.subr.bf16.mxu0 0
        %2859 = vmatpush1.bf16.msra.mxu0 %v2841
        %2860 = vmatprep.subr.bf16.mxu0 0
        %2861 = vmatpush1.bf16.msra.mxu0 %v2842
        %2862 = vmatprep.subr.bf16.mxu0 0
        %2863 = vmatpush1.bf16.msra.mxu0 %v2843
        %2864 = vmatprep.subr.bf16.mxu0 0
        %2865 = vmatpush1.bf16.msra.mxu0 %v2844
        %2866 = vmatprep.subr.bf16.mxu0 0
        %2867 = vmatpush1.bf16.msra.mxu0 %v2845
        %2868 = vmatprep.subr.bf16.mxu0 0
        %2869 = vmatpush1.bf16.msra.mxu0 %v2846
        %2870 = vmatprep.subr.bf16.mxu0 0
        %2871 = vmatpush1.bf16.msra.mxu0 %v2847
        %2872 = vmatprep.subr.bf16.mxu0 0
        %2873 = vmatpush1.bf16.msra.mxu0 0
        %2874 = vmatprep.subr.bf16.mxu0 0
        %2875 = vmatpush1.bf16.msra.mxu0 0
        %2876 = vmatprep.subr.bf16.mxu0 0
        %2877 = vmatpush1.bf16.msra.mxu0 0
        %2878 = vmatprep.subr.bf16.mxu0 0
        %2879 = vmatpush1.bf16.msra.mxu0 0
        %2880 = vmatprep.subr.bf16.mxu0 0
        %2881 = vmatpush1.bf16.msra.mxu0 0
        %2882 = vmatprep.subr.bf16.mxu0 0
        %2883 = vmatpush1.bf16.msra.mxu0 0
        %2884 = vmatprep.subr.bf16.mxu0 0
        %2885 = vmatpush1.bf16.msra.mxu0 0
        %2886 = vmatprep.subr.bf16.mxu0 0
        %2887 = vmatpush1.bf16.msra.mxu0 0
        %2888 = vmatprep.mubr.bf16.mxu0 0
        %2889 = vmatmul.mubr.bf16.gmra.mrb[0].mxu0 %v2792
        %v2890 = vpop.f32.mrb[0].mxu0
        %v2891 = vadd.f32 0.0, %v2890
        %v2892 = vpop.f32.mrb[0].mxu0
        %v2893 = vpop.f32.mrb[0].mxu0
        %v2894 = vadd.f32 0.0, %v2893
        %v2895 = vpop.f32.mrb[0].mxu0
        %2896 = vmatprep.mubr.bf16.mxu0 0
        %2897 = vmatmul.mubr.bf16.gmra.mrb[0].mxu0 %v2793
        %v2898 = vpop.f32.mrb[0].mxu0
        %v2899 = vadd.f32 0.0, %v2898
        %v2900 = vpop.f32.mrb[0].mxu0
        %v2901 = vpop.f32.mrb[0].mxu0
        %v2902 = vadd.f32 0.0, %v2901
        %v2903 = vpop.f32.mrb[0].mxu0
        %2904 = vmatprep.mubr.bf16.mxu0 0
        %2905 = vmatmul.mubr.bf16.gmra.mrb[0].mxu0 %v2794
        %v2906 = vpop.f32.mrb[0].mxu0
        %v2907 = vadd.f32 0.0, %v2906
        %v2908 = vpop.f32.mrb[0].mxu0
        %v2909 = vpop.f32.mrb[0].mxu0
        %v2910 = vadd.f32 0.0, %v2909
        %v2911 = vpop.f32.mrb[0].mxu0
        %2912 = vmatprep.mubr.bf16.mxu0 0
        %2913 = vmatmul.mubr.bf16.gmra.mrb[0].mxu0 %v2795
        %v2914 = vpop.f32.mrb[0].mxu0
        %v2915 = vadd.f32 0.0, %v2914
        %v2916 = vpop.f32.mrb[0].mxu0
        %v2917 = vpop.f32.mrb[0].mxu0
        %v2918 = vadd.f32 0.0, %v2917
        %v2919 = vpop.f32.mrb[0].mxu0
        %2920 = vmatprep.mubr.bf16.mxu0 0
        %2921 = vmatmul.mubr.bf16.gmra.mrb[0].mxu0 %v2796
        %v2922 = vpop.f32.mrb[0].mxu0
        %v2923 = vadd.f32 0.0, %v2922
        %v2924 = vpop.f32.mrb[0].mxu0
        %v2925 = vpop.f32.mrb[0].mxu0
        %v2926 = vadd.f32 0.0, %v2925
        %v2927 = vpop.f32.mrb[0].mxu0
        %2928 = vmatprep.mubr.bf16.mxu0 0
        %2929 = vmatmul.mubr.bf16.gmra.mrb[0].mxu0 %v2797
        %v2930 = vpop.f32.mrb[0].mxu0
        %v2931 = vadd.f32 0.0, %v2930
        %v2932 = vpop.f32.mrb[0].mxu0
        %v2933 = vpop.f32.mrb[0].mxu0
        %v2934 = vadd.f32 0.0, %v2933
        %v2935 = vpop.f32.mrb[0].mxu0
        %2936 = vmatprep.mubr.bf16.mxu0 0
        %2937 = vmatmul.mubr.bf16.gmra.mrb[0].mxu0 %v2798
        %v2938 = vpop.f32.mrb[0].mxu0
        %v2939 = vadd.f32 0.0, %v2938
        %v2940 = vpop.f32.mrb[0].mxu0
        %v2941 = vpop.f32.mrb[0].mxu0
        %v2942 = vadd.f32 0.0, %v2941
        %v2943 = vpop.f32.mrb[0].mxu0
        %2944 = vmatprep.mubr.bf16.mxu0 0
        %2945 = vmatmul.mubr.bf16.gmra.mrb[0].mxu0 %v2799
        %v2946 = vpop.f32.mrb[0].mxu0
        %v2947 = vadd.f32 0.0, %v2946
        %v2948 = vpop.f32.mrb[0].mxu0
        %v2949 = vpop.f32.mrb[0].mxu0
        %v2950 = vadd.f32 0.0, %v2949
        %v2951 = vpop.f32.mrb[0].mxu0
        %2952 = vdwg.mxu0
        %v2953 = vadd.f32 %v2527, %v2891
        %v2954 = vadd.f32 %v2528, %v2894
        %v2955 = vadd.f32 %v2529, %v2899
        %v2956 = vadd.f32 %v2530, %v2902
        %v2957 = vadd.f32 %v2531, %v2907
        %v2958 = vadd.f32 %v2532, %v2910
        %v2959 = vadd.f32 %v2533, %v2915
        %v2960 = vadd.f32 %v2534, %v2918
        %v2961 = vadd.f32 %v2535, %v2923
        %v2962 = vadd.f32 %v2536, %v2926
        %v2963 = vadd.f32 %v2537, %v2931
        %v2964 = vadd.f32 %v2538, %v2934
        %v2965 = vadd.f32 %v2539, %v2939
        %v2966 = vadd.f32 %v2540, %v2942
        %v2967 = vadd.f32 %v2541, %v2947
        %v2968 = vadd.f32 %v2542, %v2950
        %v2969 = vld [vmem:[%s2300] sm:$0xe]
        %v2970 = vld [vmem:[%s2300 + $0xc] sm:$0xe]
        %v2971 = vld [vmem:[%s2300 + $0x18] sm:$0xe]
        %v2972 = vld [vmem:[%s2300 + $0x24] sm:$0xe]
        %v2973 = vld [vmem:[%s2300 + $0x30] sm:$0xe]
        %v2974 = vld [vmem:[%s2300 + $0x3c] sm:$0xe]
        %v2975 = vld [vmem:[%s2300 + $0x48] sm:$0xe]
        %v2976 = vld [vmem:[%s2300 + $0x54] sm:$0xe]
        %v3001 = vrot.slane %v2969, 5
        %v3002 = vrot.slane %v3001, 4
        %v3003 = vrot.slane %v2544, 5
        %v3004 = vsel %vm1060, %v3002, %v3003
        %v3005 = vrot.slane %v3003, 4
        %v3006 = vrot.slane %v2545, 5
        %v3007 = vsel %vm1060, %v3005, %v3006
        %v3008 = vrot.slane %v2970, 5
        %v3009 = vrot.slane %v3008, 4
        %v3010 = vrot.slane %v2547, 5
        %v3011 = vsel %vm1060, %v3009, %v3010
        %v3012 = vrot.slane %v3010, 4
        %v3013 = vrot.slane %v2548, 5
        %v3014 = vsel %vm1060, %v3012, %v3013
        %v3015 = vrot.slane %v2971, 5
        %v3016 = vrot.slane %v3015, 4
        %v3017 = vrot.slane %v2550, 5
        %v3018 = vsel %vm1060, %v3016, %v3017
        %v3019 = vrot.slane %v3017, 4
        %v3020 = vrot.slane %v2551, 5
        %v3021 = vsel %vm1060, %v3019, %v3020
        %v3022 = vrot.slane %v2972, 5
        %v3023 = vrot.slane %v3022, 4
        %v3024 = vrot.slane %v2553, 5
        %v3025 = vsel %vm1060, %v3023, %v3024
        %v3026 = vrot.slane %v3024, 4
        %v3027 = vrot.slane %v2554, 5
        %v3028 = vsel %vm1060, %v3026, %v3027
        %v3029 = vrot.slane %v2973, 5
        %v3030 = vrot.slane %v3029, 4
        %v3031 = vrot.slane %v2556, 5
        %v3032 = vsel %vm1060, %v3030, %v3031
        %v3033 = vrot.slane %v3031, 4
        %v3034 = vrot.slane %v2557, 5
        %v3035 = vsel %vm1060, %v3033, %v3034
        %v3036 = vrot.slane %v2974, 5
        %v3037 = vrot.slane %v3036, 4
        %v3038 = vrot.slane %v2559, 5
        %v3039 = vsel %vm1060, %v3037, %v3038
        %v3040 = vrot.slane %v3038, 4
        %v3041 = vrot.slane %v2560, 5
        %v3042 = vsel %vm1060, %v3040, %v3041
        %v3043 = vrot.slane %v2975, 5
        %v3044 = vrot.slane %v3043, 4
        %v3045 = vrot.slane %v2562, 5
        %v3046 = vsel %vm1060, %v3044, %v3045
        %v3047 = vrot.slane %v3045, 4
        %v3048 = vrot.slane %v2563, 5
        %v3049 = vsel %vm1060, %v3047, %v3048
        %v3050 = vrot.slane %v2976, 5
        %v3051 = vrot.slane %v3050, 4
        %v3052 = vrot.slane %v2565, 5
        %v3053 = vsel %vm1060, %v3051, %v3052
        %v3054 = vrot.slane %v3052, 4
        %v3055 = vrot.slane %v2566, 5
        %v3056 = vsel %vm1060, %v3054, %v3055
        %s3057 = scalar_lea.vmem %s1, 512
        %v3058 = vld [vmem:[%s3057] sm:$0xf]
        %v3059 = vld [vmem:[%s3057 + $0x4] sm:$0xf]
        %v3060 = vld [vmem:[%s3057 + $0x8] sm:$0xf]
        %v3061 = vld [vmem:[%s3057 + $0xc] sm:$0xf]
        %v3062 = vld [vmem:[%s3057 + $0x10] sm:$0xf]
        %v3063 = vld [vmem:[%s3057 + $0x14] sm:$0xf]
        %v3064 = vld [vmem:[%s3057 + $0x18] sm:$0xf]
        %v3065 = vld [vmem:[%s3057 + $0x1c] sm:$0xf]
        %v3066 = vld [vmem:[%s3057 + $0x20] sm:$0xf]
        %v3067 = vld [vmem:[%s3057 + $0x24] sm:$0xf]
        %v3068 = vld [vmem:[%s3057 + $0x28] sm:$0xf]
        %v3069 = vld [vmem:[%s3057 + $0x2c] sm:$0xf]
        %v3070 = vld [vmem:[%s3057 + $0x30] sm:$0xf]
        %v3071 = vld [vmem:[%s3057 + $0x34] sm:$0xf]
        %v3072 = vld [vmem:[%s3057 + $0x38] sm:$0xf]
        %v3073 = vld [vmem:[%s3057 + $0x3c] sm:$0xf]
        %v3074 = vunpack.c.l.b16 %v3004
        %v3075 = vunpack.c.l.b16 %v3007
        %v3076 = vunpack.c.l.b16 %v3011
        %v3077 = vunpack.c.l.b16 %v3014
        %v3078 = vunpack.c.l.b16 %v3018
        %v3079 = vunpack.c.l.b16 %v3021
        %v3080 = vunpack.c.l.b16 %v3025
        %v3081 = vunpack.c.l.b16 %v3028
        %v3082 = vunpack.c.l.b16 %v3032
        %v3083 = vunpack.c.l.b16 %v3035
        %v3084 = vunpack.c.l.b16 %v3039
        %v3085 = vunpack.c.l.b16 %v3042
        %v3086 = vunpack.c.l.b16 %v3046
        %v3087 = vunpack.c.l.b16 %v3049
        %v3088 = vunpack.c.l.b16 %v3053
        %v3089 = vunpack.c.l.b16 %v3056
        %v3090 = vpack.c.b16 %v3075, %v3074
        %v3091 = vpack.c.b16 %v3077, %v3076
        %v3092 = vpack.c.b16 %v3079, %v3078
        %v3093 = vpack.c.b16 %v3081, %v3080
        %v3094 = vpack.c.b16 %v3083, %v3082
        %v3095 = vpack.c.b16 %v3085, %v3084
        %v3096 = vpack.c.b16 %v3087, %v3086
        %v3097 = vpack.c.b16 %v3089, %v3088
        %v3122 = vunpack.c.l.b16 %v3058
        %v3123 = vunpack.c.l.b16 %v3059
        %v3124 = vunpack.c.l.b16 %v3060
        %v3125 = vunpack.c.l.b16 %v3061
        %v3126 = vunpack.c.l.b16 %v3062
        %v3127 = vunpack.c.l.b16 %v3063
        %v3128 = vunpack.c.l.b16 %v3064
        %v3129 = vunpack.c.l.b16 %v3065
        %v3130 = vunpack.c.l.b16 %v3066
        %v3131 = vunpack.c.l.b16 %v3067
        %v3132 = vunpack.c.l.b16 %v3068
        %v3133 = vunpack.c.l.b16 %v3069
        %v3134 = vunpack.c.l.b16 %v3070
        %v3135 = vunpack.c.l.b16 %v3071
        %v3136 = vunpack.c.l.b16 %v3072
        %v3137 = vunpack.c.l.b16 %v3073
        %v3138 = vpack.c.b16 %v3123, %v3122
        %v3139 = vpack.c.b16 %v3125, %v3124
        %v3140 = vpack.c.b16 %v3127, %v3126
        %v3141 = vpack.c.b16 %v3129, %v3128
        %v3142 = vpack.c.b16 %v3131, %v3130
        %v3143 = vpack.c.b16 %v3133, %v3132
        %v3144 = vpack.c.b16 %v3135, %v3134
        %v3145 = vpack.c.b16 %v3137, %v3136
        %3154 = vmatprep.subr.bf16.mxu0 0
        %3155 = vmatpush1.bf16.msra.mxu0 %v3138
        %3156 = vmatprep.subr.bf16.mxu0 0
        %3157 = vmatpush1.bf16.msra.mxu0 %v3139
        %3158 = vmatprep.subr.bf16.mxu0 0
        %3159 = vmatpush1.bf16.msra.mxu0 %v3140
        %3160 = vmatprep.subr.bf16.mxu0 0
        %3161 = vmatpush1.bf16.msra.mxu0 %v3141
        %3162 = vmatprep.subr.bf16.mxu0 0
        %3163 = vmatpush1.bf16.msra.mxu0 %v3142
        %3164 = vmatprep.subr.bf16.mxu0 0
        %3165 = vmatpush1.bf16.msra.mxu0 %v3143
        %3166 = vmatprep.subr.bf16.mxu0 0
        %3167 = vmatpush1.bf16.msra.mxu0 %v3144
        %3168 = vmatprep.subr.bf16.mxu0 0
        %3169 = vmatpush1.bf16.msra.mxu0 %v3145
        %3170 = vmatprep.subr.bf16.mxu0 0
        %3171 = vmatpush1.bf16.msra.mxu0 0
        %3172 = vmatprep.subr.bf16.mxu0 0
        %3173 = vmatpush1.bf16.msra.mxu0 0
        %3174 = vmatprep.subr.bf16.mxu0 0
        %3175 = vmatpush1.bf16.msra.mxu0 0
        %3176 = vmatprep.subr.bf16.mxu0 0
        %3177 = vmatpush1.bf16.msra.mxu0 0
        %3178 = vmatprep.subr.bf16.mxu0 0
        %3179 = vmatpush1.bf16.msra.mxu0 0
        %3180 = vmatprep.subr.bf16.mxu0 0
        %3181 = vmatpush1.bf16.msra.mxu0 0
        %3182 = vmatprep.subr.bf16.mxu0 0
        %3183 = vmatpush1.bf16.msra.mxu0 0
        %3184 = vmatprep.subr.bf16.mxu0 0
        %3185 = vmatpush1.bf16.msra.mxu0 0
        %3186 = vmatprep.mubr.bf16.mxu0 0
        %3187 = vmatmul.mubr.bf16.gmra.mrb[0].mxu0 %v3090
        %v3188 = vpop.f32.mrb[0].mxu0
        %v3189 = vadd.f32 0.0, %v3188
        %v3190 = vpop.f32.mrb[0].mxu0
        %v3191 = vpop.f32.mrb[0].mxu0
        %v3192 = vadd.f32 0.0, %v3191
        %v3193 = vpop.f32.mrb[0].mxu0
        %3194 = vmatprep.mubr.bf16.mxu0 0
        %3195 = vmatmul.mubr.bf16.gmra.mrb[0].mxu0 %v3091
        %v3196 = vpop.f32.mrb[0].mxu0
        %v3197 = vadd.f32 0.0, %v3196
        %v3198 = vpop.f32.mrb[0].mxu0
        %v3199 = vpop.f32.mrb[0].mxu0
        %v3200 = vadd.f32 0.0, %v3199
        %v3201 = vpop.f32.mrb[0].mxu0
        %3202 = vmatprep.mubr.bf16.mxu0 0
        %3203 = vmatmul.mubr.bf16.gmra.mrb[0].mxu0 %v3092
        %v3204 = vpop.f32.mrb[0].mxu0
        %v3205 = vadd.f32 0.0, %v3204
        %v3206 = vpop.f32.mrb[0].mxu0
        %v3207 = vpop.f32.mrb[0].mxu0
        %v3208 = vadd.f32 0.0, %v3207
        %v3209 = vpop.f32.mrb[0].mxu0
        %3210 = vmatprep.mubr.bf16.mxu0 0
        %3211 = vmatmul.mubr.bf16.gmra.mrb[0].mxu0 %v3093
        %v3212 = vpop.f32.mrb[0].mxu0
        %v3213 = vadd.f32 0.0, %v3212
        %v3214 = vpop.f32.mrb[0].mxu0
        %v3215 = vpop.f32.mrb[0].mxu0
        %v3216 = vadd.f32 0.0, %v3215
        %v3217 = vpop.f32.mrb[0].mxu0
        %3218 = vmatprep.mubr.bf16.mxu0 0
        %3219 = vmatmul.mubr.bf16.gmra.mrb[0].mxu0 %v3094
        %v3220 = vpop.f32.mrb[0].mxu0
        %v3221 = vadd.f32 0.0, %v3220
        %v3222 = vpop.f32.mrb[0].mxu0
        %v3223 = vpop.f32.mrb[0].mxu0
        %v3224 = vadd.f32 0.0, %v3223
        %v3225 = vpop.f32.mrb[0].mxu0
        %3226 = vmatprep.mubr.bf16.mxu0 0
        %3227 = vmatmul.mubr.bf16.gmra.mrb[0].mxu0 %v3095
        %v3228 = vpop.f32.mrb[0].mxu0
        %v3229 = vadd.f32 0.0, %v3228
        %v3230 = vpop.f32.mrb[0].mxu0
        %v3231 = vpop.f32.mrb[0].mxu0
        %v3232 = vadd.f32 0.0, %v3231
        %v3233 = vpop.f32.mrb[0].mxu0
        %3234 = vmatprep.mubr.bf16.mxu0 0
        %3235 = vmatmul.mubr.bf16.gmra.mrb[0].mxu0 %v3096
        %v3236 = vpop.f32.mrb[0].mxu0
        %v3237 = vadd.f32 0.0, %v3236
        %v3238 = vpop.f32.mrb[0].mxu0
        %v3239 = vpop.f32.mrb[0].mxu0
        %v3240 = vadd.f32 0.0, %v3239
        %v3241 = vpop.f32.mrb[0].mxu0
        %3242 = vmatprep.mubr.bf16.mxu0 0
        %3243 = vmatmul.mubr.bf16.gmra.mrb[0].mxu0 %v3097
        %v3244 = vpop.f32.mrb[0].mxu0
        %v3245 = vadd.f32 0.0, %v3244
        %v3246 = vpop.f32.mrb[0].mxu0
        %v3247 = vpop.f32.mrb[0].mxu0
        %v3248 = vadd.f32 0.0, %v3247
        %v3249 = vpop.f32.mrb[0].mxu0
        %3250 = vdwg.mxu0
        %v3251 = vadd.f32 %v2953, %v3189
        %v3252 = vadd.f32 %v2954, %v3192
        %v3253 = vadd.f32 %v2955, %v3197
        %v3254 = vadd.f32 %v2956, %v3200
        %v3255 = vadd.f32 %v2957, %v3205
        %v3256 = vadd.f32 %v2958, %v3208
        %v3257 = vadd.f32 %v2959, %v3213
        %v3258 = vadd.f32 %v2960, %v3216
        %v3259 = vadd.f32 %v2961, %v3221
        %v3260 = vadd.f32 %v2962, %v3224
        %v3261 = vadd.f32 %v2963, %v3229
        %v3262 = vadd.f32 %v2964, %v3232
        %v3263 = vadd.f32 %v2965, %v3237
        %v3264 = vadd.f32 %v2966, %v3240
        %v3265 = vadd.f32 %v2967, %v3245
        %v3266 = vadd.f32 %v2968, %v3248
        %v3268 = vlaneseq
        %v3269 = vshrl.u32 %v3268, 7
        %v3270 = vsub.s32 0, %v3269
        %v3271 = vrot.slane %v400, %v3270
        %v3273 = vmul.f32 %v3251, %v3271
        %v3274 = vmul.f32 %v3252, %v3271
        %v3275 = vmul.f32 %v3253, %v3271
        %v3276 = vmul.f32 %v3254, %v3271
        %v3277 = vmul.f32 %v3255, %v3271
        %v3278 = vmul.f32 %v3256, %v3271
        %v3279 = vmul.f32 %v3257, %v3271
        %v3280 = vmul.f32 %v3258, %v3271
        %v3281 = vmul.f32 %v3259, %v3271
        %v3282 = vmul.f32 %v3260, %v3271
        %v3283 = vmul.f32 %v3261, %v3271
        %v3284 = vmul.f32 %v3262, %v3271
        %v3285 = vmul.f32 %v3263, %v3271
        %v3286 = vmul.f32 %v3264, %v3271
        %v3287 = vmul.f32 %v3265, %v3271
        %v3288 = vmul.f32 %v3266, %v3271
        %v3290 = vlaneseq
        %v3291 = vshrl.u32 %v3290, 7
        %v3292 = vsub.s32 0, %v3291
        %v3293 = vrot.slane %v401, %v3292
        %v3295 = vadd.f32 %v3273, %v3293
        %v3296 = vadd.f32 %v3274, %v3293
        %v3297 = vadd.f32 %v3275, %v3293
        %v3298 = vadd.f32 %v3276, %v3293
        %v3299 = vadd.f32 %v3277, %v3293
        %v3300 = vadd.f32 %v3278, %v3293
        %v3301 = vadd.f32 %v3279, %v3293
        %v3302 = vadd.f32 %v3280, %v3293
        %v3303 = vadd.f32 %v3281, %v3293
        %v3304 = vadd.f32 %v3282, %v3293
        %v3305 = vadd.f32 %v3283, %v3293
        %v3306 = vadd.f32 %v3284, %v3293
        %v3307 = vadd.f32 %v3285, %v3293
        %v3308 = vadd.f32 %v3286, %v3293
        %v3309 = vadd.f32 %v3287, %v3293
        %v3310 = vadd.f32 %v3288, %v3293
        %v3311 = vmul.f32 %v3295, 0.2
        %v3312 = vmul.f32 %v3296, 0.2
        %v3313 = vmul.f32 %v3297, 0.2
        %v3314 = vmul.f32 %v3298, 0.2
        %v3315 = vmul.f32 %v3299, 0.2
        %v3316 = vmul.f32 %v3300, 0.2
        %v3317 = vmul.f32 %v3301, 0.2
        %v3318 = vmul.f32 %v3302, 0.2
        %v3319 = vmul.f32 %v3303, 0.2
        %v3320 = vmul.f32 %v3304, 0.2
        %v3321 = vmul.f32 %v3305, 0.2
        %v3322 = vmul.f32 %v3306, 0.2
        %v3323 = vmul.f32 %v3307, 0.2
        %v3324 = vmul.f32 %v3308, 0.2
        %v3325 = vmul.f32 %v3309, 0.2
        %v3326 = vmul.f32 %v3310, 0.2
        %v3327 = vmax.f32 %v3295, %v3311
        %v3328 = vmax.f32 %v3296, %v3312
        %v3329 = vmax.f32 %v3297, %v3313
        %v3330 = vmax.f32 %v3298, %v3314
        %v3331 = vmax.f32 %v3299, %v3315
        %v3332 = vmax.f32 %v3300, %v3316
        %v3333 = vmax.f32 %v3301, %v3317
        %v3334 = vmax.f32 %v3302, %v3318
        %v3335 = vmax.f32 %v3303, %v3319
        %v3336 = vmax.f32 %v3304, %v3320
        %v3337 = vmax.f32 %v3305, %v3321
        %v3338 = vmax.f32 %v3306, %v3322
        %v3339 = vmax.f32 %v3307, %v3323
        %v3340 = vmax.f32 %v3308, %v3324
        %v3341 = vmax.f32 %v3309, %v3325
        %v3342 = vmax.f32 %v3310, %v3326
        %v3343 = vpack.c.bf16 %v3328, %v3327
        %v3344 = vpack.c.bf16 %v3330, %v3329
        %v3345 = vpack.c.bf16 %v3332, %v3331
        %v3346 = vpack.c.bf16 %v3334, %v3333
        %v3347 = vpack.c.bf16 %v3336, %v3335
        %v3348 = vpack.c.bf16 %v3338, %v3337
        %v3349 = vpack.c.bf16 %v3340, %v3339
        %v3350 = vpack.c.bf16 %v3342, %v3341
        %s3351 = smul.u32 %s403, 4
        %v3356 = vunpack.c.l.b16 %v3343
        %v3357 = vunpack.c.h.b16 %v3343
        %v3358 = vunpack.c.l.b16 %v3345
        %v3359 = vunpack.c.h.b16 %v3345
        %v3360 = vunpack.c.l.b16 %v3347
        %v3361 = vunpack.c.h.b16 %v3347
        %v3362 = vunpack.c.l.b16 %v3349
        %v3363 = vunpack.c.h.b16 %v3349
        %v3364 = vpack.c.b16 %v3356, %v3356
        %v3365 = vpack.c.b16 %v3357, %v3357
        %v3366 = vpack.c.b16 %v3358, %v3358
        %v3367 = vpack.c.b16 %v3359, %v3359
        %v3368 = vpack.c.b16 %v3360, %v3360
        %v3369 = vpack.c.b16 %v3361, %v3361
        %v3370 = vpack.c.b16 %v3362, %v3362
        %v3371 = vpack.c.b16 %v3363, %v3363
        %vm3372 = vsmask.f32 4368
        %vm3373 = vmor %vm288, %vm3372
        %v3375 = vshrl.u32 %v3364, 16
        %v3377 = vrot.slane %v3375, 7
        %v3378 = vshll.u32 %v3364, 16
        %v3380 = vor.u32 %v3377, %v3378
        %v3381 = vrot.slane %v3377, 4
        %v3383 = vshrl.u32 %v3365, 16
        %v3385 = vrot.slane %v3383, 7
        %v3386 = vshll.u32 %v3365, 16
        %v3388 = vor.u32 %v3385, %v3386
        %v3389 = vsel %vm3373, %v3381, %v3388
        %v3390 = vrot.slane %v3385, 4
        %v3392 = vshrl.u32 %v3366, 16
        %v3394 = vrot.slane %v3392, 7
        %v3395 = vshll.u32 %v3366, 16
        %v3397 = vor.u32 %v3394, %v3395
        %v3398 = vrot.slane %v3394, 4
        %v3400 = vshrl.u32 %v3367, 16
        %v3402 = vrot.slane %v3400, 7
        %v3403 = vshll.u32 %v3367, 16
        %v3405 = vor.u32 %v3402, %v3403
        %v3406 = vsel %vm3373, %v3398, %v3405
        %v3407 = vrot.slane %v3402, 4
        %v3409 = vshrl.u32 %v3368, 16
        %v3411 = vrot.slane %v3409, 7
        %v3412 = vshll.u32 %v3368, 16
        %v3414 = vor.u32 %v3411, %v3412
        %v3415 = vrot.slane %v3411, 4
        %v3417 = vshrl.u32 %v3369, 16
        %v3419 = vrot.slane %v3417, 7
        %v3420 = vshll.u32 %v3369, 16
        %v3422 = vor.u32 %v3419, %v3420
        %v3423 = vsel %vm3373, %v3415, %v3422
        %v3424 = vrot.slane %v3419, 4
        %v3426 = vshrl.u32 %v3370, 16
        %v3428 = vrot.slane %v3426, 7
        %v3429 = vshll.u32 %v3370, 16
        %v3431 = vor.u32 %v3428, %v3429
        %v3432 = vrot.slane %v3428, 4
        %v3434 = vshrl.u32 %v3371, 16
        %v3436 = vrot.slane %v3434, 7
        %v3437 = vshll.u32 %v3371, 16
        %v3439 = vor.u32 %v3436, %v3437
        %v3440 = vsel %vm3373, %v3432, %v3439
        %v3441 = vrot.slane %v3436, 4
        %s3454 = smul.u32 %s3351, 3
        %s3455 = smul.addr %s3454, 4
        %s3456 = scalar_lea.vmem [#allocation3], %s3455
        %vm3457 = vcmask 1043456
        %vm3458 = vmand %vm3457, %vm317
        %v3459 = vld [vmem:[%s3456] sm:$0xf]
        %v3460 = vsel %vm3458, %v3380, %v3459
        %3461 = vst [vmem:[%s3456] sm:$0xf] %v3460
        %3462 = vst [vmem:[%s3456 + $0x4] sm:$0xf] %v3389
        %v3463 = vld [vmem:[%s3456 + $0x8] sm:$0x1]
        %v3464 = vsel %vm289, %v3390, %v3463
        %3465 = vst [vmem:[%s3456 + $0x8] sm:$0x1] %v3464
        %v3466 = vld [vmem:[%s3456 + $0xc] sm:$0xf]
        %v3467 = vsel %vm3458, %v3397, %v3466
        %3468 = vst [vmem:[%s3456 + $0xc] sm:$0xf] %v3467
        %3469 = vst [vmem:[%s3456 + $0x10] sm:$0xf] %v3406
        %v3470 = vld [vmem:[%s3456 + $0x14] sm:$0x1]
        %v3471 = vsel %vm289, %v3407, %v3470
        %3472 = vst [vmem:[%s3456 + $0x14] sm:$0x1] %v3471
        %v3473 = vld [vmem:[%s3456 + $0x18] sm:$0xf]
        %v3474 = vsel %vm3458, %v3414, %v3473
        %3475 = vst [vmem:[%s3456 + $0x18] sm:$0xf] %v3474
        %3476 = vst [vmem:[%s3456 + $0x1c] sm:$0xf] %v3423
        %v3477 = vld [vmem:[%s3456 + $0x20] sm:$0x1]
        %v3478 = vsel %vm289, %v3424, %v3477
        %3479 = vst [vmem:[%s3456 + $0x20] sm:$0x1] %v3478
        %v3480 = vld [vmem:[%s3456 + $0x24] sm:$0xf]
        %v3481 = vsel %vm3458, %v3431, %v3480
        %3482 = vst [vmem:[%s3456 + $0x24] sm:$0xf] %v3481
        %3483 = vst [vmem:[%s3456 + $0x28] sm:$0xf] %v3440
        %v3484 = vld [vmem:[%s3456 + $0x2c] sm:$0x1]
        %v3485 = vsel %vm289, %v3441, %v3484
        %3486 = vst [vmem:[%s3456 + $0x2c] sm:$0x1] %v3485
        %s3487 = sadd.s32 %s3351, 1
        %v3492 = vunpack.c.l.b16 %v3344
        %v3493 = vunpack.c.h.b16 %v3344
        %v3494 = vunpack.c.l.b16 %v3346
        %v3495 = vunpack.c.h.b16 %v3346
        %v3496 = vunpack.c.l.b16 %v3348
        %v3497 = vunpack.c.h.b16 %v3348
        %v3498 = vunpack.c.l.b16 %v3350
        %v3499 = vunpack.c.h.b16 %v3350
        %v3500 = vpack.c.b16 %v3492, %v3492
        %v3501 = vpack.c.b16 %v3493, %v3493
        %v3502 = vpack.c.b16 %v3494, %v3494
        %v3503 = vpack.c.b16 %v3495, %v3495
        %v3504 = vpack.c.b16 %v3496, %v3496
        %v3505 = vpack.c.b16 %v3497, %v3497
        %v3506 = vpack.c.b16 %v3498, %v3498
        %v3507 = vpack.c.b16 %v3499, %v3499
        %v3509 = vshrl.u32 %v3500, 16
        %v3511 = vrot.slane %v3509, 7
        %v3512 = vshll.u32 %v3500, 16
        %v3514 = vor.u32 %v3511, %v3512
        %v3515 = vrot.slane %v3511, 4
        %v3517 = vshrl.u32 %v3501, 16
        %v3519 = vrot.slane %v3517, 7
        %v3520 = vshll.u32 %v3501, 16
        %v3522 = vor.u32 %v3519, %v3520
        %v3523 = vsel %vm3373, %v3515, %v3522
        %v3524 = vrot.slane %v3519, 4
        %v3526 = vshrl.u32 %v3502, 16
        %v3528 = vrot.slane %v3526, 7
        %v3529 = vshll.u32 %v3502, 16
        %v3531 = vor.u32 %v3528, %v3529
        %v3532 = vrot.slane %v3528, 4
        %v3534 = vshrl.u32 %v3503, 16
        %v3536 = vrot.slane %v3534, 7
        %v3537 = vshll.u32 %v3503, 16
        %v3539 = vor.u32 %v3536, %v3537
        %v3540 = vsel %vm3373, %v3532, %v3539
        %v3541 = vrot.slane %v3536, 4
        %v3543 = vshrl.u32 %v3504, 16
        %v3545 = vrot.slane %v3543, 7
        %v3546 = vshll.u32 %v3504, 16
        %v3548 = vor.u32 %v3545, %v3546
        %v3549 = vrot.slane %v3545, 4
        %v3551 = vshrl.u32 %v3505, 16
        %v3553 = vrot.slane %v3551, 7
        %v3554 = vshll.u32 %v3505, 16
        %v3556 = vor.u32 %v3553, %v3554
        %v3557 = vsel %vm3373, %v3549, %v3556
        %v3558 = vrot.slane %v3553, 4
        %v3560 = vshrl.u32 %v3506, 16
        %v3562 = vrot.slane %v3560, 7
        %v3563 = vshll.u32 %v3506, 16
        %v3565 = vor.u32 %v3562, %v3563
        %v3566 = vrot.slane %v3562, 4
        %v3568 = vshrl.u32 %v3507, 16
        %v3570 = vrot.slane %v3568, 7
        %v3571 = vshll.u32 %v3507, 16
        %v3573 = vor.u32 %v3570, %v3571
        %v3574 = vsel %vm3373, %v3566, %v3573
        %v3575 = vrot.slane %v3570, 4
        %s3588 = smul.u32 %s3487, 3
        %s3589 = smul.addr %s3588, 4
        %s3590 = scalar_lea.vmem [#allocation2], %s3589
        %v3591 = vld [vmem:[%s3590] sm:$0xf]
        %v3592 = vsel %vm3458, %v3514, %v3591
        %3593 = vst [vmem:[%s3590] sm:$0xf] %v3592
        %3594 = vst [vmem:[%s3590 + $0x4] sm:$0xf] %v3523
        %v3595 = vld [vmem:[%s3590 + $0x8] sm:$0x1]
        %v3596 = vsel %vm289, %v3524, %v3595
        %3597 = vst [vmem:[%s3590 + $0x8] sm:$0x1] %v3596
        %v3598 = vld [vmem:[%s3590 + $0xc] sm:$0xf]
        %v3599 = vsel %vm3458, %v3531, %v3598
        %3600 = vst [vmem:[%s3590 + $0xc] sm:$0xf] %v3599
        %3601 = vst [vmem:[%s3590 + $0x10] sm:$0xf] %v3540
        %v3602 = vld [vmem:[%s3590 + $0x14] sm:$0x1]
        %v3603 = vsel %vm289, %v3541, %v3602
        %3604 = vst [vmem:[%s3590 + $0x14] sm:$0x1] %v3603
        %v3605 = vld [vmem:[%s3590 + $0x18] sm:$0xf]
        %v3606 = vsel %vm3458, %v3548, %v3605
        %3607 = vst [vmem:[%s3590 + $0x18] sm:$0xf] %v3606
        %3608 = vst [vmem:[%s3590 + $0x1c] sm:$0xf] %v3557
        %v3609 = vld [vmem:[%s3590 + $0x20] sm:$0x1]
        %v3610 = vsel %vm289, %v3558, %v3609
        %3611 = vst [vmem:[%s3590 + $0x20] sm:$0x1] %v3610
        %v3612 = vld [vmem:[%s3590 + $0x24] sm:$0xf]
        %v3613 = vsel %vm3458, %v3565, %v3612
        %3614 = vst [vmem:[%s3590 + $0x24] sm:$0xf] %v3613
        %3615 = vst [vmem:[%s3590 + $0x28] sm:$0xf] %v3574
        %v3616 = vld [vmem:[%s3590 + $0x2c] sm:$0x1]
        %v3617 = vsel %vm289, %v3575, %v3616
        %3618 = vst [vmem:[%s3590 + $0x2c] sm:$0x1] %v3617
      $region53: #{sub_conv_forward.1} parent=47 // loop_footer
        %s407 = sadd.s32 1, %s403
      $region54: #{sub_conv_forward.1} parent=47 // loop_footer_branch
        %402 = sbr.rel target = $region50
      $region55: #{sub_conv_forward.1} parent=47 // loop_exit
        _
      %v3619 = vld [vmem:[#allocation2] sm:$0xf]
      %v3620 = vld [vmem:[#allocation2 + $0x4] sm:$0xf]
      %v3621 = vld [vmem:[#allocation2 + $0xc] sm:$0xf]
      %v3622 = vld [vmem:[#allocation2 + $0x10] sm:$0xf]
      %v3623 = vld [vmem:[#allocation2 + $0x18] sm:$0xf]
      %v3624 = vld [vmem:[#allocation2 + $0x1c] sm:$0xf]
      %v3625 = vld [vmem:[#allocation2 + $0x24] sm:$0xf]
      %v3626 = vld [vmem:[#allocation2 + $0x28] sm:$0xf]
      %v3627 = vld [vmem:[#allocation2 + $0x30] sm:$0xf]
      %v3628 = vld [vmem:[#allocation2 + $0x34] sm:$0xf]
      %v3629 = vld [vmem:[#allocation2 + $0x3c] sm:$0xf]
      %v3630 = vld [vmem:[#allocation2 + $0x40] sm:$0xf]
      %v3631 = vld [vmem:[#allocation2 + $0x48] sm:$0xf]
      %v3632 = vld [vmem:[#allocation2 + $0x4c] sm:$0xf]
      %v3633 = vld [vmem:[#allocation2 + $0x54] sm:$0xf]
      %v3634 = vld [vmem:[#allocation2 + $0x58] sm:$0xf]
      %v3635 = vld [vmem:[%s2] sm:$0xf]
      %v3636 = vld [vmem:[%s2 + $0x4] sm:$0xf]
      %v3637 = vld [vmem:[%s2 + $0x8] sm:$0xf]
      %v3638 = vld [vmem:[%s2 + $0xc] sm:$0xf]
      %v3639 = vld [vmem:[%s2 + $0x10] sm:$0xf]
      %v3640 = vld [vmem:[%s2 + $0x14] sm:$0xf]
      %v3641 = vld [vmem:[%s2 + $0x18] sm:$0xf]
      %v3642 = vld [vmem:[%s2 + $0x1c] sm:$0xf]
      %v3643 = vld [vmem:[%s2 + $0x20] sm:$0xf]
      %v3644 = vld [vmem:[%s2 + $0x24] sm:$0xf]
      %v3645 = vld [vmem:[%s2 + $0x28] sm:$0xf]
      %v3646 = vld [vmem:[%s2 + $0x2c] sm:$0xf]
      %v3647 = vld [vmem:[%s2 + $0x30] sm:$0xf]
      %v3648 = vld [vmem:[%s2 + $0x34] sm:$0xf]
      %v3649 = vld [vmem:[%s2 + $0x38] sm:$0xf]
      %v3650 = vld [vmem:[%s2 + $0x3c] sm:$0xf]
      %v3651 = vld [vmem:[#allocation2 + $0x8] sm:$0x1]
      %v3652 = vld [vmem:[#allocation2 + $0x14] sm:$0x1]
      %v3653 = vld [vmem:[#allocation2 + $0x20] sm:$0x1]
      %v3654 = vld [vmem:[#allocation2 + $0x2c] sm:$0x1]
      %v3655 = vld [vmem:[#allocation2 + $0x38] sm:$0x1]
      %v3656 = vld [vmem:[#allocation2 + $0x44] sm:$0x1]
      %v3657 = vld [vmem:[#allocation2 + $0x50] sm:$0x1]
      %v3658 = vld [vmem:[#allocation2 + $0x5c] sm:$0x1]
      %vm3659 = vsmask.f32 3328
      %vm3660 = vsmask.f32 7440
      %vm3661 = vmor %vm3659, %vm3660
      %v3663 = vshrl.u32 %v3619, 16
      %v3665 = vrot.slane %v3663, 4
      %v3666 = vshll.u32 %v3619, 16
      %v3668 = vrot.slane %v3666, 5
      %v3669 = vor.u32 %v3665, %v3668
      %v3670 = vrot.slane %v3669, 4
      %v3672 = vshll.u32 %v3620, 16
      %v3674 = vrot.slane %v3672, 5
      %v3675 = vsel %vm3661, %v3670, %v3674
      %v3676 = vshrl.u32 %v3620, 16
      %v3678 = vrot.slane %v3676, 4
      %v3679 = vor.u32 %v3678, %v3674
      %v3680 = vrot.slane %v3679, 4
      %v3682 = vshll.u32 %v3651, 16
      %v3684 = vrot.slane %v3682, 5
      %v3685 = vsel %vm3661, %v3680, %v3684
      %v3687 = vshrl.u32 %v3621, 16
      %v3689 = vrot.slane %v3687, 4
      %v3690 = vshll.u32 %v3621, 16
      %v3692 = vrot.slane %v3690, 5
      %v3693 = vor.u32 %v3689, %v3692
      %v3694 = vrot.slane %v3693, 4
      %v3696 = vshll.u32 %v3622, 16
      %v3698 = vrot.slane %v3696, 5
      %v3699 = vsel %vm3661, %v3694, %v3698
      %v3700 = vshrl.u32 %v3622, 16
      %v3702 = vrot.slane %v3700, 4
      %v3703 = vor.u32 %v3702, %v3698
      %v3704 = vrot.slane %v3703, 4
      %v3706 = vshll.u32 %v3652, 16
      %v3708 = vrot.slane %v3706, 5
      %v3709 = vsel %vm3661, %v3704, %v3708
      %v3711 = vshrl.u32 %v3623, 16
      %v3713 = vrot.slane %v3711, 4
      %v3714 = vshll.u32 %v3623, 16
      %v3716 = vrot.slane %v3714, 5
      %v3717 = vor.u32 %v3713, %v3716
      %v3718 = vrot.slane %v3717, 4
      %v3720 = vshll.u32 %v3624, 16
      %v3722 = vrot.slane %v3720, 5
      %v3723 = vsel %vm3661, %v3718, %v3722
      %v3724 = vshrl.u32 %v3624, 16
      %v3726 = vrot.slane %v3724, 4
      %v3727 = vor.u32 %v3726, %v3722
      %v3728 = vrot.slane %v3727, 4
      %v3730 = vshll.u32 %v3653, 16
      %v3732 = vrot.slane %v3730, 5
      %v3733 = vsel %vm3661, %v3728, %v3732
      %v3735 = vshrl.u32 %v3625, 16
      %v3737 = vrot.slane %v3735, 4
      %v3738 = vshll.u32 %v3625, 16
      %v3740 = vrot.slane %v3738, 5
      %v3741 = vor.u32 %v3737, %v3740
      %v3742 = vrot.slane %v3741, 4
      %v3744 = vshll.u32 %v3626, 16
      %v3746 = vrot.slane %v3744, 5
      %v3747 = vsel %vm3661, %v3742, %v3746
      %v3748 = vshrl.u32 %v3626, 16
      %v3750 = vrot.slane %v3748, 4
      %v3751 = vor.u32 %v3750, %v3746
      %v3752 = vrot.slane %v3751, 4
      %v3754 = vshll.u32 %v3654, 16
      %v3756 = vrot.slane %v3754, 5
      %v3757 = vsel %vm3661, %v3752, %v3756
      %v3759 = vshrl.u32 %v3627, 16
      %v3761 = vrot.slane %v3759, 4
      %v3762 = vshll.u32 %v3627, 16
      %v3764 = vrot.slane %v3762, 5
      %v3765 = vor.u32 %v3761, %v3764
      %v3766 = vrot.slane %v3765, 4
      %v3768 = vshll.u32 %v3628, 16
      %v3770 = vrot.slane %v3768, 5
      %v3771 = vsel %vm3661, %v3766, %v3770
      %v3772 = vshrl.u32 %v3628, 16
      %v3774 = vrot.slane %v3772, 4
      %v3775 = vor.u32 %v3774, %v3770
      %v3776 = vrot.slane %v3775, 4
      %v3778 = vshll.u32 %v3655, 16
      %v3780 = vrot.slane %v3778, 5
      %v3781 = vsel %vm3661, %v3776, %v3780
      %v3783 = vshrl.u32 %v3629, 16
      %v3785 = vrot.slane %v3783, 4
      %v3786 = vshll.u32 %v3629, 16
      %v3788 = vrot.slane %v3786, 5
      %v3789 = vor.u32 %v3785, %v3788
      %v3790 = vrot.slane %v3789, 4
      %v3792 = vshll.u32 %v3630, 16
      %v3794 = vrot.slane %v3792, 5
      %v3795 = vsel %vm3661, %v3790, %v3794
      %v3796 = vshrl.u32 %v3630, 16
      %v3798 = vrot.slane %v3796, 4
      %v3799 = vor.u32 %v3798, %v3794
      %v3800 = vrot.slane %v3799, 4
      %v3802 = vshll.u32 %v3656, 16
      %v3804 = vrot.slane %v3802, 5
      %v3805 = vsel %vm3661, %v3800, %v3804
      %v3807 = vshrl.u32 %v3631, 16
      %v3809 = vrot.slane %v3807, 4
      %v3810 = vshll.u32 %v3631, 16
      %v3812 = vrot.slane %v3810, 5
      %v3813 = vor.u32 %v3809, %v3812
      %v3814 = vrot.slane %v3813, 4
      %v3816 = vshll.u32 %v3632, 16
      %v3818 = vrot.slane %v3816, 5
      %v3819 = vsel %vm3661, %v3814, %v3818
      %v3820 = vshrl.u32 %v3632, 16
      %v3822 = vrot.slane %v3820, 4
      %v3823 = vor.u32 %v3822, %v3818
      %v3824 = vrot.slane %v3823, 4
      %v3826 = vshll.u32 %v3657, 16
      %v3828 = vrot.slane %v3826, 5
      %v3829 = vsel %vm3661, %v3824, %v3828
      %v3831 = vshrl.u32 %v3633, 16
      %v3833 = vrot.slane %v3831, 4
      %v3834 = vshll.u32 %v3633, 16
      %v3836 = vrot.slane %v3834, 5
      %v3837 = vor.u32 %v3833, %v3836
      %v3838 = vrot.slane %v3837, 4
      %v3840 = vshll.u32 %v3634, 16
      %v3842 = vrot.slane %v3840, 5
      %v3843 = vsel %vm3661, %v3838, %v3842
      %v3844 = vshrl.u32 %v3634, 16
      %v3846 = vrot.slane %v3844, 4
      %v3847 = vor.u32 %v3846, %v3842
      %v3848 = vrot.slane %v3847, 4
      %v3850 = vshll.u32 %v3658, 16
      %v3852 = vrot.slane %v3850, 5
      %v3853 = vsel %vm3661, %v3848, %v3852
      %s3854 = scalar_lea.vmem %s2, 64
      %v3855 = vld [vmem:[%s3854] sm:$0xf]
      %v3856 = vld [vmem:[%s3854 + $0x4] sm:$0xf]
      %v3857 = vld [vmem:[%s3854 + $0x8] sm:$0xf]
      %v3858 = vld [vmem:[%s3854 + $0xc] sm:$0xf]
      %v3859 = vld [vmem:[%s3854 + $0x10] sm:$0xf]
      %v3860 = vld [vmem:[%s3854 + $0x14] sm:$0xf]
      %v3861 = vld [vmem:[%s3854 + $0x18] sm:$0xf]
      %v3862 = vld [vmem:[%s3854 + $0x1c] sm:$0xf]
      %v3863 = vld [vmem:[%s3854 + $0x20] sm:$0xf]
      %v3864 = vld [vmem:[%s3854 + $0x24] sm:$0xf]
      %v3865 = vld [vmem:[%s3854 + $0x28] sm:$0xf]
      %v3866 = vld [vmem:[%s3854 + $0x2c] sm:$0xf]
      %v3867 = vld [vmem:[%s3854 + $0x30] sm:$0xf]
      %v3868 = vld [vmem:[%s3854 + $0x34] sm:$0xf]
      %v3869 = vld [vmem:[%s3854 + $0x38] sm:$0xf]
      %v3870 = vld [vmem:[%s3854 + $0x3c] sm:$0xf]
      %v3871 = vunpack.c.l.b16 %v3675
      %v3872 = vunpack.c.l.b16 %v3685
      %v3873 = vunpack.c.l.b16 %v3699
      %v3874 = vunpack.c.l.b16 %v3709
      %v3875 = vunpack.c.l.b16 %v3723
      %v3876 = vunpack.c.l.b16 %v3733
      %v3877 = vunpack.c.l.b16 %v3747
      %v3878 = vunpack.c.l.b16 %v3757
      %v3879 = vunpack.c.l.b16 %v3771
      %v3880 = vunpack.c.l.b16 %v3781
      %v3881 = vunpack.c.l.b16 %v3795
      %v3882 = vunpack.c.l.b16 %v3805
      %v3883 = vunpack.c.l.b16 %v3819
      %v3884 = vunpack.c.l.b16 %v3829
      %v3885 = vunpack.c.l.b16 %v3843
      %v3886 = vunpack.c.l.b16 %v3853
      %v3887 = vpack.c.b16 %v3872, %v3871
      %v3888 = vpack.c.b16 %v3874, %v3873
      %v3889 = vpack.c.b16 %v3876, %v3875
      %v3890 = vpack.c.b16 %v3878, %v3877
      %v3891 = vpack.c.b16 %v3880, %v3879
      %v3892 = vpack.c.b16 %v3882, %v3881
      %v3893 = vpack.c.b16 %v3884, %v3883
      %v3894 = vpack.c.b16 %v3886, %v3885
      %v3919 = vunpack.c.l.b16 %v3855
      %v3920 = vunpack.c.l.b16 %v3856
      %v3921 = vunpack.c.l.b16 %v3857
      %v3922 = vunpack.c.l.b16 %v3858
      %v3923 = vunpack.c.l.b16 %v3859
      %v3924 = vunpack.c.l.b16 %v3860
      %v3925 = vunpack.c.l.b16 %v3861
      %v3926 = vunpack.c.l.b16 %v3862
      %v3927 = vunpack.c.l.b16 %v3863
      %v3928 = vunpack.c.l.b16 %v3864
      %v3929 = vunpack.c.l.b16 %v3865
      %v3930 = vunpack.c.l.b16 %v3866
      %v3931 = vunpack.c.l.b16 %v3867
      %v3932 = vunpack.c.l.b16 %v3868
      %v3933 = vunpack.c.l.b16 %v3869
      %v3934 = vunpack.c.l.b16 %v3870
      %v3935 = vpack.c.b16 %v3920, %v3919
      %v3936 = vpack.c.b16 %v3922, %v3921
      %v3937 = vpack.c.b16 %v3924, %v3923
      %v3938 = vpack.c.b16 %v3926, %v3925
      %v3939 = vpack.c.b16 %v3928, %v3927
      %v3940 = vpack.c.b16 %v3930, %v3929
      %v3941 = vpack.c.b16 %v3932, %v3931
      %v3942 = vpack.c.b16 %v3934, %v3933
      %3951 = vmatprep.subr.bf16.mxu0 0
      %3952 = vmatpush1.bf16.msra.mxu0 %v3935
      %3953 = vmatprep.subr.bf16.mxu0 0
      %3954 = vmatpush1.bf16.msra.mxu0 %v3936
      %3955 = vmatprep.subr.bf16.mxu0 0
      %3956 = vmatpush1.bf16.msra.mxu0 %v3937
      %3957 = vmatprep.subr.bf16.mxu0 0
      %3958 = vmatpush1.bf16.msra.mxu0 %v3938
      %3959 = vmatprep.subr.bf16.mxu0 0
      %3960 = vmatpush1.bf16.msra.mxu0 %v3939
      %3961 = vmatprep.subr.bf16.mxu0 0
      %3962 = vmatpush1.bf16.msra.mxu0 %v3940
      %3963 = vmatprep.subr.bf16.mxu0 0
      %3964 = vmatpush1.bf16.msra.mxu0 %v3941
      %3965 = vmatprep.subr.bf16.mxu0 0
      %3966 = vmatpush1.bf16.msra.mxu0 %v3942
      %3967 = vmatprep.subr.bf16.mxu0 0
      %3968 = vmatpush1.bf16.msra.mxu0 0
      %3969 = vmatprep.subr.bf16.mxu0 0
      %3970 = vmatpush1.bf16.msra.mxu0 0
      %3971 = vmatprep.subr.bf16.mxu0 0
      %3972 = vmatpush1.bf16.msra.mxu0 0
      %3973 = vmatprep.subr.bf16.mxu0 0
      %3974 = vmatpush1.bf16.msra.mxu0 0
      %3975 = vmatprep.subr.bf16.mxu0 0
      %3976 = vmatpush1.bf16.msra.mxu0 0
      %3977 = vmatprep.subr.bf16.mxu0 0
      %3978 = vmatpush1.bf16.msra.mxu0 0
      %3979 = vmatprep.subr.bf16.mxu0 0
      %3980 = vmatpush1.bf16.msra.mxu0 0
      %3981 = vmatprep.subr.bf16.mxu0 0
      %3982 = vmatpush1.bf16.msra.mxu0 0
      %3983 = vmatprep.mubr.bf16.mxu0 0
      %3984 = vmatmul.mubr.bf16.gmra.mrb[0].mxu0 %v3887
      %v3985 = vpop.f32.mrb[0].mxu0
      %v3986 = vadd.f32 0.0, %v3985
      %v3987 = vpop.f32.mrb[0].mxu0
      %v3988 = vpop.f32.mrb[0].mxu0
      %v3989 = vadd.f32 0.0, %v3988
      %v3990 = vpop.f32.mrb[0].mxu0
      %3991 = vmatprep.mubr.bf16.mxu0 0
      %3992 = vmatmul.mubr.bf16.gmra.mrb[0].mxu0 %v3888
      %v3993 = vpop.f32.mrb[0].mxu0
      %v3994 = vadd.f32 0.0, %v3993
      %v3995 = vpop.f32.mrb[0].mxu0
      %v3996 = vpop.f32.mrb[0].mxu0
      %v3997 = vadd.f32 0.0, %v3996
      %v3998 = vpop.f32.mrb[0].mxu0
      %3999 = vmatprep.mubr.bf16.mxu0 0
      %4000 = vmatmul.mubr.bf16.gmra.mrb[0].mxu0 %v3889
      %v4001 = vpop.f32.mrb[0].mxu0
      %v4002 = vadd.f32 0.0, %v4001
      %v4003 = vpop.f32.mrb[0].mxu0
      %v4004 = vpop.f32.mrb[0].mxu0
      %v4005 = vadd.f32 0.0, %v4004
      %v4006 = vpop.f32.mrb[0].mxu0
      %4007 = vmatprep.mubr.bf16.mxu0 0
      %4008 = vmatmul.mubr.bf16.gmra.mrb[0].mxu0 %v3890
      %v4009 = vpop.f32.mrb[0].mxu0
      %v4010 = vadd.f32 0.0, %v4009
      %v4011 = vpop.f32.mrb[0].mxu0
      %v4012 = vpop.f32.mrb[0].mxu0
      %v4013 = vadd.f32 0.0, %v4012
      %v4014 = vpop.f32.mrb[0].mxu0
      %4015 = vmatprep.mubr.bf16.mxu0 0
      %4016 = vmatmul.mubr.bf16.gmra.mrb[0].mxu0 %v3891
      %v4017 = vpop.f32.mrb[0].mxu0
      %v4018 = vadd.f32 0.0, %v4017
      %v4019 = vpop.f32.mrb[0].mxu0
      %v4020 = vpop.f32.mrb[0].mxu0
      %v4021 = vadd.f32 0.0, %v4020
      %v4022 = vpop.f32.mrb[0].mxu0
      %4023 = vmatprep.mubr.bf16.mxu0 0
      %4024 = vmatmul.mubr.bf16.gmra.mrb[0].mxu0 %v3892
      %v4025 = vpop.f32.mrb[0].mxu0
      %v4026 = vadd.f32 0.0, %v4025
      %v4027 = vpop.f32.mrb[0].mxu0
      %v4028 = vpop.f32.mrb[0].mxu0
      %v4029 = vadd.f32 0.0, %v4028
      %v4030 = vpop.f32.mrb[0].mxu0
      %4031 = vmatprep.mubr.bf16.mxu0 0
      %4032 = vmatmul.mubr.bf16.gmra.mrb[0].mxu0 %v3893
      %v4033 = vpop.f32.mrb[0].mxu0
      %v4034 = vadd.f32 0.0, %v4033
      %v4035 = vpop.f32.mrb[0].mxu0
      %v4036 = vpop.f32.mrb[0].mxu0
      %v4037 = vadd.f32 0.0, %v4036
      %v4038 = vpop.f32.mrb[0].mxu0
      %4039 = vmatprep.mubr.bf16.mxu0 0
      %4040 = vmatmul.mubr.bf16.gmra.mrb[0].mxu0 %v3894
      %v4041 = vpop.f32.mrb[0].mxu0
      %v4042 = vadd.f32 0.0, %v4041
      %v4043 = vpop.f32.mrb[0].mxu0
      %v4044 = vpop.f32.mrb[0].mxu0
      %v4045 = vadd.f32 0.0, %v4044
      %v4046 = vpop.f32.mrb[0].mxu0
      %4047 = vdwg.mxu0
      %v4064 = vunpack.c.l.b16 %v3619
      %v4065 = vunpack.c.l.b16 %v3620
      %v4066 = vunpack.c.l.b16 %v3621
      %v4067 = vunpack.c.l.b16 %v3622
      %v4068 = vunpack.c.l.b16 %v3623
      %v4069 = vunpack.c.l.b16 %v3624
      %v4070 = vunpack.c.l.b16 %v3625
      %v4071 = vunpack.c.l.b16 %v3626
      %v4072 = vunpack.c.l.b16 %v3627
      %v4073 = vunpack.c.l.b16 %v3628
      %v4074 = vunpack.c.l.b16 %v3629
      %v4075 = vunpack.c.l.b16 %v3630
      %v4076 = vunpack.c.l.b16 %v3631
      %v4077 = vunpack.c.l.b16 %v3632
      %v4078 = vunpack.c.l.b16 %v3633
      %v4079 = vunpack.c.l.b16 %v3634
      %v4080 = vpack.c.b16 %v4065, %v4064
      %v4081 = vpack.c.b16 %v4067, %v4066
      %v4082 = vpack.c.b16 %v4069, %v4068
      %v4083 = vpack.c.b16 %v4071, %v4070
      %v4084 = vpack.c.b16 %v4073, %v4072
      %v4085 = vpack.c.b16 %v4075, %v4074
      %v4086 = vpack.c.b16 %v4077, %v4076
      %v4087 = vpack.c.b16 %v4079, %v4078
      %v4112 = vunpack.c.l.b16 %v3635
      %v4113 = vunpack.c.l.b16 %v3636
      %v4114 = vunpack.c.l.b16 %v3637
      %v4115 = vunpack.c.l.b16 %v3638
      %v4116 = vunpack.c.l.b16 %v3639
      %v4117 = vunpack.c.l.b16 %v3640
      %v4118 = vunpack.c.l.b16 %v3641
      %v4119 = vunpack.c.l.b16 %v3642
      %v4120 = vunpack.c.l.b16 %v3643
      %v4121 = vunpack.c.l.b16 %v3644
      %v4122 = vunpack.c.l.b16 %v3645
      %v4123 = vunpack.c.l.b16 %v3646
      %v4124 = vunpack.c.l.b16 %v3647
      %v4125 = vunpack.c.l.b16 %v3648
      %v4126 = vunpack.c.l.b16 %v3649
      %v4127 = vunpack.c.l.b16 %v3650
      %v4128 = vpack.c.b16 %v4113, %v4112
      %v4129 = vpack.c.b16 %v4115, %v4114
      %v4130 = vpack.c.b16 %v4117, %v4116
      %v4131 = vpack.c.b16 %v4119, %v4118
      %v4132 = vpack.c.b16 %v4121, %v4120
      %v4133 = vpack.c.b16 %v4123, %v4122
      %v4134 = vpack.c.b16 %v4125, %v4124
      %v4135 = vpack.c.b16 %v4127, %v4126
      %4144 = vmatprep.subr.bf16.mxu0 0
      %4145 = vmatpush1.bf16.msra.mxu0 %v4128
      %4146 = vmatprep.subr.bf16.mxu0 0
      %4147 = vmatpush1.bf16.msra.mxu0 %v4129
      %4148 = vmatprep.subr.bf16.mxu0 0
      %4149 = vmatpush1.bf16.msra.mxu0 %v4130
      %4150 = vmatprep.subr.bf16.mxu0 0
      %4151 = vmatpush1.bf16.msra.mxu0 %v4131
      %4152 = vmatprep.subr.bf16.mxu0 0
      %4153 = vmatpush1.bf16.msra.mxu0 %v4132
      %4154 = vmatprep.subr.bf16.mxu0 0
      %4155 = vmatpush1.bf16.msra.mxu0 %v4133
      %4156 = vmatprep.subr.bf16.mxu0 0
      %4157 = vmatpush1.bf16.msra.mxu0 %v4134
      %4158 = vmatprep.subr.bf16.mxu0 0
      %4159 = vmatpush1.bf16.msra.mxu0 %v4135
      %4160 = vmatprep.subr.bf16.mxu0 0
      %4161 = vmatpush1.bf16.msra.mxu0 0
      %4162 = vmatprep.subr.bf16.mxu0 0
      %4163 = vmatpush1.bf16.msra.mxu0 0
      %4164 = vmatprep.subr.bf16.mxu0 0
      %4165 = vmatpush1.bf16.msra.mxu0 0
      %4166 = vmatprep.subr.bf16.mxu0 0
      %4167 = vmatpush1.bf16.msra.mxu0 0
      %4168 = vmatprep.subr.bf16.mxu0 0
      %4169 = vmatpush1.bf16.msra.mxu0 0
      %4170 = vmatprep.subr.bf16.mxu0 0
      %4171 = vmatpush1.bf16.msra.mxu0 0
      %4172 = vmatprep.subr.bf16.mxu0 0
      %4173 = vmatpush1.bf16.msra.mxu0 0
      %4174 = vmatprep.subr.bf16.mxu0 0
      %4175 = vmatpush1.bf16.msra.mxu0 0
      %4176 = vmatprep.mubr.bf16.mxu0 0
      %4177 = vmatmul.mubr.bf16.gmra.mrb[0].mxu0 %v4080
      %v4178 = vpop.f32.mrb[0].mxu0
      %v4179 = vadd.f32 %v3986, %v4178
      %v4180 = vpop.f32.mrb[0].mxu0
      %v4181 = vpop.f32.mrb[0].mxu0
      %v4182 = vadd.f32 %v3989, %v4181
      %v4183 = vpop.f32.mrb[0].mxu0
      %4184 = vmatprep.mubr.bf16.mxu0 0
      %4185 = vmatmul.mubr.bf16.gmra.mrb[0].mxu0 %v4081
      %v4186 = vpop.f32.mrb[0].mxu0
      %v4187 = vadd.f32 %v3994, %v4186
      %v4188 = vpop.f32.mrb[0].mxu0
      %v4189 = vpop.f32.mrb[0].mxu0
      %v4190 = vadd.f32 %v3997, %v4189
      %v4191 = vpop.f32.mrb[0].mxu0
      %4192 = vmatprep.mubr.bf16.mxu0 0
      %4193 = vmatmul.mubr.bf16.gmra.mrb[0].mxu0 %v4082
      %v4194 = vpop.f32.mrb[0].mxu0
      %v4195 = vadd.f32 %v4002, %v4194
      %v4196 = vpop.f32.mrb[0].mxu0
      %v4197 = vpop.f32.mrb[0].mxu0
      %v4198 = vadd.f32 %v4005, %v4197
      %v4199 = vpop.f32.mrb[0].mxu0
      %4200 = vmatprep.mubr.bf16.mxu0 0
      %4201 = vmatmul.mubr.bf16.gmra.mrb[0].mxu0 %v4083
      %v4202 = vpop.f32.mrb[0].mxu0
      %v4203 = vadd.f32 %v4010, %v4202
      %v4204 = vpop.f32.mrb[0].mxu0
      %v4205 = vpop.f32.mrb[0].mxu0
      %v4206 = vadd.f32 %v4013, %v4205
      %v4207 = vpop.f32.mrb[0].mxu0
      %4208 = vmatprep.mubr.bf16.mxu0 0
      %4209 = vmatmul.mubr.bf16.gmra.mrb[0].mxu0 %v4084
      %v4210 = vpop.f32.mrb[0].mxu0
      %v4211 = vadd.f32 %v4018, %v4210
      %v4212 = vpop.f32.mrb[0].mxu0
      %v4213 = vpop.f32.mrb[0].mxu0
      %v4214 = vadd.f32 %v4021, %v4213
      %v4215 = vpop.f32.mrb[0].mxu0
      %4216 = vmatprep.mubr.bf16.mxu0 0
      %4217 = vmatmul.mubr.bf16.gmra.mrb[0].mxu0 %v4085
      %v4218 = vpop.f32.mrb[0].mxu0
      %v4219 = vadd.f32 %v4026, %v4218
      %v4220 = vpop.f32.mrb[0].mxu0
      %v4221 = vpop.f32.mrb[0].mxu0
      %v4222 = vadd.f32 %v4029, %v4221
      %v4223 = vpop.f32.mrb[0].mxu0
      %4224 = vmatprep.mubr.bf16.mxu0 0
      %4225 = vmatmul.mubr.bf16.gmra.mrb[0].mxu0 %v4086
      %v4226 = vpop.f32.mrb[0].mxu0
      %v4227 = vadd.f32 %v4034, %v4226
      %v4228 = vpop.f32.mrb[0].mxu0
      %v4229 = vpop.f32.mrb[0].mxu0
      %v4230 = vadd.f32 %v4037, %v4229
      %v4231 = vpop.f32.mrb[0].mxu0
      %4232 = vmatprep.mubr.bf16.mxu0 0
      %4233 = vmatmul.mubr.bf16.gmra.mrb[0].mxu0 %v4087
      %v4234 = vpop.f32.mrb[0].mxu0
      %v4235 = vadd.f32 %v4042, %v4234
      %v4236 = vpop.f32.mrb[0].mxu0
      %v4237 = vpop.f32.mrb[0].mxu0
      %v4238 = vadd.f32 %v4045, %v4237
      %v4239 = vpop.f32.mrb[0].mxu0
      %4240 = vdwg.mxu0
      %v4241 = vld [vmem:[#allocation2] sm:$0xe]
      %v4242 = vld [vmem:[#allocation2 + $0xc] sm:$0xe]
      %v4243 = vld [vmem:[#allocation2 + $0x18] sm:$0xe]
      %v4244 = vld [vmem:[#allocation2 + $0x24] sm:$0xe]
      %v4245 = vld [vmem:[#allocation2 + $0x30] sm:$0xe]
      %v4246 = vld [vmem:[#allocation2 + $0x3c] sm:$0xe]
      %v4247 = vld [vmem:[#allocation2 + $0x48] sm:$0xe]
      %v4248 = vld [vmem:[#allocation2 + $0x54] sm:$0xe]
      %vm4265 = vcmask 1042432
      %vm4266 = vcmask 1046532
      %vm4267 = vmor %vm4265, %vm4266
      %v4268 = vrot.slane %v4241, 5
      %v4269 = vrot.slane %v4268, 4
      %v4270 = vrot.slane %v3620, 5
      %v4271 = vsel %vm4267, %v4269, %v4270
      %v4272 = vrot.slane %v4270, 4
      %v4273 = vrot.slane %v3651, 5
      %v4274 = vsel %vm4267, %v4272, %v4273
      %v4275 = vrot.slane %v4242, 5
      %v4276 = vrot.slane %v4275, 4
      %v4277 = vrot.slane %v3622, 5
      %v4278 = vsel %vm4267, %v4276, %v4277
      %v4279 = vrot.slane %v4277, 4
      %v4280 = vrot.slane %v3652, 5
      %v4281 = vsel %vm4267, %v4279, %v4280
      %v4282 = vrot.slane %v4243, 5
      %v4283 = vrot.slane %v4282, 4
      %v4284 = vrot.slane %v3624, 5
      %v4285 = vsel %vm4267, %v4283, %v4284
      %v4286 = vrot.slane %v4284, 4
      %v4287 = vrot.slane %v3653, 5
      %v4288 = vsel %vm4267, %v4286, %v4287
      %v4289 = vrot.slane %v4244, 5
      %v4290 = vrot.slane %v4289, 4
      %v4291 = vrot.slane %v3626, 5
      %v4292 = vsel %vm4267, %v4290, %v4291
      %v4293 = vrot.slane %v4291, 4
      %v4294 = vrot.slane %v3654, 5
      %v4295 = vsel %vm4267, %v4293, %v4294
      %v4296 = vrot.slane %v4245, 5
      %v4297 = vrot.slane %v4296, 4
      %v4298 = vrot.slane %v3628, 5
      %v4299 = vsel %vm4267, %v4297, %v4298
      %v4300 = vrot.slane %v4298, 4
      %v4301 = vrot.slane %v3655, 5
      %v4302 = vsel %vm4267, %v4300, %v4301
      %v4303 = vrot.slane %v4246, 5
      %v4304 = vrot.slane %v4303, 4
      %v4305 = vrot.slane %v3630, 5
      %v4306 = vsel %vm4267, %v4304, %v4305
      %v4307 = vrot.slane %v4305, 4
      %v4308 = vrot.slane %v3656, 5
      %v4309 = vsel %vm4267, %v4307, %v4308
      %v4310 = vrot.slane %v4247, 5
      %v4311 = vrot.slane %v4310, 4
      %v4312 = vrot.slane %v3632, 5
      %v4313 = vsel %vm4267, %v4311, %v4312
      %v4314 = vrot.slane %v4312, 4
      %v4315 = vrot.slane %v3657, 5
      %v4316 = vsel %vm4267, %v4314, %v4315
      %v4317 = vrot.slane %v4248, 5
      %v4318 = vrot.slane %v4317, 4
      %v4319 = vrot.slane %v3634, 5
      %v4320 = vsel %vm4267, %v4318, %v4319
      %v4321 = vrot.slane %v4319, 4
      %v4322 = vrot.slane %v3658, 5
      %v4323 = vsel %vm4267, %v4321, %v4322
      %s4324 = scalar_lea.vmem %s2, 128
      %v4325 = vld [vmem:[%s4324] sm:$0xf]
      %v4326 = vld [vmem:[%s4324 + $0x4] sm:$0xf]
      %v4327 = vld [vmem:[%s4324 + $0x8] sm:$0xf]
      %v4328 = vld [vmem:[%s4324 + $0xc] sm:$0xf]
      %v4329 = vld [vmem:[%s4324 + $0x10] sm:$0xf]
      %v4330 = vld [vmem:[%s4324 + $0x14] sm:$0xf]
      %v4331 = vld [vmem:[%s4324 + $0x18] sm:$0xf]
      %v4332 = vld [vmem:[%s4324 + $0x1c] sm:$0xf]
      %v4333 = vld [vmem:[%s4324 + $0x20] sm:$0xf]
      %v4334 = vld [vmem:[%s4324 + $0x24] sm:$0xf]
      %v4335 = vld [vmem:[%s4324 + $0x28] sm:$0xf]
      %v4336 = vld [vmem:[%s4324 + $0x2c] sm:$0xf]
      %v4337 = vld [vmem:[%s4324 + $0x30] sm:$0xf]
      %v4338 = vld [vmem:[%s4324 + $0x34] sm:$0xf]
      %v4339 = vld [vmem:[%s4324 + $0x38] sm:$0xf]
      %v4340 = vld [vmem:[%s4324 + $0x3c] sm:$0xf]
      %v4341 = vunpack.c.l.b16 %v4271
      %v4342 = vunpack.c.l.b16 %v4274
      %v4343 = vunpack.c.l.b16 %v4278
      %v4344 = vunpack.c.l.b16 %v4281
      %v4345 = vunpack.c.l.b16 %v4285
      %v4346 = vunpack.c.l.b16 %v4288
      %v4347 = vunpack.c.l.b16 %v4292
      %v4348 = vunpack.c.l.b16 %v4295
      %v4349 = vunpack.c.l.b16 %v4299
      %v4350 = vunpack.c.l.b16 %v4302
      %v4351 = vunpack.c.l.b16 %v4306
      %v4352 = vunpack.c.l.b16 %v4309
      %v4353 = vunpack.c.l.b16 %v4313
      %v4354 = vunpack.c.l.b16 %v4316
      %v4355 = vunpack.c.l.b16 %v4320
      %v4356 = vunpack.c.l.b16 %v4323
      %v4357 = vpack.c.b16 %v4342, %v4341
      %v4358 = vpack.c.b16 %v4344, %v4343
      %v4359 = vpack.c.b16 %v4346, %v4345
      %v4360 = vpack.c.b16 %v4348, %v4347
      %v4361 = vpack.c.b16 %v4350, %v4349
      %v4362 = vpack.c.b16 %v4352, %v4351
      %v4363 = vpack.c.b16 %v4354, %v4353
      %v4364 = vpack.c.b16 %v4356, %v4355
      %v4389 = vunpack.c.l.b16 %v4325
      %v4390 = vunpack.c.l.b16 %v4326
      %v4391 = vunpack.c.l.b16 %v4327
      %v4392 = vunpack.c.l.b16 %v4328
      %v4393 = vunpack.c.l.b16 %v4329
      %v4394 = vunpack.c.l.b16 %v4330
      %v4395 = vunpack.c.l.b16 %v4331
      %v4396 = vunpack.c.l.b16 %v4332
      %v4397 = vunpack.c.l.b16 %v4333
      %v4398 = vunpack.c.l.b16 %v4334
      %v4399 = vunpack.c.l.b16 %v4335
      %v4400 = vunpack.c.l.b16 %v4336
      %v4401 = vunpack.c.l.b16 %v4337
      %v4402 = vunpack.c.l.b16 %v4338
      %v4403 = vunpack.c.l.b16 %v4339
      %v4404 = vunpack.c.l.b16 %v4340
      %v4405 = vpack.c.b16 %v4390, %v4389
      %v4406 = vpack.c.b16 %v4392, %v4391
      %v4407 = vpack.c.b16 %v4394, %v4393
      %v4408 = vpack.c.b16 %v4396, %v4395
      %v4409 = vpack.c.b16 %v4398, %v4397
      %v4410 = vpack.c.b16 %v4400, %v4399
      %v4411 = vpack.c.b16 %v4402, %v4401
      %v4412 = vpack.c.b16 %v4404, %v4403
      %4421 = vmatprep.subr.bf16.mxu0 0
      %4422 = vmatpush1.bf16.msra.mxu0 %v4405
      %4423 = vmatprep.subr.bf16.mxu0 0
      %4424 = vmatpush1.bf16.msra.mxu0 %v4406
      %4425 = vmatprep.subr.bf16.mxu0 0
      %4426 = vmatpush1.bf16.msra.mxu0 %v4407
      %4427 = vmatprep.subr.bf16.mxu0 0
      %4428 = vmatpush1.bf16.msra.mxu0 %v4408
      %4429 = vmatprep.subr.bf16.mxu0 0
      %4430 = vmatpush1.bf16.msra.mxu0 %v4409
      %4431 = vmatprep.subr.bf16.mxu0 0
      %4432 = vmatpush1.bf16.msra.mxu0 %v4410
      %4433 = vmatprep.subr.bf16.mxu0 0
      %4434 = vmatpush1.bf16.msra.mxu0 %v4411
      %4435 = vmatprep.subr.bf16.mxu0 0
      %4436 = vmatpush1.bf16.msra.mxu0 %v4412
      %4437 = vmatprep.subr.bf16.mxu0 0
      %4438 = vmatpush1.bf16.msra.mxu0 0
      %4439 = vmatprep.subr.bf16.mxu0 0
      %4440 = vmatpush1.bf16.msra.mxu0 0
      %4441 = vmatprep.subr.bf16.mxu0 0
      %4442 = vmatpush1.bf16.msra.mxu0 0
      %4443 = vmatprep.subr.bf16.mxu0 0
      %4444 = vmatpush1.bf16.msra.mxu0 0
      %4445 = vmatprep.subr.bf16.mxu0 0
      %4446 = vmatpush1.bf16.msra.mxu0 0
      %4447 = vmatprep.subr.bf16.mxu0 0
      %4448 = vmatpush1.bf16.msra.mxu0 0
      %4449 = vmatprep.subr.bf16.mxu0 0
      %4450 = vmatpush1.bf16.msra.mxu0 0
      %4451 = vmatprep.subr.bf16.mxu0 0
      %4452 = vmatpush1.bf16.msra.mxu0 0
      %4453 = vmatprep.mubr.bf16.mxu0 0
      %4454 = vmatmul.mubr.bf16.gmra.mrb[0].mxu0 %v4357
      %v4455 = vpop.f32.mrb[0].mxu0
      %v4456 = vadd.f32 0.0, %v4455
      %v4457 = vpop.f32.mrb[0].mxu0
      %v4458 = vpop.f32.mrb[0].mxu0
      %v4459 = vadd.f32 0.0, %v4458
      %v4460 = vpop.f32.mrb[0].mxu0
      %4461 = vmatprep.mubr.bf16.mxu0 0
      %4462 = vmatmul.mubr.bf16.gmra.mrb[0].mxu0 %v4358
      %v4463 = vpop.f32.mrb[0].mxu0
      %v4464 = vadd.f32 0.0, %v4463
      %v4465 = vpop.f32.mrb[0].mxu0
      %v4466 = vpop.f32.mrb[0].mxu0
      %v4467 = vadd.f32 0.0, %v4466
      %v4468 = vpop.f32.mrb[0].mxu0
      %4469 = vmatprep.mubr.bf16.mxu0 0
      %4470 = vmatmul.mubr.bf16.gmra.mrb[0].mxu0 %v4359
      %v4471 = vpop.f32.mrb[0].mxu0
      %v4472 = vadd.f32 0.0, %v4471
      %v4473 = vpop.f32.mrb[0].mxu0
      %v4474 = vpop.f32.mrb[0].mxu0
      %v4475 = vadd.f32 0.0, %v4474
      %v4476 = vpop.f32.mrb[0].mxu0
      %4477 = vmatprep.mubr.bf16.mxu0 0
      %4478 = vmatmul.mubr.bf16.gmra.mrb[0].mxu0 %v4360
      %v4479 = vpop.f32.mrb[0].mxu0
      %v4480 = vadd.f32 0.0, %v4479
      %v4481 = vpop.f32.mrb[0].mxu0
      %v4482 = vpop.f32.mrb[0].mxu0
      %v4483 = vadd.f32 0.0, %v4482
      %v4484 = vpop.f32.mrb[0].mxu0
      %4485 = vmatprep.mubr.bf16.mxu0 0
      %4486 = vmatmul.mubr.bf16.gmra.mrb[0].mxu0 %v4361
      %v4487 = vpop.f32.mrb[0].mxu0
      %v4488 = vadd.f32 0.0, %v4487
      %v4489 = vpop.f32.mrb[0].mxu0
      %v4490 = vpop.f32.mrb[0].mxu0
      %v4491 = vadd.f32 0.0, %v4490
      %v4492 = vpop.f32.mrb[0].mxu0
      %4493 = vmatprep.mubr.bf16.mxu0 0
      %4494 = vmatmul.mubr.bf16.gmra.mrb[0].mxu0 %v4362
      %v4495 = vpop.f32.mrb[0].mxu0
      %v4496 = vadd.f32 0.0, %v4495
      %v4497 = vpop.f32.mrb[0].mxu0
      %v4498 = vpop.f32.mrb[0].mxu0
      %v4499 = vadd.f32 0.0, %v4498
      %v4500 = vpop.f32.mrb[0].mxu0
      %4501 = vmatprep.mubr.bf16.mxu0 0
      %4502 = vmatmul.mubr.bf16.gmra.mrb[0].mxu0 %v4363
      %v4503 = vpop.f32.mrb[0].mxu0
      %v4504 = vadd.f32 0.0, %v4503
      %v4505 = vpop.f32.mrb[0].mxu0
      %v4506 = vpop.f32.mrb[0].mxu0
      %v4507 = vadd.f32 0.0, %v4506
      %v4508 = vpop.f32.mrb[0].mxu0
      %4509 = vmatprep.mubr.bf16.mxu0 0
      %4510 = vmatmul.mubr.bf16.gmra.mrb[0].mxu0 %v4364
      %v4511 = vpop.f32.mrb[0].mxu0
      %v4512 = vadd.f32 0.0, %v4511
      %v4513 = vpop.f32.mrb[0].mxu0
      %v4514 = vpop.f32.mrb[0].mxu0
      %v4515 = vadd.f32 0.0, %v4514
      %v4516 = vpop.f32.mrb[0].mxu0
      %4517 = vdwg.mxu0
      %v4518 = vadd.f32 %v4179, %v4456
      %v4519 = vadd.f32 %v4182, %v4459
      %v4520 = vadd.f32 %v4187, %v4464
      %v4521 = vadd.f32 %v4190, %v4467
      %v4522 = vadd.f32 %v4195, %v4472
      %v4523 = vadd.f32 %v4198, %v4475
      %v4524 = vadd.f32 %v4203, %v4480
      %v4525 = vadd.f32 %v4206, %v4483
      %v4526 = vadd.f32 %v4211, %v4488
      %v4527 = vadd.f32 %v4214, %v4491
      %v4528 = vadd.f32 %v4219, %v4496
      %v4529 = vadd.f32 %v4222, %v4499
      %v4530 = vadd.f32 %v4227, %v4504
      %v4531 = vadd.f32 %v4230, %v4507
      %v4532 = vadd.f32 %v4235, %v4512
      %v4533 = vadd.f32 %v4238, %v4515
      %v4534 = vld [vmem:[#allocation3] sm:$0xf]
      %v4535 = vld [vmem:[#allocation3 + $0x4] sm:$0xf]
      %v4536 = vld [vmem:[#allocation3 + $0xc] sm:$0xf]
      %v4537 = vld [vmem:[#allocation3 + $0x10] sm:$0xf]
      %v4538 = vld [vmem:[#allocation3 + $0x18] sm:$0xf]
      %v4539 = vld [vmem:[#allocation3 + $0x1c] sm:$0xf]
      %v4540 = vld [vmem:[#allocation3 + $0x24] sm:$0xf]
      %v4541 = vld [vmem:[#allocation3 + $0x28] sm:$0xf]
      %v4542 = vld [vmem:[#allocation3 + $0x30] sm:$0xf]
      %v4543 = vld [vmem:[#allocation3 + $0x34] sm:$0xf]
      %v4544 = vld [vmem:[#allocation3 + $0x3c] sm:$0xf]
      %v4545 = vld [vmem:[#allocation3 + $0x40] sm:$0xf]
      %v4546 = vld [vmem:[#allocation3 + $0x48] sm:$0xf]
      %v4547 = vld [vmem:[#allocation3 + $0x4c] sm:$0xf]
      %v4548 = vld [vmem:[#allocation3 + $0x54] sm:$0xf]
      %v4549 = vld [vmem:[#allocation3 + $0x58] sm:$0xf]
      %s4550 = scalar_lea.vmem %s2, 192
      %v4551 = vld [vmem:[%s4550] sm:$0xf]
      %v4552 = vld [vmem:[%s4550 + $0x4] sm:$0xf]
      %v4553 = vld [vmem:[%s4550 + $0x8] sm:$0xf]
      %v4554 = vld [vmem:[%s4550 + $0xc] sm:$0xf]
      %v4555 = vld [vmem:[%s4550 + $0x10] sm:$0xf]
      %v4556 = vld [vmem:[%s4550 + $0x14] sm:$0xf]
      %v4557 = vld [vmem:[%s4550 + $0x18] sm:$0xf]
      %v4558 = vld [vmem:[%s4550 + $0x1c] sm:$0xf]
      %v4559 = vld [vmem:[%s4550 + $0x20] sm:$0xf]
      %v4560 = vld [vmem:[%s4550 + $0x24] sm:$0xf]
      %v4561 = vld [vmem:[%s4550 + $0x28] sm:$0xf]
      %v4562 = vld [vmem:[%s4550 + $0x2c] sm:$0xf]
      %v4563 = vld [vmem:[%s4550 + $0x30] sm:$0xf]
      %v4564 = vld [vmem:[%s4550 + $0x34] sm:$0xf]
      %v4565 = vld [vmem:[%s4550 + $0x38] sm:$0xf]
      %v4566 = vld [vmem:[%s4550 + $0x3c] sm:$0xf]
      %v4583 = vunpack.c.l.b16 %v4534
      %v4584 = vunpack.c.l.b16 %v4535
      %v4585 = vunpack.c.l.b16 %v4536
      %v4586 = vunpack.c.l.b16 %v4537
      %v4587 = vunpack.c.l.b16 %v4538
      %v4588 = vunpack.c.l.b16 %v4539
      %v4589 = vunpack.c.l.b16 %v4540
      %v4590 = vunpack.c.l.b16 %v4541
      %v4591 = vunpack.c.l.b16 %v4542
      %v4592 = vunpack.c.l.b16 %v4543
      %v4593 = vunpack.c.l.b16 %v4544
      %v4594 = vunpack.c.l.b16 %v4545
      %v4595 = vunpack.c.l.b16 %v4546
      %v4596 = vunpack.c.l.b16 %v4547
      %v4597 = vunpack.c.l.b16 %v4548
      %v4598 = vunpack.c.l.b16 %v4549
      %v4599 = vpack.c.b16 %v4584, %v4583
      %v4600 = vpack.c.b16 %v4586, %v4585
      %v4601 = vpack.c.b16 %v4588, %v4587
      %v4602 = vpack.c.b16 %v4590, %v4589
      %v4603 = vpack.c.b16 %v4592, %v4591
      %v4604 = vpack.c.b16 %v4594, %v4593
      %v4605 = vpack.c.b16 %v4596, %v4595
      %v4606 = vpack.c.b16 %v4598, %v4597
      %v4631 = vunpack.c.l.b16 %v4551
      %v4632 = vunpack.c.l.b16 %v4552
      %v4633 = vunpack.c.l.b16 %v4553
      %v4634 = vunpack.c.l.b16 %v4554
      %v4635 = vunpack.c.l.b16 %v4555
      %v4636 = vunpack.c.l.b16 %v4556
      %v4637 = vunpack.c.l.b16 %v4557
      %v4638 = vunpack.c.l.b16 %v4558
      %v4639 = vunpack.c.l.b16 %v4559
      %v4640 = vunpack.c.l.b16 %v4560
      %v4641 = vunpack.c.l.b16 %v4561
      %v4642 = vunpack.c.l.b16 %v4562
      %v4643 = vunpack.c.l.b16 %v4563
      %v4644 = vunpack.c.l.b16 %v4564
      %v4645 = vunpack.c.l.b16 %v4565
      %v4646 = vunpack.c.l.b16 %v4566
      %v4647 = vpack.c.b16 %v4632, %v4631
      %v4648 = vpack.c.b16 %v4634, %v4633
      %v4649 = vpack.c.b16 %v4636, %v4635
      %v4650 = vpack.c.b16 %v4638, %v4637
      %v4651 = vpack.c.b16 %v4640, %v4639
      %v4652 = vpack.c.b16 %v4642, %v4641
      %v4653 = vpack.c.b16 %v4644, %v4643
      %v4654 = vpack.c.b16 %v4646, %v4645
      %4663 = vmatprep.subr.bf16.mxu0 0
      %4664 = vmatpush1.bf16.msra.mxu0 %v4647
      %4665 = vmatprep.subr.bf16.mxu0 0
      %4666 = vmatpush1.bf16.msra.mxu0 %v4648
      %4667 = vmatprep.subr.bf16.mxu0 0
      %4668 = vmatpush1.bf16.msra.mxu0 %v4649
      %4669 = vmatprep.subr.bf16.mxu0 0
      %4670 = vmatpush1.bf16.msra.mxu0 %v4650
      %4671 = vmatprep.subr.bf16.mxu0 0
      %4672 = vmatpush1.bf16.msra.mxu0 %v4651
      %4673 = vmatprep.subr.bf16.mxu0 0
      %4674 = vmatpush1.bf16.msra.mxu0 %v4652
      %4675 = vmatprep.subr.bf16.mxu0 0
      %4676 = vmatpush1.bf16.msra.mxu0 %v4653
      %4677 = vmatprep.subr.bf16.mxu0 0
      %4678 = vmatpush1.bf16.msra.mxu0 %v4654
      %4679 = vmatprep.subr.bf16.mxu0 0
      %4680 = vmatpush1.bf16.msra.mxu0 0
      %4681 = vmatprep.subr.bf16.mxu0 0
      %4682 = vmatpush1.bf16.msra.mxu0 0
      %4683 = vmatprep.subr.bf16.mxu0 0
      %4684 = vmatpush1.bf16.msra.mxu0 0
      %4685 = vmatprep.subr.bf16.mxu0 0
      %4686 = vmatpush1.bf16.msra.mxu0 0
      %4687 = vmatprep.subr.bf16.mxu0 0
      %4688 = vmatpush1.bf16.msra.mxu0 0
      %4689 = vmatprep.subr.bf16.mxu0 0
      %4690 = vmatpush1.bf16.msra.mxu0 0
      %4691 = vmatprep.subr.bf16.mxu0 0
      %4692 = vmatpush1.bf16.msra.mxu0 0
      %4693 = vmatprep.subr.bf16.mxu0 0
      %4694 = vmatpush1.bf16.msra.mxu0 0
      %4695 = vmatprep.mubr.bf16.mxu0 0
      %4696 = vmatmul.mubr.bf16.gmra.mrb[0].mxu0 %v4599
      %v4697 = vpop.f32.mrb[0].mxu0
      %v4698 = vadd.f32 0.0, %v4697
      %v4699 = vpop.f32.mrb[0].mxu0
      %v4700 = vpop.f32.mrb[0].mxu0
      %v4701 = vadd.f32 0.0, %v4700
      %v4702 = vpop.f32.mrb[0].mxu0
      %4703 = vmatprep.mubr.bf16.mxu0 0
      %4704 = vmatmul.mubr.bf16.gmra.mrb[0].mxu0 %v4600
      %v4705 = vpop.f32.mrb[0].mxu0
      %v4706 = vadd.f32 0.0, %v4705
      %v4707 = vpop.f32.mrb[0].mxu0
      %v4708 = vpop.f32.mrb[0].mxu0
      %v4709 = vadd.f32 0.0, %v4708
      %v4710 = vpop.f32.mrb[0].mxu0
      %4711 = vmatprep.mubr.bf16.mxu0 0
      %4712 = vmatmul.mubr.bf16.gmra.mrb[0].mxu0 %v4601
      %v4713 = vpop.f32.mrb[0].mxu0
      %v4714 = vadd.f32 0.0, %v4713
      %v4715 = vpop.f32.mrb[0].mxu0
      %v4716 = vpop.f32.mrb[0].mxu0
      %v4717 = vadd.f32 0.0, %v4716
      %v4718 = vpop.f32.mrb[0].mxu0
      %4719 = vmatprep.mubr.bf16.mxu0 0
      %4720 = vmatmul.mubr.bf16.gmra.mrb[0].mxu0 %v4602
      %v4721 = vpop.f32.mrb[0].mxu0
      %v4722 = vadd.f32 0.0, %v4721
      %v4723 = vpop.f32.mrb[0].mxu0
      %v4724 = vpop.f32.mrb[0].mxu0
      %v4725 = vadd.f32 0.0, %v4724
      %v4726 = vpop.f32.mrb[0].mxu0
      %4727 = vmatprep.mubr.bf16.mxu0 0
      %4728 = vmatmul.mubr.bf16.gmra.mrb[0].mxu0 %v4603
      %v4729 = vpop.f32.mrb[0].mxu0
      %v4730 = vadd.f32 0.0, %v4729
      %v4731 = vpop.f32.mrb[0].mxu0
      %v4732 = vpop.f32.mrb[0].mxu0
      %v4733 = vadd.f32 0.0, %v4732
      %v4734 = vpop.f32.mrb[0].mxu0
      %4735 = vmatprep.mubr.bf16.mxu0 0
      %4736 = vmatmul.mubr.bf16.gmra.mrb[0].mxu0 %v4604
      %v4737 = vpop.f32.mrb[0].mxu0
      %v4738 = vadd.f32 0.0, %v4737
      %v4739 = vpop.f32.mrb[0].mxu0
      %v4740 = vpop.f32.mrb[0].mxu0
      %v4741 = vadd.f32 0.0, %v4740
      %v4742 = vpop.f32.mrb[0].mxu0
      %4743 = vmatprep.mubr.bf16.mxu0 0
      %4744 = vmatmul.mubr.bf16.gmra.mrb[0].mxu0 %v4605
      %v4745 = vpop.f32.mrb[0].mxu0
      %v4746 = vadd.f32 0.0, %v4745
      %v4747 = vpop.f32.mrb[0].mxu0
      %v4748 = vpop.f32.mrb[0].mxu0
      %v4749 = vadd.f32 0.0, %v4748
      %v4750 = vpop.f32.mrb[0].mxu0
      %4751 = vmatprep.mubr.bf16.mxu0 0
      %4752 = vmatmul.mubr.bf16.gmra.mrb[0].mxu0 %v4606
      %v4753 = vpop.f32.mrb[0].mxu0
      %v4754 = vadd.f32 0.0, %v4753
      %v4755 = vpop.f32.mrb[0].mxu0
      %v4756 = vpop.f32.mrb[0].mxu0
      %v4757 = vadd.f32 0.0, %v4756
      %v4758 = vpop.f32.mrb[0].mxu0
      %4759 = vdwg.mxu0
      %v4760 = vadd.f32 %v4518, %v4698
      %v4761 = vadd.f32 %v4519, %v4701
      %v4762 = vadd.f32 %v4520, %v4706
      %v4763 = vadd.f32 %v4521, %v4709
      %v4764 = vadd.f32 %v4522, %v4714
      %v4765 = vadd.f32 %v4523, %v4717
      %v4766 = vadd.f32 %v4524, %v4722
      %v4767 = vadd.f32 %v4525, %v4725
      %v4768 = vadd.f32 %v4526, %v4730
      %v4769 = vadd.f32 %v4527, %v4733
      %v4770 = vadd.f32 %v4528, %v4738
      %v4771 = vadd.f32 %v4529, %v4741
      %v4772 = vadd.f32 %v4530, %v4746
      %v4773 = vadd.f32 %v4531, %v4749
      %v4774 = vadd.f32 %v4532, %v4754
      %v4775 = vadd.f32 %v4533, %v4757
      %v4776 = vld [vmem:[#allocation3] sm:$0xf]
      %v4777 = vld [vmem:[#allocation3 + $0x4] sm:$0xf]
      %v4778 = vld [vmem:[#allocation3 + $0x8] sm:$0x1]
      %v4779 = vld [vmem:[#allocation3 + $0xc] sm:$0xf]
      %v4780 = vld [vmem:[#allocation3 + $0x10] sm:$0xf]
      %v4781 = vld [vmem:[#allocation3 + $0x14] sm:$0x1]
      %v4782 = vld [vmem:[#allocation3 + $0x18] sm:$0xf]
      %v4783 = vld [vmem:[#allocation3 + $0x1c] sm:$0xf]
      %v4784 = vld [vmem:[#allocation3 + $0x20] sm:$0x1]
      %v4785 = vld [vmem:[#allocation3 + $0x24] sm:$0xf]
      %v4786 = vld [vmem:[#allocation3 + $0x28] sm:$0xf]
      %v4787 = vld [vmem:[#allocation3 + $0x2c] sm:$0x1]
      %v4788 = vld [vmem:[#allocation3 + $0x30] sm:$0xf]
      %v4789 = vld [vmem:[#allocation3 + $0x34] sm:$0xf]
      %v4790 = vld [vmem:[#allocation3 + $0x38] sm:$0x1]
      %v4791 = vld [vmem:[#allocation3 + $0x3c] sm:$0xf]
      %v4792 = vld [vmem:[#allocation3 + $0x40] sm:$0xf]
      %v4793 = vld [vmem:[#allocation3 + $0x44] sm:$0x1]
      %v4794 = vld [vmem:[#allocation3 + $0x48] sm:$0xf]
      %v4795 = vld [vmem:[#allocation3 + $0x4c] sm:$0xf]
      %v4796 = vld [vmem:[#allocation3 + $0x50] sm:$0x1]
      %v4797 = vld [vmem:[#allocation3 + $0x54] sm:$0xf]
      %v4798 = vld [vmem:[#allocation3 + $0x58] sm:$0xf]
      %v4799 = vld [vmem:[#allocation3 + $0x5c] sm:$0x1]
      %v4801 = vshrl.u32 %v4776, 16
      %v4803 = vrot.slane %v4801, 4
      %v4804 = vshll.u32 %v4776, 16
      %v4806 = vrot.slane %v4804, 5
      %v4807 = vor.u32 %v4803, %v4806
      %v4808 = vrot.slane %v4807, 4
      %v4810 = vshll.u32 %v4777, 16
      %v4812 = vrot.slane %v4810, 5
      %v4813 = vsel %vm3661, %v4808, %v4812
      %v4814 = vshrl.u32 %v4777, 16
      %v4816 = vrot.slane %v4814, 4
      %v4817 = vor.u32 %v4816, %v4812
      %v4818 = vrot.slane %v4817, 4
      %v4820 = vshll.u32 %v4778, 16
      %v4822 = vrot.slane %v4820, 5
      %v4823 = vsel %vm3661, %v4818, %v4822
      %v4825 = vshrl.u32 %v4779, 16
      %v4827 = vrot.slane %v4825, 4
      %v4828 = vshll.u32 %v4779, 16
      %v4830 = vrot.slane %v4828, 5
      %v4831 = vor.u32 %v4827, %v4830
      %v4832 = vrot.slane %v4831, 4
      %v4834 = vshll.u32 %v4780, 16
      %v4836 = vrot.slane %v4834, 5
      %v4837 = vsel %vm3661, %v4832, %v4836
      %v4838 = vshrl.u32 %v4780, 16
      %v4840 = vrot.slane %v4838, 4
      %v4841 = vor.u32 %v4840, %v4836
      %v4842 = vrot.slane %v4841, 4
      %v4844 = vshll.u32 %v4781, 16
      %v4846 = vrot.slane %v4844, 5
      %v4847 = vsel %vm3661, %v4842, %v4846
      %v4849 = vshrl.u32 %v4782, 16
      %v4851 = vrot.slane %v4849, 4
      %v4852 = vshll.u32 %v4782, 16
      %v4854 = vrot.slane %v4852, 5
      %v4855 = vor.u32 %v4851, %v4854
      %v4856 = vrot.slane %v4855, 4
      %v4858 = vshll.u32 %v4783, 16
      %v4860 = vrot.slane %v4858, 5
      %v4861 = vsel %vm3661, %v4856, %v4860
      %v4862 = vshrl.u32 %v4783, 16
      %v4864 = vrot.slane %v4862, 4
      %v4865 = vor.u32 %v4864, %v4860
      %v4866 = vrot.slane %v4865, 4
      %v4868 = vshll.u32 %v4784, 16
      %v4870 = vrot.slane %v4868, 5
      %v4871 = vsel %vm3661, %v4866, %v4870
      %v4873 = vshrl.u32 %v4785, 16
      %v4875 = vrot.slane %v4873, 4
      %v4876 = vshll.u32 %v4785, 16
      %v4878 = vrot.slane %v4876, 5
      %v4879 = vor.u32 %v4875, %v4878
      %v4880 = vrot.slane %v4879, 4
      %v4882 = vshll.u32 %v4786, 16
      %v4884 = vrot.slane %v4882, 5
      %v4885 = vsel %vm3661, %v4880, %v4884
      %v4886 = vshrl.u32 %v4786, 16
      %v4888 = vrot.slane %v4886, 4
      %v4889 = vor.u32 %v4888, %v4884
      %v4890 = vrot.slane %v4889, 4
      %v4892 = vshll.u32 %v4787, 16
      %v4894 = vrot.slane %v4892, 5
      %v4895 = vsel %vm3661, %v4890, %v4894
      %v4897 = vshrl.u32 %v4788, 16
      %v4899 = vrot.slane %v4897, 4
      %v4900 = vshll.u32 %v4788, 16
      %v4902 = vrot.slane %v4900, 5
      %v4903 = vor.u32 %v4899, %v4902
      %v4904 = vrot.slane %v4903, 4
      %v4906 = vshll.u32 %v4789, 16
      %v4908 = vrot.slane %v4906, 5
      %v4909 = vsel %vm3661, %v4904, %v4908
      %v4910 = vshrl.u32 %v4789, 16
      %v4912 = vrot.slane %v4910, 4
      %v4913 = vor.u32 %v4912, %v4908
      %v4914 = vrot.slane %v4913, 4
      %v4916 = vshll.u32 %v4790, 16
      %v4918 = vrot.slane %v4916, 5
      %v4919 = vsel %vm3661, %v4914, %v4918
      %v4921 = vshrl.u32 %v4791, 16
      %v4923 = vrot.slane %v4921, 4
      %v4924 = vshll.u32 %v4791, 16
      %v4926 = vrot.slane %v4924, 5
      %v4927 = vor.u32 %v4923, %v4926
      %v4928 = vrot.slane %v4927, 4
      %v4930 = vshll.u32 %v4792, 16
      %v4932 = vrot.slane %v4930, 5
      %v4933 = vsel %vm3661, %v4928, %v4932
      %v4934 = vshrl.u32 %v4792, 16
      %v4936 = vrot.slane %v4934, 4
      %v4937 = vor.u32 %v4936, %v4932
      %v4938 = vrot.slane %v4937, 4
      %v4940 = vshll.u32 %v4793, 16
      %v4942 = vrot.slane %v4940, 5
      %v4943 = vsel %vm3661, %v4938, %v4942
      %v4945 = vshrl.u32 %v4794, 16
      %v4947 = vrot.slane %v4945, 4
      %v4948 = vshll.u32 %v4794, 16
      %v4950 = vrot.slane %v4948, 5
      %v4951 = vor.u32 %v4947, %v4950
      %v4952 = vrot.slane %v4951, 4
      %v4954 = vshll.u32 %v4795, 16
      %v4956 = vrot.slane %v4954, 5
      %v4957 = vsel %vm3661, %v4952, %v4956
      %v4958 = vshrl.u32 %v4795, 16
      %v4960 = vrot.slane %v4958, 4
      %v4961 = vor.u32 %v4960, %v4956
      %v4962 = vrot.slane %v4961, 4
      %v4964 = vshll.u32 %v4796, 16
      %v4966 = vrot.slane %v4964, 5
      %v4967 = vsel %vm3661, %v4962, %v4966
      %v4969 = vshrl.u32 %v4797, 16
      %v4971 = vrot.slane %v4969, 4
      %v4972 = vshll.u32 %v4797, 16
      %v4974 = vrot.slane %v4972, 5
      %v4975 = vor.u32 %v4971, %v4974
      %v4976 = vrot.slane %v4975, 4
      %v4978 = vshll.u32 %v4798, 16
      %v4980 = vrot.slane %v4978, 5
      %v4981 = vsel %vm3661, %v4976, %v4980
      %v4982 = vshrl.u32 %v4798, 16
      %v4984 = vrot.slane %v4982, 4
      %v4985 = vor.u32 %v4984, %v4980
      %v4986 = vrot.slane %v4985, 4
      %v4988 = vshll.u32 %v4799, 16
      %v4990 = vrot.slane %v4988, 5
      %v4991 = vsel %vm3661, %v4986, %v4990
      %s4992 = scalar_lea.vmem %s2, 256
      %v4993 = vld [vmem:[%s4992] sm:$0xf]
      %v4994 = vld [vmem:[%s4992 + $0x4] sm:$0xf]
      %v4995 = vld [vmem:[%s4992 + $0x8] sm:$0xf]
      %v4996 = vld [vmem:[%s4992 + $0xc] sm:$0xf]
      %v4997 = vld [vmem:[%s4992 + $0x10] sm:$0xf]
      %v4998 = vld [vmem:[%s4992 + $0x14] sm:$0xf]
      %v4999 = vld [vmem:[%s4992 + $0x18] sm:$0xf]
      %v5000 = vld [vmem:[%s4992 + $0x1c] sm:$0xf]
      %v5001 = vld [vmem:[%s4992 + $0x20] sm:$0xf]
      %v5002 = vld [vmem:[%s4992 + $0x24] sm:$0xf]
      %v5003 = vld [vmem:[%s4992 + $0x28] sm:$0xf]
      %v5004 = vld [vmem:[%s4992 + $0x2c] sm:$0xf]
      %v5005 = vld [vmem:[%s4992 + $0x30] sm:$0xf]
      %v5006 = vld [vmem:[%s4992 + $0x34] sm:$0xf]
      %v5007 = vld [vmem:[%s4992 + $0x38] sm:$0xf]
      %v5008 = vld [vmem:[%s4992 + $0x3c] sm:$0xf]
      %v5009 = vunpack.c.l.b16 %v4813
      %v5010 = vunpack.c.l.b16 %v4823
      %v5011 = vunpack.c.l.b16 %v4837
      %v5012 = vunpack.c.l.b16 %v4847
      %v5013 = vunpack.c.l.b16 %v4861
      %v5014 = vunpack.c.l.b16 %v4871
      %v5015 = vunpack.c.l.b16 %v4885
      %v5016 = vunpack.c.l.b16 %v4895
      %v5017 = vunpack.c.l.b16 %v4909
      %v5018 = vunpack.c.l.b16 %v4919
      %v5019 = vunpack.c.l.b16 %v4933
      %v5020 = vunpack.c.l.b16 %v4943
      %v5021 = vunpack.c.l.b16 %v4957
      %v5022 = vunpack.c.l.b16 %v4967
      %v5023 = vunpack.c.l.b16 %v4981
      %v5024 = vunpack.c.l.b16 %v4991
      %v5025 = vpack.c.b16 %v5010, %v5009
      %v5026 = vpack.c.b16 %v5012, %v5011
      %v5027 = vpack.c.b16 %v5014, %v5013
      %v5028 = vpack.c.b16 %v5016, %v5015
      %v5029 = vpack.c.b16 %v5018, %v5017
      %v5030 = vpack.c.b16 %v5020, %v5019
      %v5031 = vpack.c.b16 %v5022, %v5021
      %v5032 = vpack.c.b16 %v5024, %v5023
      %v5057 = vunpack.c.l.b16 %v4993
      %v5058 = vunpack.c.l.b16 %v4994
      %v5059 = vunpack.c.l.b16 %v4995
      %v5060 = vunpack.c.l.b16 %v4996
      %v5061 = vunpack.c.l.b16 %v4997
      %v5062 = vunpack.c.l.b16 %v4998
      %v5063 = vunpack.c.l.b16 %v4999
      %v5064 = vunpack.c.l.b16 %v5000
      %v5065 = vunpack.c.l.b16 %v5001
      %v5066 = vunpack.c.l.b16 %v5002
      %v5067 = vunpack.c.l.b16 %v5003
      %v5068 = vunpack.c.l.b16 %v5004
      %v5069 = vunpack.c.l.b16 %v5005
      %v5070 = vunpack.c.l.b16 %v5006
      %v5071 = vunpack.c.l.b16 %v5007
      %v5072 = vunpack.c.l.b16 %v5008
      %v5073 = vpack.c.b16 %v5058, %v5057
      %v5074 = vpack.c.b16 %v5060, %v5059
      %v5075 = vpack.c.b16 %v5062, %v5061
      %v5076 = vpack.c.b16 %v5064, %v5063
      %v5077 = vpack.c.b16 %v5066, %v5065
      %v5078 = vpack.c.b16 %v5068, %v5067
      %v5079 = vpack.c.b16 %v5070, %v5069
      %v5080 = vpack.c.b16 %v5072, %v5071
      %5089 = vmatprep.subr.bf16.mxu0 0
      %5090 = vmatpush1.bf16.msra.mxu0 %v5073
      %5091 = vmatprep.subr.bf16.mxu0 0
      %5092 = vmatpush1.bf16.msra.mxu0 %v5074
      %5093 = vmatprep.subr.bf16.mxu0 0
      %5094 = vmatpush1.bf16.msra.mxu0 %v5075
      %5095 = vmatprep.subr.bf16.mxu0 0
      %5096 = vmatpush1.bf16.msra.mxu0 %v5076
      %5097 = vmatprep.subr.bf16.mxu0 0
      %5098 = vmatpush1.bf16.msra.mxu0 %v5077
      %5099 = vmatprep.subr.bf16.mxu0 0
      %5100 = vmatpush1.bf16.msra.mxu0 %v5078
      %5101 = vmatprep.subr.bf16.mxu0 0
      %5102 = vmatpush1.bf16.msra.mxu0 %v5079
      %5103 = vmatprep.subr.bf16.mxu0 0
      %5104 = vmatpush1.bf16.msra.mxu0 %v5080
      %5105 = vmatprep.subr.bf16.mxu0 0
      %5106 = vmatpush1.bf16.msra.mxu0 0
      %5107 = vmatprep.subr.bf16.mxu0 0
      %5108 = vmatpush1.bf16.msra.mxu0 0
      %5109 = vmatprep.subr.bf16.mxu0 0
      %5110 = vmatpush1.bf16.msra.mxu0 0
      %5111 = vmatprep.subr.bf16.mxu0 0
      %5112 = vmatpush1.bf16.msra.mxu0 0
      %5113 = vmatprep.subr.bf16.mxu0 0
      %5114 = vmatpush1.bf16.msra.mxu0 0
      %5115 = vmatprep.subr.bf16.mxu0 0
      %5116 = vmatpush1.bf16.msra.mxu0 0
      %5117 = vmatprep.subr.bf16.mxu0 0
      %5118 = vmatpush1.bf16.msra.mxu0 0
      %5119 = vmatprep.subr.bf16.mxu0 0
      %5120 = vmatpush1.bf16.msra.mxu0 0
      %5121 = vmatprep.mubr.bf16.mxu0 0
      %5122 = vmatmul.mubr.bf16.gmra.mrb[0].mxu0 %v5025
      %v5123 = vpop.f32.mrb[0].mxu0
      %v5124 = vadd.f32 0.0, %v5123
      %v5125 = vpop.f32.mrb[0].mxu0
      %v5126 = vpop.f32.mrb[0].mxu0
      %v5127 = vadd.f32 0.0, %v5126
      %v5128 = vpop.f32.mrb[0].mxu0
      %5129 = vmatprep.mubr.bf16.mxu0 0
      %5130 = vmatmul.mubr.bf16.gmra.mrb[0].mxu0 %v5026
      %v5131 = vpop.f32.mrb[0].mxu0
      %v5132 = vadd.f32 0.0, %v5131
      %v5133 = vpop.f32.mrb[0].mxu0
      %v5134 = vpop.f32.mrb[0].mxu0
      %v5135 = vadd.f32 0.0, %v5134
      %v5136 = vpop.f32.mrb[0].mxu0
      %5137 = vmatprep.mubr.bf16.mxu0 0
      %5138 = vmatmul.mubr.bf16.gmra.mrb[0].mxu0 %v5027
      %v5139 = vpop.f32.mrb[0].mxu0
      %v5140 = vadd.f32 0.0, %v5139
      %v5141 = vpop.f32.mrb[0].mxu0
      %v5142 = vpop.f32.mrb[0].mxu0
      %v5143 = vadd.f32 0.0, %v5142
      %v5144 = vpop.f32.mrb[0].mxu0
      %5145 = vmatprep.mubr.bf16.mxu0 0
      %5146 = vmatmul.mubr.bf16.gmra.mrb[0].mxu0 %v5028
      %v5147 = vpop.f32.mrb[0].mxu0
      %v5148 = vadd.f32 0.0, %v5147
      %v5149 = vpop.f32.mrb[0].mxu0
      %v5150 = vpop.f32.mrb[0].mxu0
      %v5151 = vadd.f32 0.0, %v5150
      %v5152 = vpop.f32.mrb[0].mxu0
      %5153 = vmatprep.mubr.bf16.mxu0 0
      %5154 = vmatmul.mubr.bf16.gmra.mrb[0].mxu0 %v5029
      %v5155 = vpop.f32.mrb[0].mxu0
      %v5156 = vadd.f32 0.0, %v5155
      %v5157 = vpop.f32.mrb[0].mxu0
      %v5158 = vpop.f32.mrb[0].mxu0
      %v5159 = vadd.f32 0.0, %v5158
      %v5160 = vpop.f32.mrb[0].mxu0
      %5161 = vmatprep.mubr.bf16.mxu0 0
      %5162 = vmatmul.mubr.bf16.gmra.mrb[0].mxu0 %v5030
      %v5163 = vpop.f32.mrb[0].mxu0
      %v5164 = vadd.f32 0.0, %v5163
      %v5165 = vpop.f32.mrb[0].mxu0
      %v5166 = vpop.f32.mrb[0].mxu0
      %v5167 = vadd.f32 0.0, %v5166
      %v5168 = vpop.f32.mrb[0].mxu0
      %5169 = vmatprep.mubr.bf16.mxu0 0
      %5170 = vmatmul.mubr.bf16.gmra.mrb[0].mxu0 %v5031
      %v5171 = vpop.f32.mrb[0].mxu0
      %v5172 = vadd.f32 0.0, %v5171
      %v5173 = vpop.f32.mrb[0].mxu0
      %v5174 = vpop.f32.mrb[0].mxu0
      %v5175 = vadd.f32 0.0, %v5174
      %v5176 = vpop.f32.mrb[0].mxu0
      %5177 = vmatprep.mubr.bf16.mxu0 0
      %5178 = vmatmul.mubr.bf16.gmra.mrb[0].mxu0 %v5032
      %v5179 = vpop.f32.mrb[0].mxu0
      %v5180 = vadd.f32 0.0, %v5179
      %v5181 = vpop.f32.mrb[0].mxu0
      %v5182 = vpop.f32.mrb[0].mxu0
      %v5183 = vadd.f32 0.0, %v5182
      %v5184 = vpop.f32.mrb[0].mxu0
      %5185 = vdwg.mxu0
      %v5186 = vadd.f32 %v4760, %v5124
      %v5187 = vadd.f32 %v4761, %v5127
      %v5188 = vadd.f32 %v4762, %v5132
      %v5189 = vadd.f32 %v4763, %v5135
      %v5190 = vadd.f32 %v4764, %v5140
      %v5191 = vadd.f32 %v4765, %v5143
      %v5192 = vadd.f32 %v4766, %v5148
      %v5193 = vadd.f32 %v4767, %v5151
      %v5194 = vadd.f32 %v4768, %v5156
      %v5195 = vadd.f32 %v4769, %v5159
      %v5196 = vadd.f32 %v4770, %v5164
      %v5197 = vadd.f32 %v4771, %v5167
      %v5198 = vadd.f32 %v4772, %v5172
      %v5199 = vadd.f32 %v4773, %v5175
      %v5200 = vadd.f32 %v4774, %v5180
      %v5201 = vadd.f32 %v4775, %v5183
      %v5202 = vld [vmem:[#allocation3] sm:$0xe]
      %v5203 = vld [vmem:[#allocation3 + $0xc] sm:$0xe]
      %v5204 = vld [vmem:[#allocation3 + $0x18] sm:$0xe]
      %v5205 = vld [vmem:[#allocation3 + $0x24] sm:$0xe]
      %v5206 = vld [vmem:[#allocation3 + $0x30] sm:$0xe]
      %v5207 = vld [vmem:[#allocation3 + $0x3c] sm:$0xe]
      %v5208 = vld [vmem:[#allocation3 + $0x48] sm:$0xe]
      %v5209 = vld [vmem:[#allocation3 + $0x54] sm:$0xe]
      %v5234 = vrot.slane %v5202, 5
      %v5235 = vrot.slane %v5234, 4
      %v5236 = vrot.slane %v4777, 5
      %v5237 = vsel %vm4267, %v5235, %v5236
      %v5238 = vrot.slane %v5236, 4
      %v5239 = vrot.slane %v4778, 5
      %v5240 = vsel %vm4267, %v5238, %v5239
      %v5241 = vrot.slane %v5203, 5
      %v5242 = vrot.slane %v5241, 4
      %v5243 = vrot.slane %v4780, 5
      %v5244 = vsel %vm4267, %v5242, %v5243
      %v5245 = vrot.slane %v5243, 4
      %v5246 = vrot.slane %v4781, 5
      %v5247 = vsel %vm4267, %v5245, %v5246
      %v5248 = vrot.slane %v5204, 5
      %v5249 = vrot.slane %v5248, 4
      %v5250 = vrot.slane %v4783, 5
      %v5251 = vsel %vm4267, %v5249, %v5250
      %v5252 = vrot.slane %v5250, 4
      %v5253 = vrot.slane %v4784, 5
      %v5254 = vsel %vm4267, %v5252, %v5253
      %v5255 = vrot.slane %v5205, 5
      %v5256 = vrot.slane %v5255, 4
      %v5257 = vrot.slane %v4786, 5
      %v5258 = vsel %vm4267, %v5256, %v5257
      %v5259 = vrot.slane %v5257, 4
      %v5260 = vrot.slane %v4787, 5
      %v5261 = vsel %vm4267, %v5259, %v5260
      %v5262 = vrot.slane %v5206, 5
      %v5263 = vrot.slane %v5262, 4
      %v5264 = vrot.slane %v4789, 5
      %v5265 = vsel %vm4267, %v5263, %v5264
      %v5266 = vrot.slane %v5264, 4
      %v5267 = vrot.slane %v4790, 5
      %v5268 = vsel %vm4267, %v5266, %v5267
      %v5269 = vrot.slane %v5207, 5
      %v5270 = vrot.slane %v5269, 4
      %v5271 = vrot.slane %v4792, 5
      %v5272 = vsel %vm4267, %v5270, %v5271
      %v5273 = vrot.slane %v5271, 4
      %v5274 = vrot.slane %v4793, 5
      %v5275 = vsel %vm4267, %v5273, %v5274
      %v5276 = vrot.slane %v5208, 5
      %v5277 = vrot.slane %v5276, 4
      %v5278 = vrot.slane %v4795, 5
      %v5279 = vsel %vm4267, %v5277, %v5278
      %v5280 = vrot.slane %v5278, 4
      %v5281 = vrot.slane %v4796, 5
      %v5282 = vsel %vm4267, %v5280, %v5281
      %v5283 = vrot.slane %v5209, 5
      %v5284 = vrot.slane %v5283, 4
      %v5285 = vrot.slane %v4798, 5
      %v5286 = vsel %vm4267, %v5284, %v5285
      %v5287 = vrot.slane %v5285, 4
      %v5288 = vrot.slane %v4799, 5
      %v5289 = vsel %vm4267, %v5287, %v5288
      %s5290 = scalar_lea.vmem %s2, 320
      %v5291 = vld [vmem:[%s5290] sm:$0xf]
      %v5292 = vld [vmem:[%s5290 + $0x4] sm:$0xf]
      %v5293 = vld [vmem:[%s5290 + $0x8] sm:$0xf]
      %v5294 = vld [vmem:[%s5290 + $0xc] sm:$0xf]
      %v5295 = vld [vmem:[%s5290 + $0x10] sm:$0xf]
      %v5296 = vld [vmem:[%s5290 + $0x14] sm:$0xf]
      %v5297 = vld [vmem:[%s5290 + $0x18] sm:$0xf]
      %v5298 = vld [vmem:[%s5290 + $0x1c] sm:$0xf]
      %v5299 = vld [vmem:[%s5290 + $0x20] sm:$0xf]
      %v5300 = vld [vmem:[%s5290 + $0x24] sm:$0xf]
      %v5301 = vld [vmem:[%s5290 + $0x28] sm:$0xf]
      %v5302 = vld [vmem:[%s5290 + $0x2c] sm:$0xf]
      %v5303 = vld [vmem:[%s5290 + $0x30] sm:$0xf]
      %v5304 = vld [vmem:[%s5290 + $0x34] sm:$0xf]
      %v5305 = vld [vmem:[%s5290 + $0x38] sm:$0xf]
      %v5306 = vld [vmem:[%s5290 + $0x3c] sm:$0xf]
      %v5307 = vunpack.c.l.b16 %v5237
      %v5308 = vunpack.c.l.b16 %v5240
      %v5309 = vunpack.c.l.b16 %v5244
      %v5310 = vunpack.c.l.b16 %v5247
      %v5311 = vunpack.c.l.b16 %v5251
      %v5312 = vunpack.c.l.b16 %v5254
      %v5313 = vunpack.c.l.b16 %v5258
      %v5314 = vunpack.c.l.b16 %v5261
      %v5315 = vunpack.c.l.b16 %v5265
      %v5316 = vunpack.c.l.b16 %v5268
      %v5317 = vunpack.c.l.b16 %v5272
      %v5318 = vunpack.c.l.b16 %v5275
      %v5319 = vunpack.c.l.b16 %v5279
      %v5320 = vunpack.c.l.b16 %v5282
      %v5321 = vunpack.c.l.b16 %v5286
      %v5322 = vunpack.c.l.b16 %v5289
      %v5323 = vpack.c.b16 %v5308, %v5307
      %v5324 = vpack.c.b16 %v5310, %v5309
      %v5325 = vpack.c.b16 %v5312, %v5311
      %v5326 = vpack.c.b16 %v5314, %v5313
      %v5327 = vpack.c.b16 %v5316, %v5315
      %v5328 = vpack.c.b16 %v5318, %v5317
      %v5329 = vpack.c.b16 %v5320, %v5319
      %v5330 = vpack.c.b16 %v5322, %v5321
      %v5355 = vunpack.c.l.b16 %v5291
      %v5356 = vunpack.c.l.b16 %v5292
      %v5357 = vunpack.c.l.b16 %v5293
      %v5358 = vunpack.c.l.b16 %v5294
      %v5359 = vunpack.c.l.b16 %v5295
      %v5360 = vunpack.c.l.b16 %v5296
      %v5361 = vunpack.c.l.b16 %v5297
      %v5362 = vunpack.c.l.b16 %v5298
      %v5363 = vunpack.c.l.b16 %v5299
      %v5364 = vunpack.c.l.b16 %v5300
      %v5365 = vunpack.c.l.b16 %v5301
      %v5366 = vunpack.c.l.b16 %v5302
      %v5367 = vunpack.c.l.b16 %v5303
      %v5368 = vunpack.c.l.b16 %v5304
      %v5369 = vunpack.c.l.b16 %v5305
      %v5370 = vunpack.c.l.b16 %v5306
      %v5371 = vpack.c.b16 %v5356, %v5355
      %v5372 = vpack.c.b16 %v5358, %v5357
      %v5373 = vpack.c.b16 %v5360, %v5359
      %v5374 = vpack.c.b16 %v5362, %v5361
      %v5375 = vpack.c.b16 %v5364, %v5363
      %v5376 = vpack.c.b16 %v5366, %v5365
      %v5377 = vpack.c.b16 %v5368, %v5367
      %v5378 = vpack.c.b16 %v5370, %v5369
      %5387 = vmatprep.subr.bf16.mxu0 0
      %5388 = vmatpush1.bf16.msra.mxu0 %v5371
      %5389 = vmatprep.subr.bf16.mxu0 0
      %5390 = vmatpush1.bf16.msra.mxu0 %v5372
      %5391 = vmatprep.subr.bf16.mxu0 0
      %5392 = vmatpush1.bf16.msra.mxu0 %v5373
      %5393 = vmatprep.subr.bf16.mxu0 0
      %5394 = vmatpush1.bf16.msra.mxu0 %v5374
      %5395 = vmatprep.subr.bf16.mxu0 0
      %5396 = vmatpush1.bf16.msra.mxu0 %v5375
      %5397 = vmatprep.subr.bf16.mxu0 0
      %5398 = vmatpush1.bf16.msra.mxu0 %v5376
      %5399 = vmatprep.subr.bf16.mxu0 0
      %5400 = vmatpush1.bf16.msra.mxu0 %v5377
      %5401 = vmatprep.subr.bf16.mxu0 0
      %5402 = vmatpush1.bf16.msra.mxu0 %v5378
      %5403 = vmatprep.subr.bf16.mxu0 0
      %5404 = vmatpush1.bf16.msra.mxu0 0
      %5405 = vmatprep.subr.bf16.mxu0 0
      %5406 = vmatpush1.bf16.msra.mxu0 0
      %5407 = vmatprep.subr.bf16.mxu0 0
      %5408 = vmatpush1.bf16.msra.mxu0 0
      %5409 = vmatprep.subr.bf16.mxu0 0
      %5410 = vmatpush1.bf16.msra.mxu0 0
      %5411 = vmatprep.subr.bf16.mxu0 0
      %5412 = vmatpush1.bf16.msra.mxu0 0
      %5413 = vmatprep.subr.bf16.mxu0 0
      %5414 = vmatpush1.bf16.msra.mxu0 0
      %5415 = vmatprep.subr.bf16.mxu0 0
      %5416 = vmatpush1.bf16.msra.mxu0 0
      %5417 = vmatprep.subr.bf16.mxu0 0
      %5418 = vmatpush1.bf16.msra.mxu0 0
      %5419 = vmatprep.mubr.bf16.mxu0 0
      %5420 = vmatmul.mubr.bf16.gmra.mrb[0].mxu0 %v5323
      %v5421 = vpop.f32.mrb[0].mxu0
      %v5422 = vadd.f32 0.0, %v5421
      %v5423 = vpop.f32.mrb[0].mxu0
      %v5424 = vpop.f32.mrb[0].mxu0
      %v5425 = vadd.f32 0.0, %v5424
      %v5426 = vpop.f32.mrb[0].mxu0
      %5427 = vmatprep.mubr.bf16.mxu0 0
      %5428 = vmatmul.mubr.bf16.gmra.mrb[0].mxu0 %v5324
      %v5429 = vpop.f32.mrb[0].mxu0
      %v5430 = vadd.f32 0.0, %v5429
      %v5431 = vpop.f32.mrb[0].mxu0
      %v5432 = vpop.f32.mrb[0].mxu0
      %v5433 = vadd.f32 0.0, %v5432
      %v5434 = vpop.f32.mrb[0].mxu0
      %5435 = vmatprep.mubr.bf16.mxu0 0
      %5436 = vmatmul.mubr.bf16.gmra.mrb[0].mxu0 %v5325
      %v5437 = vpop.f32.mrb[0].mxu0
      %v5438 = vadd.f32 0.0, %v5437
      %v5439 = vpop.f32.mrb[0].mxu0
      %v5440 = vpop.f32.mrb[0].mxu0
      %v5441 = vadd.f32 0.0, %v5440
      %v5442 = vpop.f32.mrb[0].mxu0
      %5443 = vmatprep.mubr.bf16.mxu0 0
      %5444 = vmatmul.mubr.bf16.gmra.mrb[0].mxu0 %v5326
      %v5445 = vpop.f32.mrb[0].mxu0
      %v5446 = vadd.f32 0.0, %v5445
      %v5447 = vpop.f32.mrb[0].mxu0
      %v5448 = vpop.f32.mrb[0].mxu0
      %v5449 = vadd.f32 0.0, %v5448
      %v5450 = vpop.f32.mrb[0].mxu0
      %5451 = vmatprep.mubr.bf16.mxu0 0
      %5452 = vmatmul.mubr.bf16.gmra.mrb[0].mxu0 %v5327
      %v5453 = vpop.f32.mrb[0].mxu0
      %v5454 = vadd.f32 0.0, %v5453
      %v5455 = vpop.f32.mrb[0].mxu0
      %v5456 = vpop.f32.mrb[0].mxu0
      %v5457 = vadd.f32 0.0, %v5456
      %v5458 = vpop.f32.mrb[0].mxu0
      %5459 = vmatprep.mubr.bf16.mxu0 0
      %5460 = vmatmul.mubr.bf16.gmra.mrb[0].mxu0 %v5328
      %v5461 = vpop.f32.mrb[0].mxu0
      %v5462 = vadd.f32 0.0, %v5461
      %v5463 = vpop.f32.mrb[0].mxu0
      %v5464 = vpop.f32.mrb[0].mxu0
      %v5465 = vadd.f32 0.0, %v5464
      %v5466 = vpop.f32.mrb[0].mxu0
      %5467 = vmatprep.mubr.bf16.mxu0 0
      %5468 = vmatmul.mubr.bf16.gmra.mrb[0].mxu0 %v5329
      %v5469 = vpop.f32.mrb[0].mxu0
      %v5470 = vadd.f32 0.0, %v5469
      %v5471 = vpop.f32.mrb[0].mxu0
      %v5472 = vpop.f32.mrb[0].mxu0
      %v5473 = vadd.f32 0.0, %v5472
      %v5474 = vpop.f32.mrb[0].mxu0
      %5475 = vmatprep.mubr.bf16.mxu0 0
      %5476 = vmatmul.mubr.bf16.gmra.mrb[0].mxu0 %v5330
      %v5477 = vpop.f32.mrb[0].mxu0
      %v5478 = vadd.f32 0.0, %v5477
      %v5479 = vpop.f32.mrb[0].mxu0
      %v5480 = vpop.f32.mrb[0].mxu0
      %v5481 = vadd.f32 0.0, %v5480
      %v5482 = vpop.f32.mrb[0].mxu0
      %5483 = vdwg.mxu0
      %v5484 = vadd.f32 %v5186, %v5422
      %v5485 = vadd.f32 %v5187, %v5425
      %v5486 = vadd.f32 %v5188, %v5430
      %v5487 = vadd.f32 %v5189, %v5433
      %v5488 = vadd.f32 %v5190, %v5438
      %v5489 = vadd.f32 %v5191, %v5441
      %v5490 = vadd.f32 %v5192, %v5446
      %v5491 = vadd.f32 %v5193, %v5449
      %v5492 = vadd.f32 %v5194, %v5454
      %v5493 = vadd.f32 %v5195, %v5457
      %v5494 = vadd.f32 %v5196, %v5462
      %v5495 = vadd.f32 %v5197, %v5465
      %v5496 = vadd.f32 %v5198, %v5470
      %v5497 = vadd.f32 %v5199, %v5473
      %v5498 = vadd.f32 %v5200, %v5478
      %v5499 = vadd.f32 %v5201, %v5481
      %s5500 = scalar_lea.vmem [#allocation2], 12
      %v5501 = vld [vmem:[%s5500] sm:$0xf]
      %v5502 = vld [vmem:[%s5500 + $0x4] sm:$0xf]
      %v5503 = vld [vmem:[%s5500 + $0xc] sm:$0xf]
      %v5504 = vld [vmem:[%s5500 + $0x10] sm:$0xf]
      %v5505 = vld [vmem:[%s5500 + $0x18] sm:$0xf]
      %v5506 = vld [vmem:[%s5500 + $0x1c] sm:$0xf]
      %v5507 = vld [vmem:[%s5500 + $0x24] sm:$0xf]
      %v5508 = vld [vmem:[%s5500 + $0x28] sm:$0xf]
      %v5509 = vld [vmem:[%s5500 + $0x30] sm:$0xf]
      %v5510 = vld [vmem:[%s5500 + $0x34] sm:$0xf]
      %v5511 = vld [vmem:[%s5500 + $0x3c] sm:$0xf]
      %v5512 = vld [vmem:[%s5500 + $0x40] sm:$0xf]
      %v5513 = vld [vmem:[%s5500 + $0x48] sm:$0xf]
      %v5514 = vld [vmem:[%s5500 + $0x4c] sm:$0xf]
      %v5515 = vld [vmem:[%s5500 + $0x54] sm:$0xf]
      %v5516 = vld [vmem:[%s5500 + $0x58] sm:$0xf]
      %s5517 = scalar_lea.vmem %s2, 384
      %v5518 = vld [vmem:[%s5517] sm:$0xf]
      %v5519 = vld [vmem:[%s5517 + $0x4] sm:$0xf]
      %v5520 = vld [vmem:[%s5517 + $0x8] sm:$0xf]
      %v5521 = vld [vmem:[%s5517 + $0xc] sm:$0xf]
      %v5522 = vld [vmem:[%s5517 + $0x10] sm:$0xf]
      %v5523 = vld [vmem:[%s5517 + $0x14] sm:$0xf]
      %v5524 = vld [vmem:[%s5517 + $0x18] sm:$0xf]
      %v5525 = vld [vmem:[%s5517 + $0x1c] sm:$0xf]
      %v5526 = vld [vmem:[%s5517 + $0x20] sm:$0xf]
      %v5527 = vld [vmem:[%s5517 + $0x24] sm:$0xf]
      %v5528 = vld [vmem:[%s5517 + $0x28] sm:$0xf]
      %v5529 = vld [vmem:[%s5517 + $0x2c] sm:$0xf]
      %v5530 = vld [vmem:[%s5517 + $0x30] sm:$0xf]
      %v5531 = vld [vmem:[%s5517 + $0x34] sm:$0xf]
      %v5532 = vld [vmem:[%s5517 + $0x38] sm:$0xf]
      %v5533 = vld [vmem:[%s5517 + $0x3c] sm:$0xf]
      %v5550 = vunpack.c.l.b16 %v5501
      %v5551 = vunpack.c.l.b16 %v5502
      %v5552 = vunpack.c.l.b16 %v5503
      %v5553 = vunpack.c.l.b16 %v5504
      %v5554 = vunpack.c.l.b16 %v5505
      %v5555 = vunpack.c.l.b16 %v5506
      %v5556 = vunpack.c.l.b16 %v5507
      %v5557 = vunpack.c.l.b16 %v5508
      %v5558 = vunpack.c.l.b16 %v5509
      %v5559 = vunpack.c.l.b16 %v5510
      %v5560 = vunpack.c.l.b16 %v5511
      %v5561 = vunpack.c.l.b16 %v5512
      %v5562 = vunpack.c.l.b16 %v5513
      %v5563 = vunpack.c.l.b16 %v5514
      %v5564 = vunpack.c.l.b16 %v5515
      %v5565 = vunpack.c.l.b16 %v5516
      %v5566 = vpack.c.b16 %v5551, %v5550
      %v5567 = vpack.c.b16 %v5553, %v5552
      %v5568 = vpack.c.b16 %v5555, %v5554
      %v5569 = vpack.c.b16 %v5557, %v5556
      %v5570 = vpack.c.b16 %v5559, %v5558
      %v5571 = vpack.c.b16 %v5561, %v5560
      %v5572 = vpack.c.b16 %v5563, %v5562
      %v5573 = vpack.c.b16 %v5565, %v5564
      %v5598 = vunpack.c.l.b16 %v5518
      %v5599 = vunpack.c.l.b16 %v5519
      %v5600 = vunpack.c.l.b16 %v5520
      %v5601 = vunpack.c.l.b16 %v5521
      %v5602 = vunpack.c.l.b16 %v5522
      %v5603 = vunpack.c.l.b16 %v5523
      %v5604 = vunpack.c.l.b16 %v5524
      %v5605 = vunpack.c.l.b16 %v5525
      %v5606 = vunpack.c.l.b16 %v5526
      %v5607 = vunpack.c.l.b16 %v5527
      %v5608 = vunpack.c.l.b16 %v5528
      %v5609 = vunpack.c.l.b16 %v5529
      %v5610 = vunpack.c.l.b16 %v5530
      %v5611 = vunpack.c.l.b16 %v5531
      %v5612 = vunpack.c.l.b16 %v5532
      %v5613 = vunpack.c.l.b16 %v5533
      %v5614 = vpack.c.b16 %v5599, %v5598
      %v5615 = vpack.c.b16 %v5601, %v5600
      %v5616 = vpack.c.b16 %v5603, %v5602
      %v5617 = vpack.c.b16 %v5605, %v5604
      %v5618 = vpack.c.b16 %v5607, %v5606
      %v5619 = vpack.c.b16 %v5609, %v5608
      %v5620 = vpack.c.b16 %v5611, %v5610
      %v5621 = vpack.c.b16 %v5613, %v5612
      %5630 = vmatprep.subr.bf16.mxu0 0
      %5631 = vmatpush1.bf16.msra.mxu0 %v5614
      %5632 = vmatprep.subr.bf16.mxu0 0
      %5633 = vmatpush1.bf16.msra.mxu0 %v5615
      %5634 = vmatprep.subr.bf16.mxu0 0
      %5635 = vmatpush1.bf16.msra.mxu0 %v5616
      %5636 = vmatprep.subr.bf16.mxu0 0
      %5637 = vmatpush1.bf16.msra.mxu0 %v5617
      %5638 = vmatprep.subr.bf16.mxu0 0
      %5639 = vmatpush1.bf16.msra.mxu0 %v5618
      %5640 = vmatprep.subr.bf16.mxu0 0
      %5641 = vmatpush1.bf16.msra.mxu0 %v5619
      %5642 = vmatprep.subr.bf16.mxu0 0
      %5643 = vmatpush1.bf16.msra.mxu0 %v5620
      %5644 = vmatprep.subr.bf16.mxu0 0
      %5645 = vmatpush1.bf16.msra.mxu0 %v5621
      %5646 = vmatprep.subr.bf16.mxu0 0
      %5647 = vmatpush1.bf16.msra.mxu0 0
      %5648 = vmatprep.subr.bf16.mxu0 0
      %5649 = vmatpush1.bf16.msra.mxu0 0
      %5650 = vmatprep.subr.bf16.mxu0 0
      %5651 = vmatpush1.bf16.msra.mxu0 0
      %5652 = vmatprep.subr.bf16.mxu0 0
      %5653 = vmatpush1.bf16.msra.mxu0 0
      %5654 = vmatprep.subr.bf16.mxu0 0
      %5655 = vmatpush1.bf16.msra.mxu0 0
      %5656 = vmatprep.subr.bf16.mxu0 0
      %5657 = vmatpush1.bf16.msra.mxu0 0
      %5658 = vmatprep.subr.bf16.mxu0 0
      %5659 = vmatpush1.bf16.msra.mxu0 0
      %5660 = vmatprep.subr.bf16.mxu0 0
      %5661 = vmatpush1.bf16.msra.mxu0 0
      %5662 = vmatprep.mubr.bf16.mxu0 0
      %5663 = vmatmul.mubr.bf16.gmra.mrb[0].mxu0 %v5566
      %v5664 = vpop.f32.mrb[0].mxu0
      %v5665 = vadd.f32 0.0, %v5664
      %v5666 = vpop.f32.mrb[0].mxu0
      %v5667 = vpop.f32.mrb[0].mxu0
      %v5668 = vadd.f32 0.0, %v5667
      %v5669 = vpop.f32.mrb[0].mxu0
      %5670 = vmatprep.mubr.bf16.mxu0 0
      %5671 = vmatmul.mubr.bf16.gmra.mrb[0].mxu0 %v5567
      %v5672 = vpop.f32.mrb[0].mxu0
      %v5673 = vadd.f32 0.0, %v5672
      %v5674 = vpop.f32.mrb[0].mxu0
      %v5675 = vpop.f32.mrb[0].mxu0
      %v5676 = vadd.f32 0.0, %v5675
      %v5677 = vpop.f32.mrb[0].mxu0
      %5678 = vmatprep.mubr.bf16.mxu0 0
      %5679 = vmatmul.mubr.bf16.gmra.mrb[0].mxu0 %v5568
      %v5680 = vpop.f32.mrb[0].mxu0
      %v5681 = vadd.f32 0.0, %v5680
      %v5682 = vpop.f32.mrb[0].mxu0
      %v5683 = vpop.f32.mrb[0].mxu0
      %v5684 = vadd.f32 0.0, %v5683
      %v5685 = vpop.f32.mrb[0].mxu0
      %5686 = vmatprep.mubr.bf16.mxu0 0
      %5687 = vmatmul.mubr.bf16.gmra.mrb[0].mxu0 %v5569
      %v5688 = vpop.f32.mrb[0].mxu0
      %v5689 = vadd.f32 0.0, %v5688
      %v5690 = vpop.f32.mrb[0].mxu0
      %v5691 = vpop.f32.mrb[0].mxu0
      %v5692 = vadd.f32 0.0, %v5691
      %v5693 = vpop.f32.mrb[0].mxu0
      %5694 = vmatprep.mubr.bf16.mxu0 0
      %5695 = vmatmul.mubr.bf16.gmra.mrb[0].mxu0 %v5570
      %v5696 = vpop.f32.mrb[0].mxu0
      %v5697 = vadd.f32 0.0, %v5696
      %v5698 = vpop.f32.mrb[0].mxu0
      %v5699 = vpop.f32.mrb[0].mxu0
      %v5700 = vadd.f32 0.0, %v5699
      %v5701 = vpop.f32.mrb[0].mxu0
      %5702 = vmatprep.mubr.bf16.mxu0 0
      %5703 = vmatmul.mubr.bf16.gmra.mrb[0].mxu0 %v5571
      %v5704 = vpop.f32.mrb[0].mxu0
      %v5705 = vadd.f32 0.0, %v5704
      %v5706 = vpop.f32.mrb[0].mxu0
      %v5707 = vpop.f32.mrb[0].mxu0
      %v5708 = vadd.f32 0.0, %v5707
      %v5709 = vpop.f32.mrb[0].mxu0
      %5710 = vmatprep.mubr.bf16.mxu0 0
      %5711 = vmatmul.mubr.bf16.gmra.mrb[0].mxu0 %v5572
      %v5712 = vpop.f32.mrb[0].mxu0
      %v5713 = vadd.f32 0.0, %v5712
      %v5714 = vpop.f32.mrb[0].mxu0
      %v5715 = vpop.f32.mrb[0].mxu0
      %v5716 = vadd.f32 0.0, %v5715
      %v5717 = vpop.f32.mrb[0].mxu0
      %5718 = vmatprep.mubr.bf16.mxu0 0
      %5719 = vmatmul.mubr.bf16.gmra.mrb[0].mxu0 %v5573
      %v5720 = vpop.f32.mrb[0].mxu0
      %v5721 = vadd.f32 0.0, %v5720
      %v5722 = vpop.f32.mrb[0].mxu0
      %v5723 = vpop.f32.mrb[0].mxu0
      %v5724 = vadd.f32 0.0, %v5723
      %v5725 = vpop.f32.mrb[0].mxu0
      %5726 = vdwg.mxu0
      %v5727 = vadd.f32 %v5484, %v5665
      %v5728 = vadd.f32 %v5485, %v5668
      %v5729 = vadd.f32 %v5486, %v5673
      %v5730 = vadd.f32 %v5487, %v5676
      %v5731 = vadd.f32 %v5488, %v5681
      %v5732 = vadd.f32 %v5489, %v5684
      %v5733 = vadd.f32 %v5490, %v5689
      %v5734 = vadd.f32 %v5491, %v5692
      %v5735 = vadd.f32 %v5492, %v5697
      %v5736 = vadd.f32 %v5493, %v5700
      %v5737 = vadd.f32 %v5494, %v5705
      %v5738 = vadd.f32 %v5495, %v5708
      %v5739 = vadd.f32 %v5496, %v5713
      %v5740 = vadd.f32 %v5497, %v5716
      %v5741 = vadd.f32 %v5498, %v5721
      %v5742 = vadd.f32 %v5499, %v5724
      %v5743 = vld [vmem:[%s5500] sm:$0xf]
      %v5744 = vld [vmem:[%s5500 + $0x4] sm:$0xf]
      %v5745 = vld [vmem:[%s5500 + $0x8] sm:$0x1]
      %v5746 = vld [vmem:[%s5500 + $0xc] sm:$0xf]
      %v5747 = vld [vmem:[%s5500 + $0x10] sm:$0xf]
      %v5748 = vld [vmem:[%s5500 + $0x14] sm:$0x1]
      %v5749 = vld [vmem:[%s5500 + $0x18] sm:$0xf]
      %v5750 = vld [vmem:[%s5500 + $0x1c] sm:$0xf]
      %v5751 = vld [vmem:[%s5500 + $0x20] sm:$0x1]
      %v5752 = vld [vmem:[%s5500 + $0x24] sm:$0xf]
      %v5753 = vld [vmem:[%s5500 + $0x28] sm:$0xf]
      %v5754 = vld [vmem:[%s5500 + $0x2c] sm:$0x1]
      %v5755 = vld [vmem:[%s5500 + $0x30] sm:$0xf]
      %v5756 = vld [vmem:[%s5500 + $0x34] sm:$0xf]
      %v5757 = vld [vmem:[%s5500 + $0x38] sm:$0x1]
      %v5758 = vld [vmem:[%s5500 + $0x3c] sm:$0xf]
      %v5759 = vld [vmem:[%s5500 + $0x40] sm:$0xf]
      %v5760 = vld [vmem:[%s5500 + $0x44] sm:$0x1]
      %v5761 = vld [vmem:[%s5500 + $0x48] sm:$0xf]
      %v5762 = vld [vmem:[%s5500 + $0x4c] sm:$0xf]
      %v5763 = vld [vmem:[%s5500 + $0x50] sm:$0x1]
      %v5764 = vld [vmem:[%s5500 + $0x54] sm:$0xf]
      %v5765 = vld [vmem:[%s5500 + $0x58] sm:$0xf]
      %v5766 = vld [vmem:[%s5500 + $0x5c] sm:$0x1]
      %v5768 = vshrl.u32 %v5743, 16
      %v5770 = vrot.slane %v5768, 4
      %v5771 = vshll.u32 %v5743, 16
      %v5773 = vrot.slane %v5771, 5
      %v5774 = vor.u32 %v5770, %v5773
      %v5775 = vrot.slane %v5774, 4
      %v5777 = vshll.u32 %v5744, 16
      %v5779 = vrot.slane %v5777, 5
      %v5780 = vsel %vm3661, %v5775, %v5779
      %v5781 = vshrl.u32 %v5744, 16
      %v5783 = vrot.slane %v5781, 4
      %v5784 = vor.u32 %v5783, %v5779
      %v5785 = vrot.slane %v5784, 4
      %v5787 = vshll.u32 %v5745, 16
      %v5789 = vrot.slane %v5787, 5
      %v5790 = vsel %vm3661, %v5785, %v5789
      %v5792 = vshrl.u32 %v5746, 16
      %v5794 = vrot.slane %v5792, 4
      %v5795 = vshll.u32 %v5746, 16
      %v5797 = vrot.slane %v5795, 5
      %v5798 = vor.u32 %v5794, %v5797
      %v5799 = vrot.slane %v5798, 4
      %v5801 = vshll.u32 %v5747, 16
      %v5803 = vrot.slane %v5801, 5
      %v5804 = vsel %vm3661, %v5799, %v5803
      %v5805 = vshrl.u32 %v5747, 16
      %v5807 = vrot.slane %v5805, 4
      %v5808 = vor.u32 %v5807, %v5803
      %v5809 = vrot.slane %v5808, 4
      %v5811 = vshll.u32 %v5748, 16
      %v5813 = vrot.slane %v5811, 5
      %v5814 = vsel %vm3661, %v5809, %v5813
      %v5816 = vshrl.u32 %v5749, 16
      %v5818 = vrot.slane %v5816, 4
      %v5819 = vshll.u32 %v5749, 16
      %v5821 = vrot.slane %v5819, 5
      %v5822 = vor.u32 %v5818, %v5821
      %v5823 = vrot.slane %v5822, 4
      %v5825 = vshll.u32 %v5750, 16
      %v5827 = vrot.slane %v5825, 5
      %v5828 = vsel %vm3661, %v5823, %v5827
      %v5829 = vshrl.u32 %v5750, 16
      %v5831 = vrot.slane %v5829, 4
      %v5832 = vor.u32 %v5831, %v5827
      %v5833 = vrot.slane %v5832, 4
      %v5835 = vshll.u32 %v5751, 16
      %v5837 = vrot.slane %v5835, 5
      %v5838 = vsel %vm3661, %v5833, %v5837
      %v5840 = vshrl.u32 %v5752, 16
      %v5842 = vrot.slane %v5840, 4
      %v5843 = vshll.u32 %v5752, 16
      %v5845 = vrot.slane %v5843, 5
      %v5846 = vor.u32 %v5842, %v5845
      %v5847 = vrot.slane %v5846, 4
      %v5849 = vshll.u32 %v5753, 16
      %v5851 = vrot.slane %v5849, 5
      %v5852 = vsel %vm3661, %v5847, %v5851
      %v5853 = vshrl.u32 %v5753, 16
      %v5855 = vrot.slane %v5853, 4
      %v5856 = vor.u32 %v5855, %v5851
      %v5857 = vrot.slane %v5856, 4
      %v5859 = vshll.u32 %v5754, 16
      %v5861 = vrot.slane %v5859, 5
      %v5862 = vsel %vm3661, %v5857, %v5861
      %v5864 = vshrl.u32 %v5755, 16
      %v5866 = vrot.slane %v5864, 4
      %v5867 = vshll.u32 %v5755, 16
      %v5869 = vrot.slane %v5867, 5
      %v5870 = vor.u32 %v5866, %v5869
      %v5871 = vrot.slane %v5870, 4
      %v5873 = vshll.u32 %v5756, 16
      %v5875 = vrot.slane %v5873, 5
      %v5876 = vsel %vm3661, %v5871, %v5875
      %v5877 = vshrl.u32 %v5756, 16
      %v5879 = vrot.slane %v5877, 4
      %v5880 = vor.u32 %v5879, %v5875
      %v5881 = vrot.slane %v5880, 4
      %v5883 = vshll.u32 %v5757, 16
      %v5885 = vrot.slane %v5883, 5
      %v5886 = vsel %vm3661, %v5881, %v5885
      %v5888 = vshrl.u32 %v5758, 16
      %v5890 = vrot.slane %v5888, 4
      %v5891 = vshll.u32 %v5758, 16
      %v5893 = vrot.slane %v5891, 5
      %v5894 = vor.u32 %v5890, %v5893
      %v5895 = vrot.slane %v5894, 4
      %v5897 = vshll.u32 %v5759, 16
      %v5899 = vrot.slane %v5897, 5
      %v5900 = vsel %vm3661, %v5895, %v5899
      %v5901 = vshrl.u32 %v5759, 16
      %v5903 = vrot.slane %v5901, 4
      %v5904 = vor.u32 %v5903, %v5899
      %v5905 = vrot.slane %v5904, 4
      %v5907 = vshll.u32 %v5760, 16
      %v5909 = vrot.slane %v5907, 5
      %v5910 = vsel %vm3661, %v5905, %v5909
      %v5912 = vshrl.u32 %v5761, 16
      %v5914 = vrot.slane %v5912, 4
      %v5915 = vshll.u32 %v5761, 16
      %v5917 = vrot.slane %v5915, 5
      %v5918 = vor.u32 %v5914, %v5917
      %v5919 = vrot.slane %v5918, 4
      %v5921 = vshll.u32 %v5762, 16
      %v5923 = vrot.slane %v5921, 5
      %v5924 = vsel %vm3661, %v5919, %v5923
      %v5925 = vshrl.u32 %v5762, 16
      %v5927 = vrot.slane %v5925, 4
      %v5928 = vor.u32 %v5927, %v5923
      %v5929 = vrot.slane %v5928, 4
      %v5931 = vshll.u32 %v5763, 16
      %v5933 = vrot.slane %v5931, 5
      %v5934 = vsel %vm3661, %v5929, %v5933
      %v5936 = vshrl.u32 %v5764, 16
      %v5938 = vrot.slane %v5936, 4
      %v5939 = vshll.u32 %v5764, 16
      %v5941 = vrot.slane %v5939, 5
      %v5942 = vor.u32 %v5938, %v5941
      %v5943 = vrot.slane %v5942, 4
      %v5945 = vshll.u32 %v5765, 16
      %v5947 = vrot.slane %v5945, 5
      %v5948 = vsel %vm3661, %v5943, %v5947
      %v5949 = vshrl.u32 %v5765, 16
      %v5951 = vrot.slane %v5949, 4
      %v5952 = vor.u32 %v5951, %v5947
      %v5953 = vrot.slane %v5952, 4
      %v5955 = vshll.u32 %v5766, 16
      %v5957 = vrot.slane %v5955, 5
      %v5958 = vsel %vm3661, %v5953, %v5957
      %s5959 = scalar_lea.vmem %s2, 448
      %v5960 = vld [vmem:[%s5959] sm:$0xf]
      %v5961 = vld [vmem:[%s5959 + $0x4] sm:$0xf]
      %v5962 = vld [vmem:[%s5959 + $0x8] sm:$0xf]
      %v5963 = vld [vmem:[%s5959 + $0xc] sm:$0xf]
      %v5964 = vld [vmem:[%s5959 + $0x10] sm:$0xf]
      %v5965 = vld [vmem:[%s5959 + $0x14] sm:$0xf]
      %v5966 = vld [vmem:[%s5959 + $0x18] sm:$0xf]
      %v5967 = vld [vmem:[%s5959 + $0x1c] sm:$0xf]
      %v5968 = vld [vmem:[%s5959 + $0x20] sm:$0xf]
      %v5969 = vld [vmem:[%s5959 + $0x24] sm:$0xf]
      %v5970 = vld [vmem:[%s5959 + $0x28] sm:$0xf]
      %v5971 = vld [vmem:[%s5959 + $0x2c] sm:$0xf]
      %v5972 = vld [vmem:[%s5959 + $0x30] sm:$0xf]
      %v5973 = vld [vmem:[%s5959 + $0x34] sm:$0xf]
      %v5974 = vld [vmem:[%s5959 + $0x38] sm:$0xf]
      %v5975 = vld [vmem:[%s5959 + $0x3c] sm:$0xf]
      %v5976 = vunpack.c.l.b16 %v5780
      %v5977 = vunpack.c.l.b16 %v5790
      %v5978 = vunpack.c.l.b16 %v5804
      %v5979 = vunpack.c.l.b16 %v5814
      %v5980 = vunpack.c.l.b16 %v5828
      %v5981 = vunpack.c.l.b16 %v5838
      %v5982 = vunpack.c.l.b16 %v5852
      %v5983 = vunpack.c.l.b16 %v5862
      %v5984 = vunpack.c.l.b16 %v5876
      %v5985 = vunpack.c.l.b16 %v5886
      %v5986 = vunpack.c.l.b16 %v5900
      %v5987 = vunpack.c.l.b16 %v5910
      %v5988 = vunpack.c.l.b16 %v5924
      %v5989 = vunpack.c.l.b16 %v5934
      %v5990 = vunpack.c.l.b16 %v5948
      %v5991 = vunpack.c.l.b16 %v5958
      %v5992 = vpack.c.b16 %v5977, %v5976
      %v5993 = vpack.c.b16 %v5979, %v5978
      %v5994 = vpack.c.b16 %v5981, %v5980
      %v5995 = vpack.c.b16 %v5983, %v5982
      %v5996 = vpack.c.b16 %v5985, %v5984
      %v5997 = vpack.c.b16 %v5987, %v5986
      %v5998 = vpack.c.b16 %v5989, %v5988
      %v5999 = vpack.c.b16 %v5991, %v5990
      %v6024 = vunpack.c.l.b16 %v5960
      %v6025 = vunpack.c.l.b16 %v5961
      %v6026 = vunpack.c.l.b16 %v5962
      %v6027 = vunpack.c.l.b16 %v5963
      %v6028 = vunpack.c.l.b16 %v5964
      %v6029 = vunpack.c.l.b16 %v5965
      %v6030 = vunpack.c.l.b16 %v5966
      %v6031 = vunpack.c.l.b16 %v5967
      %v6032 = vunpack.c.l.b16 %v5968
      %v6033 = vunpack.c.l.b16 %v5969
      %v6034 = vunpack.c.l.b16 %v5970
      %v6035 = vunpack.c.l.b16 %v5971
      %v6036 = vunpack.c.l.b16 %v5972
      %v6037 = vunpack.c.l.b16 %v5973
      %v6038 = vunpack.c.l.b16 %v5974
      %v6039 = vunpack.c.l.b16 %v5975
      %v6040 = vpack.c.b16 %v6025, %v6024
      %v6041 = vpack.c.b16 %v6027, %v6026
      %v6042 = vpack.c.b16 %v6029, %v6028
      %v6043 = vpack.c.b16 %v6031, %v6030
      %v6044 = vpack.c.b16 %v6033, %v6032
      %v6045 = vpack.c.b16 %v6035, %v6034
      %v6046 = vpack.c.b16 %v6037, %v6036
      %v6047 = vpack.c.b16 %v6039, %v6038
      %6056 = vmatprep.subr.bf16.mxu0 0
      %6057 = vmatpush1.bf16.msra.mxu0 %v6040
      %6058 = vmatprep.subr.bf16.mxu0 0
      %6059 = vmatpush1.bf16.msra.mxu0 %v6041
      %6060 = vmatprep.subr.bf16.mxu0 0
      %6061 = vmatpush1.bf16.msra.mxu0 %v6042
      %6062 = vmatprep.subr.bf16.mxu0 0
      %6063 = vmatpush1.bf16.msra.mxu0 %v6043
      %6064 = vmatprep.subr.bf16.mxu0 0
      %6065 = vmatpush1.bf16.msra.mxu0 %v6044
      %6066 = vmatprep.subr.bf16.mxu0 0
      %6067 = vmatpush1.bf16.msra.mxu0 %v6045
      %6068 = vmatprep.subr.bf16.mxu0 0
      %6069 = vmatpush1.bf16.msra.mxu0 %v6046
      %6070 = vmatprep.subr.bf16.mxu0 0
      %6071 = vmatpush1.bf16.msra.mxu0 %v6047
      %6072 = vmatprep.subr.bf16.mxu0 0
      %6073 = vmatpush1.bf16.msra.mxu0 0
      %6074 = vmatprep.subr.bf16.mxu0 0
      %6075 = vmatpush1.bf16.msra.mxu0 0
      %6076 = vmatprep.subr.bf16.mxu0 0
      %6077 = vmatpush1.bf16.msra.mxu0 0
      %6078 = vmatprep.subr.bf16.mxu0 0
      %6079 = vmatpush1.bf16.msra.mxu0 0
      %6080 = vmatprep.subr.bf16.mxu0 0
      %6081 = vmatpush1.bf16.msra.mxu0 0
      %6082 = vmatprep.subr.bf16.mxu0 0
      %6083 = vmatpush1.bf16.msra.mxu0 0
      %6084 = vmatprep.subr.bf16.mxu0 0
      %6085 = vmatpush1.bf16.msra.mxu0 0
      %6086 = vmatprep.subr.bf16.mxu0 0
      %6087 = vmatpush1.bf16.msra.mxu0 0
      %6088 = vmatprep.mubr.bf16.mxu0 0
      %6089 = vmatmul.mubr.bf16.gmra.mrb[0].mxu0 %v5992
      %v6090 = vpop.f32.mrb[0].mxu0
      %v6091 = vadd.f32 0.0, %v6090
      %v6092 = vpop.f32.mrb[0].mxu0
      %v6093 = vpop.f32.mrb[0].mxu0
      %v6094 = vadd.f32 0.0, %v6093
      %v6095 = vpop.f32.mrb[0].mxu0
      %6096 = vmatprep.mubr.bf16.mxu0 0
      %6097 = vmatmul.mubr.bf16.gmra.mrb[0].mxu0 %v5993
      %v6098 = vpop.f32.mrb[0].mxu0
      %v6099 = vadd.f32 0.0, %v6098
      %v6100 = vpop.f32.mrb[0].mxu0
      %v6101 = vpop.f32.mrb[0].mxu0
      %v6102 = vadd.f32 0.0, %v6101
      %v6103 = vpop.f32.mrb[0].mxu0
      %6104 = vmatprep.mubr.bf16.mxu0 0
      %6105 = vmatmul.mubr.bf16.gmra.mrb[0].mxu0 %v5994
      %v6106 = vpop.f32.mrb[0].mxu0
      %v6107 = vadd.f32 0.0, %v6106
      %v6108 = vpop.f32.mrb[0].mxu0
      %v6109 = vpop.f32.mrb[0].mxu0
      %v6110 = vadd.f32 0.0, %v6109
      %v6111 = vpop.f32.mrb[0].mxu0
      %6112 = vmatprep.mubr.bf16.mxu0 0
      %6113 = vmatmul.mubr.bf16.gmra.mrb[0].mxu0 %v5995
      %v6114 = vpop.f32.mrb[0].mxu0
      %v6115 = vadd.f32 0.0, %v6114
      %v6116 = vpop.f32.mrb[0].mxu0
      %v6117 = vpop.f32.mrb[0].mxu0
      %v6118 = vadd.f32 0.0, %v6117
      %v6119 = vpop.f32.mrb[0].mxu0
      %6120 = vmatprep.mubr.bf16.mxu0 0
      %6121 = vmatmul.mubr.bf16.gmra.mrb[0].mxu0 %v5996
      %v6122 = vpop.f32.mrb[0].mxu0
      %v6123 = vadd.f32 0.0, %v6122
      %v6124 = vpop.f32.mrb[0].mxu0
      %v6125 = vpop.f32.mrb[0].mxu0
      %v6126 = vadd.f32 0.0, %v6125
      %v6127 = vpop.f32.mrb[0].mxu0
      %6128 = vmatprep.mubr.bf16.mxu0 0
      %6129 = vmatmul.mubr.bf16.gmra.mrb[0].mxu0 %v5997
      %v6130 = vpop.f32.mrb[0].mxu0
      %v6131 = vadd.f32 0.0, %v6130
      %v6132 = vpop.f32.mrb[0].mxu0
      %v6133 = vpop.f32.mrb[0].mxu0
      %v6134 = vadd.f32 0.0, %v6133
      %v6135 = vpop.f32.mrb[0].mxu0
      %6136 = vmatprep.mubr.bf16.mxu0 0
      %6137 = vmatmul.mubr.bf16.gmra.mrb[0].mxu0 %v5998
      %v6138 = vpop.f32.mrb[0].mxu0
      %v6139 = vadd.f32 0.0, %v6138
      %v6140 = vpop.f32.mrb[0].mxu0
      %v6141 = vpop.f32.mrb[0].mxu0
      %v6142 = vadd.f32 0.0, %v6141
      %v6143 = vpop.f32.mrb[0].mxu0
      %6144 = vmatprep.mubr.bf16.mxu0 0
      %6145 = vmatmul.mubr.bf16.gmra.mrb[0].mxu0 %v5999
      %v6146 = vpop.f32.mrb[0].mxu0
      %v6147 = vadd.f32 0.0, %v6146
      %v6148 = vpop.f32.mrb[0].mxu0
      %v6149 = vpop.f32.mrb[0].mxu0
      %v6150 = vadd.f32 0.0, %v6149
      %v6151 = vpop.f32.mrb[0].mxu0
      %6152 = vdwg.mxu0
      %v6153 = vadd.f32 %v5727, %v6091
      %v6154 = vadd.f32 %v5728, %v6094
      %v6155 = vadd.f32 %v5729, %v6099
      %v6156 = vadd.f32 %v5730, %v6102
      %v6157 = vadd.f32 %v5731, %v6107
      %v6158 = vadd.f32 %v5732, %v6110
      %v6159 = vadd.f32 %v5733, %v6115
      %v6160 = vadd.f32 %v5734, %v6118
      %v6161 = vadd.f32 %v5735, %v6123
      %v6162 = vadd.f32 %v5736, %v6126
      %v6163 = vadd.f32 %v5737, %v6131
      %v6164 = vadd.f32 %v5738, %v6134
      %v6165 = vadd.f32 %v5739, %v6139
      %v6166 = vadd.f32 %v5740, %v6142
      %v6167 = vadd.f32 %v5741, %v6147
      %v6168 = vadd.f32 %v5742, %v6150
      %v6169 = vld [vmem:[%s5500] sm:$0xe]
      %v6170 = vld [vmem:[%s5500 + $0xc] sm:$0xe]
      %v6171 = vld [vmem:[%s5500 + $0x18] sm:$0xe]
      %v6172 = vld [vmem:[%s5500 + $0x24] sm:$0xe]
      %v6173 = vld [vmem:[%s5500 + $0x30] sm:$0xe]
      %v6174 = vld [vmem:[%s5500 + $0x3c] sm:$0xe]
      %v6175 = vld [vmem:[%s5500 + $0x48] sm:$0xe]
      %v6176 = vld [vmem:[%s5500 + $0x54] sm:$0xe]
      %v6201 = vrot.slane %v6169, 5
      %v6202 = vrot.slane %v6201, 4
      %v6203 = vrot.slane %v5744, 5
      %v6204 = vsel %vm4267, %v6202, %v6203
      %v6205 = vrot.slane %v6203, 4
      %v6206 = vrot.slane %v5745, 5
      %v6207 = vsel %vm4267, %v6205, %v6206
      %v6208 = vrot.slane %v6170, 5
      %v6209 = vrot.slane %v6208, 4
      %v6210 = vrot.slane %v5747, 5
      %v6211 = vsel %vm4267, %v6209, %v6210
      %v6212 = vrot.slane %v6210, 4
      %v6213 = vrot.slane %v5748, 5
      %v6214 = vsel %vm4267, %v6212, %v6213
      %v6215 = vrot.slane %v6171, 5
      %v6216 = vrot.slane %v6215, 4
      %v6217 = vrot.slane %v5750, 5
      %v6218 = vsel %vm4267, %v6216, %v6217
      %v6219 = vrot.slane %v6217, 4
      %v6220 = vrot.slane %v5751, 5
      %v6221 = vsel %vm4267, %v6219, %v6220
      %v6222 = vrot.slane %v6172, 5
      %v6223 = vrot.slane %v6222, 4
      %v6224 = vrot.slane %v5753, 5
      %v6225 = vsel %vm4267, %v6223, %v6224
      %v6226 = vrot.slane %v6224, 4
      %v6227 = vrot.slane %v5754, 5
      %v6228 = vsel %vm4267, %v6226, %v6227
      %v6229 = vrot.slane %v6173, 5
      %v6230 = vrot.slane %v6229, 4
      %v6231 = vrot.slane %v5756, 5
      %v6232 = vsel %vm4267, %v6230, %v6231
      %v6233 = vrot.slane %v6231, 4
      %v6234 = vrot.slane %v5757, 5
      %v6235 = vsel %vm4267, %v6233, %v6234
      %v6236 = vrot.slane %v6174, 5
      %v6237 = vrot.slane %v6236, 4
      %v6238 = vrot.slane %v5759, 5
      %v6239 = vsel %vm4267, %v6237, %v6238
      %v6240 = vrot.slane %v6238, 4
      %v6241 = vrot.slane %v5760, 5
      %v6242 = vsel %vm4267, %v6240, %v6241
      %v6243 = vrot.slane %v6175, 5
      %v6244 = vrot.slane %v6243, 4
      %v6245 = vrot.slane %v5762, 5
      %v6246 = vsel %vm4267, %v6244, %v6245
      %v6247 = vrot.slane %v6245, 4
      %v6248 = vrot.slane %v5763, 5
      %v6249 = vsel %vm4267, %v6247, %v6248
      %v6250 = vrot.slane %v6176, 5
      %v6251 = vrot.slane %v6250, 4
      %v6252 = vrot.slane %v5765, 5
      %v6253 = vsel %vm4267, %v6251, %v6252
      %v6254 = vrot.slane %v6252, 4
      %v6255 = vrot.slane %v5766, 5
      %v6256 = vsel %vm4267, %v6254, %v6255
      %s6257 = scalar_lea.vmem %s2, 512
      %v6258 = vld [vmem:[%s6257] sm:$0xf]
      %v6259 = vld [vmem:[%s6257 + $0x4] sm:$0xf]
      %v6260 = vld [vmem:[%s6257 + $0x8] sm:$0xf]
      %v6261 = vld [vmem:[%s6257 + $0xc] sm:$0xf]
      %v6262 = vld [vmem:[%s6257 + $0x10] sm:$0xf]
      %v6263 = vld [vmem:[%s6257 + $0x14] sm:$0xf]
      %v6264 = vld [vmem:[%s6257 + $0x18] sm:$0xf]
      %v6265 = vld [vmem:[%s6257 + $0x1c] sm:$0xf]
      %v6266 = vld [vmem:[%s6257 + $0x20] sm:$0xf]
      %v6267 = vld [vmem:[%s6257 + $0x24] sm:$0xf]
      %v6268 = vld [vmem:[%s6257 + $0x28] sm:$0xf]
      %v6269 = vld [vmem:[%s6257 + $0x2c] sm:$0xf]
      %v6270 = vld [vmem:[%s6257 + $0x30] sm:$0xf]
      %v6271 = vld [vmem:[%s6257 + $0x34] sm:$0xf]
      %v6272 = vld [vmem:[%s6257 + $0x38] sm:$0xf]
      %v6273 = vld [vmem:[%s6257 + $0x3c] sm:$0xf]
      %v6274 = vunpack.c.l.b16 %v6204
      %v6275 = vunpack.c.l.b16 %v6207
      %v6276 = vunpack.c.l.b16 %v6211
      %v6277 = vunpack.c.l.b16 %v6214
      %v6278 = vunpack.c.l.b16 %v6218
      %v6279 = vunpack.c.l.b16 %v6221
      %v6280 = vunpack.c.l.b16 %v6225
      %v6281 = vunpack.c.l.b16 %v6228
      %v6282 = vunpack.c.l.b16 %v6232
      %v6283 = vunpack.c.l.b16 %v6235
      %v6284 = vunpack.c.l.b16 %v6239
      %v6285 = vunpack.c.l.b16 %v6242
      %v6286 = vunpack.c.l.b16 %v6246
      %v6287 = vunpack.c.l.b16 %v6249
      %v6288 = vunpack.c.l.b16 %v6253
      %v6289 = vunpack.c.l.b16 %v6256
      %v6290 = vpack.c.b16 %v6275, %v6274
      %v6291 = vpack.c.b16 %v6277, %v6276
      %v6292 = vpack.c.b16 %v6279, %v6278
      %v6293 = vpack.c.b16 %v6281, %v6280
      %v6294 = vpack.c.b16 %v6283, %v6282
      %v6295 = vpack.c.b16 %v6285, %v6284
      %v6296 = vpack.c.b16 %v6287, %v6286
      %v6297 = vpack.c.b16 %v6289, %v6288
      %v6322 = vunpack.c.l.b16 %v6258
      %v6323 = vunpack.c.l.b16 %v6259
      %v6324 = vunpack.c.l.b16 %v6260
      %v6325 = vunpack.c.l.b16 %v6261
      %v6326 = vunpack.c.l.b16 %v6262
      %v6327 = vunpack.c.l.b16 %v6263
      %v6328 = vunpack.c.l.b16 %v6264
      %v6329 = vunpack.c.l.b16 %v6265
      %v6330 = vunpack.c.l.b16 %v6266
      %v6331 = vunpack.c.l.b16 %v6267
      %v6332 = vunpack.c.l.b16 %v6268
      %v6333 = vunpack.c.l.b16 %v6269
      %v6334 = vunpack.c.l.b16 %v6270
      %v6335 = vunpack.c.l.b16 %v6271
      %v6336 = vunpack.c.l.b16 %v6272
      %v6337 = vunpack.c.l.b16 %v6273
      %v6338 = vpack.c.b16 %v6323, %v6322
      %v6339 = vpack.c.b16 %v6325, %v6324
      %v6340 = vpack.c.b16 %v6327, %v6326
      %v6341 = vpack.c.b16 %v6329, %v6328
      %v6342 = vpack.c.b16 %v6331, %v6330
      %v6343 = vpack.c.b16 %v6333, %v6332
      %v6344 = vpack.c.b16 %v6335, %v6334
      %v6345 = vpack.c.b16 %v6337, %v6336
      %6354 = vmatprep.subr.bf16.mxu0 0
      %6355 = vmatpush1.bf16.msra.mxu0 %v6338
      %6356 = vmatprep.subr.bf16.mxu0 0
      %6357 = vmatpush1.bf16.msra.mxu0 %v6339
      %6358 = vmatprep.subr.bf16.mxu0 0
      %6359 = vmatpush1.bf16.msra.mxu0 %v6340
      %6360 = vmatprep.subr.bf16.mxu0 0
      %6361 = vmatpush1.bf16.msra.mxu0 %v6341
      %6362 = vmatprep.subr.bf16.mxu0 0
      %6363 = vmatpush1.bf16.msra.mxu0 %v6342
      %6364 = vmatprep.subr.bf16.mxu0 0
      %6365 = vmatpush1.bf16.msra.mxu0 %v6343
      %6366 = vmatprep.subr.bf16.mxu0 0
      %6367 = vmatpush1.bf16.msra.mxu0 %v6344
      %6368 = vmatprep.subr.bf16.mxu0 0
      %6369 = vmatpush1.bf16.msra.mxu0 %v6345
      %6370 = vmatprep.subr.bf16.mxu0 0
      %6371 = vmatpush1.bf16.msra.mxu0 0
      %6372 = vmatprep.subr.bf16.mxu0 0
      %6373 = vmatpush1.bf16.msra.mxu0 0
      %6374 = vmatprep.subr.bf16.mxu0 0
      %6375 = vmatpush1.bf16.msra.mxu0 0
      %6376 = vmatprep.subr.bf16.mxu0 0
      %6377 = vmatpush1.bf16.msra.mxu0 0
      %6378 = vmatprep.subr.bf16.mxu0 0
      %6379 = vmatpush1.bf16.msra.mxu0 0
      %6380 = vmatprep.subr.bf16.mxu0 0
      %6381 = vmatpush1.bf16.msra.mxu0 0
      %6382 = vmatprep.subr.bf16.mxu0 0
      %6383 = vmatpush1.bf16.msra.mxu0 0
      %6384 = vmatprep.subr.bf16.mxu0 0
      %6385 = vmatpush1.bf16.msra.mxu0 0
      %6386 = vmatprep.mubr.bf16.mxu0 0
      %6387 = vmatmul.mubr.bf16.gmra.mrb[0].mxu0 %v6290
      %v6388 = vpop.f32.mrb[0].mxu0
      %v6389 = vadd.f32 0.0, %v6388
      %v6390 = vpop.f32.mrb[0].mxu0
      %v6391 = vpop.f32.mrb[0].mxu0
      %v6392 = vadd.f32 0.0, %v6391
      %v6393 = vpop.f32.mrb[0].mxu0
      %6394 = vmatprep.mubr.bf16.mxu0 0
      %6395 = vmatmul.mubr.bf16.gmra.mrb[0].mxu0 %v6291
      %v6396 = vpop.f32.mrb[0].mxu0
      %v6397 = vadd.f32 0.0, %v6396
      %v6398 = vpop.f32.mrb[0].mxu0
      %v6399 = vpop.f32.mrb[0].mxu0
      %v6400 = vadd.f32 0.0, %v6399
      %v6401 = vpop.f32.mrb[0].mxu0
      %6402 = vmatprep.mubr.bf16.mxu0 0
      %6403 = vmatmul.mubr.bf16.gmra.mrb[0].mxu0 %v6292
      %v6404 = vpop.f32.mrb[0].mxu0
      %v6405 = vadd.f32 0.0, %v6404
      %v6406 = vpop.f32.mrb[0].mxu0
      %v6407 = vpop.f32.mrb[0].mxu0
      %v6408 = vadd.f32 0.0, %v6407
      %v6409 = vpop.f32.mrb[0].mxu0
      %6410 = vmatprep.mubr.bf16.mxu0 0
      %6411 = vmatmul.mubr.bf16.gmra.mrb[0].mxu0 %v6293
      %v6412 = vpop.f32.mrb[0].mxu0
      %v6413 = vadd.f32 0.0, %v6412
      %v6414 = vpop.f32.mrb[0].mxu0
      %v6415 = vpop.f32.mrb[0].mxu0
      %v6416 = vadd.f32 0.0, %v6415
      %v6417 = vpop.f32.mrb[0].mxu0
      %6418 = vmatprep.mubr.bf16.mxu0 0
      %6419 = vmatmul.mubr.bf16.gmra.mrb[0].mxu0 %v6294
      %v6420 = vpop.f32.mrb[0].mxu0
      %v6421 = vadd.f32 0.0, %v6420
      %v6422 = vpop.f32.mrb[0].mxu0
      %v6423 = vpop.f32.mrb[0].mxu0
      %v6424 = vadd.f32 0.0, %v6423
      %v6425 = vpop.f32.mrb[0].mxu0
      %6426 = vmatprep.mubr.bf16.mxu0 0
      %6427 = vmatmul.mubr.bf16.gmra.mrb[0].mxu0 %v6295
      %v6428 = vpop.f32.mrb[0].mxu0
      %v6429 = vadd.f32 0.0, %v6428
      %v6430 = vpop.f32.mrb[0].mxu0
      %v6431 = vpop.f32.mrb[0].mxu0
      %v6432 = vadd.f32 0.0, %v6431
      %v6433 = vpop.f32.mrb[0].mxu0
      %6434 = vmatprep.mubr.bf16.mxu0 0
      %6435 = vmatmul.mubr.bf16.gmra.mrb[0].mxu0 %v6296
      %v6436 = vpop.f32.mrb[0].mxu0
      %v6437 = vadd.f32 0.0, %v6436
      %v6438 = vpop.f32.mrb[0].mxu0
      %v6439 = vpop.f32.mrb[0].mxu0
      %v6440 = vadd.f32 0.0, %v6439
      %v6441 = vpop.f32.mrb[0].mxu0
      %6442 = vmatprep.mubr.bf16.mxu0 0
      %6443 = vmatmul.mubr.bf16.gmra.mrb[0].mxu0 %v6297
      %v6444 = vpop.f32.mrb[0].mxu0
      %v6445 = vadd.f32 0.0, %v6444
      %v6446 = vpop.f32.mrb[0].mxu0
      %v6447 = vpop.f32.mrb[0].mxu0
      %v6448 = vadd.f32 0.0, %v6447
      %v6449 = vpop.f32.mrb[0].mxu0
      %6450 = vdwg.mxu0
      %v6451 = vadd.f32 %v6153, %v6389
      %v6452 = vadd.f32 %v6154, %v6392
      %v6453 = vadd.f32 %v6155, %v6397
      %v6454 = vadd.f32 %v6156, %v6400
      %v6455 = vadd.f32 %v6157, %v6405
      %v6456 = vadd.f32 %v6158, %v6408
      %v6457 = vadd.f32 %v6159, %v6413
      %v6458 = vadd.f32 %v6160, %v6416
      %v6459 = vadd.f32 %v6161, %v6421
      %v6460 = vadd.f32 %v6162, %v6424
      %v6461 = vadd.f32 %v6163, %v6429
      %v6462 = vadd.f32 %v6164, %v6432
      %v6463 = vadd.f32 %v6165, %v6437
      %v6464 = vadd.f32 %v6166, %v6440
      %v6465 = vadd.f32 %v6167, %v6445
      %v6466 = vadd.f32 %v6168, %v6448
      %v6467 = vld [vmem:[%s5] sm:$0x1]
      %v6469 = vlaneseq
      %v6470 = vshrl.u32 %v6469, 7
      %v6471 = vsub.s32 0, %v6470
      %v6472 = vrot.slane %v6467, %v6471
      %v6474 = vmul.f32 %v6451, %v6472
      %v6475 = vmul.f32 %v6452, %v6472
      %v6476 = vmul.f32 %v6453, %v6472
      %v6477 = vmul.f32 %v6454, %v6472
      %v6478 = vmul.f32 %v6455, %v6472
      %v6479 = vmul.f32 %v6456, %v6472
      %v6480 = vmul.f32 %v6457, %v6472
      %v6481 = vmul.f32 %v6458, %v6472
      %v6482 = vmul.f32 %v6459, %v6472
      %v6483 = vmul.f32 %v6460, %v6472
      %v6484 = vmul.f32 %v6461, %v6472
      %v6485 = vmul.f32 %v6462, %v6472
      %v6486 = vmul.f32 %v6463, %v6472
      %v6487 = vmul.f32 %v6464, %v6472
      %v6488 = vmul.f32 %v6465, %v6472
      %v6489 = vmul.f32 %v6466, %v6472
      %v6490 = vld [vmem:[%s6] sm:$0x1]
      %v6492 = vlaneseq
      %v6493 = vshrl.u32 %v6492, 7
      %v6494 = vsub.s32 0, %v6493
      %v6495 = vrot.slane %v6490, %v6494
      %v6497 = vadd.f32 %v6474, %v6495
      %v6498 = vadd.f32 %v6475, %v6495
      %v6499 = vadd.f32 %v6476, %v6495
      %v6500 = vadd.f32 %v6477, %v6495
      %v6501 = vadd.f32 %v6478, %v6495
      %v6502 = vadd.f32 %v6479, %v6495
      %v6503 = vadd.f32 %v6480, %v6495
      %v6504 = vadd.f32 %v6481, %v6495
      %v6505 = vadd.f32 %v6482, %v6495
      %v6506 = vadd.f32 %v6483, %v6495
      %v6507 = vadd.f32 %v6484, %v6495
      %v6508 = vadd.f32 %v6485, %v6495
      %v6509 = vadd.f32 %v6486, %v6495
      %v6510 = vadd.f32 %v6487, %v6495
      %v6511 = vadd.f32 %v6488, %v6495
      %v6512 = vadd.f32 %v6489, %v6495
      %v6513 = vmul.f32 %v6497, 0.2
      %v6514 = vmul.f32 %v6498, 0.2
      %v6515 = vmul.f32 %v6499, 0.2
      %v6516 = vmul.f32 %v6500, 0.2
      %v6517 = vmul.f32 %v6501, 0.2
      %v6518 = vmul.f32 %v6502, 0.2
      %v6519 = vmul.f32 %v6503, 0.2
      %v6520 = vmul.f32 %v6504, 0.2
      %v6521 = vmul.f32 %v6505, 0.2
      %v6522 = vmul.f32 %v6506, 0.2
      %v6523 = vmul.f32 %v6507, 0.2
      %v6524 = vmul.f32 %v6508, 0.2
      %v6525 = vmul.f32 %v6509, 0.2
      %v6526 = vmul.f32 %v6510, 0.2
      %v6527 = vmul.f32 %v6511, 0.2
      %v6528 = vmul.f32 %v6512, 0.2
      %v6529 = vmax.f32 %v6497, %v6513
      %v6530 = vmax.f32 %v6498, %v6514
      %v6531 = vmax.f32 %v6499, %v6515
      %v6532 = vmax.f32 %v6500, %v6516
      %v6533 = vmax.f32 %v6501, %v6517
      %v6534 = vmax.f32 %v6502, %v6518
      %v6535 = vmax.f32 %v6503, %v6519
      %v6536 = vmax.f32 %v6504, %v6520
      %v6537 = vmax.f32 %v6505, %v6521
      %v6538 = vmax.f32 %v6506, %v6522
      %v6539 = vmax.f32 %v6507, %v6523
      %v6540 = vmax.f32 %v6508, %v6524
      %v6541 = vmax.f32 %v6509, %v6525
      %v6542 = vmax.f32 %v6510, %v6526
      %v6543 = vmax.f32 %v6511, %v6527
      %v6544 = vmax.f32 %v6512, %v6528
      %6545 = vst [vmem:[%s278] sm:$0xff] %v6529
      %6546 = vst [vmem:[%s278 + $0x8] sm:$0xff] %v6530
      %6547 = vst [vmem:[%s278 + $0x10] sm:$0xff] %v6531
      %6548 = vst [vmem:[%s278 + $0x18] sm:$0xff] %v6532
      %6549 = vst [vmem:[%s278 + $0x20] sm:$0xff] %v6533
      %6550 = vst [vmem:[%s278 + $0x28] sm:$0xff] %v6534
      %6551 = vst [vmem:[%s278 + $0x30] sm:$0xff] %v6535
      %6552 = vst [vmem:[%s278 + $0x38] sm:$0xff] %v6536
      %6553 = vst [vmem:[%s278 + $0x40] sm:$0xff] %v6537
      %6554 = vst [vmem:[%s278 + $0x48] sm:$0xff] %v6538
      %6555 = vst [vmem:[%s278 + $0x50] sm:$0xff] %v6539
      %6556 = vst [vmem:[%s278 + $0x58] sm:$0xff] %v6540
      %6557 = vst [vmem:[%s278 + $0x60] sm:$0xff] %v6541
      %6558 = vst [vmem:[%s278 + $0x68] sm:$0xff] %v6542
      %6559 = vst [vmem:[%s278 + $0x70] sm:$0xff] %v6543
      %6560 = vst [vmem:[%s278 + $0x78] sm:$0xff] %v6544
      %p6561 = scmp.lt.s32.totalorder %s18, 1
      %s6562 = scalar_select %p6561, %s18, 1
      %s6563 = smul.addr %s6562, 16
      %s6564 = smul.addr %s6563, 8
      %s6565 = scalar_lea.vmem %s7, %s6564
      // Predicated region
      $region56: #{sub_conv_forward.1} parent=47 // pred_check
        %p6566 = pneg %p188
      $region57: #{sub_conv_forward.1} parent=47 // pred_check_branch
        %6568 = sbr.rel (%p6566) target = $region59
      $region58: #{sub_conv_forward.1} parent=47 // pred_region
        _
      $region59: #{sub_conv_forward.1} parent=47 // pred_fallthru
        _
    $region48: #{sub_conv_forward.1} parent=5 // pred_fallthru
      _
    %p6569 = scmp.le.s32.totalorder 2, %s13
    // Predicated region
    $region60: #{sub_conv_forward.1} parent=5 // pred_check
      %p6570 = pneg %p6569
    $region61: #{sub_conv_forward.1} parent=5 // pred_check_branch
      %6572 = sbr.rel (%p6570) target = $region63
    $region62: #{sub_conv_forward.1} parent=5 // pred_region
      %s6573 = ssub.s32 %s13, 2
      // Predicated region
      $region64: #{sub_conv_forward.1} parent=62 // pred_check
        %p6574 = pneg %p194
      $region65: #{sub_conv_forward.1} parent=62 // pred_check_branch
        %6576 = sbr.rel (%p6574) target = $region67
      $region66: #{sub_conv_forward.1} parent=62 // pred_region
        %p6577 = scmp.lt.s32.totalorder %s19, 1
        %s6578 = scalar_select %p6577, %s19, 1
        %s6579 = smul.addr %s6578, 16
        %s6580 = smul.addr %s6579, 8
        %s6581 = scalar_lea.vmem %s7, %s6580
      $region67: #{sub_conv_forward.1} parent=62 // pred_fallthru
        _
    $region63: #{sub_conv_forward.1} parent=5 // pred_fallthru
      _
  $region6: #{sub_conv_forward.1} parent=0 // loop_footer
    %s17 = sadd.s32 1, %s13
  $region7: #{sub_conv_forward.1} parent=0 // loop_footer_branch
    %12 = sbr.rel target = $region3
  $region8: #{sub_conv_forward.1} parent=0 // loop_exit
    _

</llo_original>
